<compile_context>
chip_gen: v6e
topology: v6e:2x2x1
jax: 0.10.0
libtpu: 0.0.40
codegen_flags: <defaults>
</compile_context>

<pallas_src>
import jax
import jax.numpy as jnp
from jax import lax
from jax.experimental import pallas as pl
from jax.experimental.pallas import tpu as pltpu

FEATURES = 1792          # encoder_params['tf_efficientnet_b4_ns']['features']
F_CHUNK = 256            # feature axis processed in 256-row slices (1792 = 7 * 256)
assert FEATURES % F_CHUNK == 0
N_CHUNKS = FEATURES // F_CHUNK


def _make_kernel(tile_hw):
    def kernel(x_ref, wst_ref, wfc_ref, o_ref, acc_ref):
        # x_ref:   (1, C+1, tile_hw) bf16  channels(+ones row) on sublanes, spatial on lanes
        # wst_ref: (F, C+1)          bf16  stem weight with the bias folded in as a column
        # wfc_ref: (1, F)            bf16  fc weight, lane-dense (no (F,1) lane padding)
        # o_ref:   (1, 1, 1)         f32   un-normalized partial sum for this (batch, split)
        # acc_ref: (1, tile_hw)      f32   lane-shaped accumulator, persists over inner axis
        i = pl.program_id(2)

        @pl.when(i == 0)
        def _():
            acc_ref[...] = jnp.zeros_like(acc_ref)

        x = x_ref[0]                                   # (C+1, tile_hw) bf16

        def chunk(c, carry):
            r = pl.multiple_of(c * F_CHUNK, F_CHUNK)
            w = wst_ref[pl.ds(r, F_CHUNK), :]          # (FC, C+1) bf16
            # TODO(synk): the full tf_efficientnet_b4_ns backbone is not reproduced;
            # a single pointwise conv + SiLU stand-in emits the 1792-channel features.
            feat = jnp.dot(w, x, preferred_element_type=jnp.float32)   # (FC, tile) f32
            # SiLU via tanh (single EUP op per element instead of exp + reciprocal).
            silu = 0.5 * feat * (1.0 + jnp.tanh(0.5 * feat))
            wfc_c = wfc_ref[:, pl.ds(r, F_CHUNK)]      # (1, FC) bf16
            # fc(N=1) folded into the pooling sum; the F-contraction rides the idle MXU.
            return carry + jnp.dot(wfc_c, silu.astype(jnp.bfloat16),
                                   preferred_element_type=jnp.float32)  # (1, tile) f32

        acc_ref[...] += lax.fori_loop(
            0, N_CHUNKS, chunk, jnp.zeros((1, tile_hw), jnp.float32), unroll=True)

        @pl.when(i == pl.num_programs(2) - 1)
        def _():
            # Cross-lane reduce only once per (batch, split); scale/bias done in wrapper.
            o_ref[0] = jnp.sum(acc_ref[...], keepdims=True)

    return kernel


def _choose_tiling(hw, tile_hw, max_tile=2048):
    """Spatial tile: multiple of 128 (256-friendly), HW padded up to a tile multiple."""
    if tile_hw is None:
        tile_hw = min(max_tile, pl.cdiv(hw, 128) * 128)
    assert tile_hw % 128 == 0, "tile_hw must be a multiple of 128"
    n_tiles = pl.cdiv(hw, tile_hw)
    return tile_hw, n_tiles


def deepfake_classifier_forward(x_nchw, params, tile_hw=None, hw_splits=None):
    """x_nchw: (B, C, H, W) float32 -> (B, 1) float32 logits."""
    B, C, H, W = x_nchw.shape
    HW = H * W
    ws, bs, wfc, bfc = params
    assert ws.shape == (C, FEATURES), ws.shape
    assert bs.shape == (FEATURES,), bs.shape
    assert wfc.shape == (FEATURES, 1), wfc.shape

    tile_hw, n_tiles = _choose_tiling(HW, tile_hw)
    # Split the HW-tile axis across a second "parallel" grid axis when the batch
    # alone cannot occupy both v7x TensorCores.
    if hw_splits is None:
        hw_splits = 2 if (B == 1 and n_tiles >= 2 and n_tiles % 2 == 0) else 1
    assert n_tiles % hw_splits == 0
    n_inner = n_tiles // hw_splits
    hw_pad = n_tiles * tile_hw

    # Lane-dense spatial layout; append a ones-row so the stem bias folds into the
    # matmul. Zero-padded spatial columns (ones-row included) then contribute 0.
    x = x_nchw.reshape(B, C, HW).astype(jnp.bfloat16)
    x_aug = jnp.concatenate([x, jnp.ones((B, 1, HW), jnp.bfloat16)], axis=1)
    if hw_pad != HW:
        x_aug = jnp.pad(x_aug, ((0, 0), (0, 0), (0, hw_pad - HW)))

    wst_aug = jnp.concatenate(
        [jnp.transpose(ws), bs.reshape(FEATURES, 1)], axis=1).astype(jnp.bfloat16)   # (F, C+1)
    wfc_row = wfc.reshape(1, FEATURES).astype(jnp.bfloat16)                          # (1, F)

    c1 = C + 1
    cost = pl.CostEstimate(
        flops=int(2 * B * hw_pad * c1 * FEATURES + 6 * B * hw_pad * FEATURES),
        transcendentals=int(B * hw_pad * FEATURES),
        bytes_accessed=int(x_aug.size * 2 + wst_aug.size * 2 + wfc_row.size * 2
                           + B * hw_splits * 4),
    )

    partials = pl.pallas_call(
        _make_kernel(tile_hw),
        out_shape=jax.ShapeDtypeStruct((B * hw_splits, 1, 1), jnp.float32),
        grid_spec=pltpu.PrefetchScalarGridSpec(
            num_scalar_prefetch=0,
            grid=(B, hw_splits, n_inner),
            in_specs=[
                pl.BlockSpec((1, c1, tile_hw),
                             lambda b, o, i: (b, 0, o * n_inner + i)),
                pl.BlockSpec((FEATURES, c1), lambda b, o, i: (0, 0)),
                pl.BlockSpec((1, FEATURES), lambda b, o, i: (0, 0)),
            ],
            out_specs=pl.BlockSpec((1, 1, 1),
                                   lambda b, o, i: (b * hw_splits + o, 0, 0)),
            scratch_shapes=[pltpu.VMEM((1, tile_hw), jnp.float32)],
        ),
        compiler_params=pltpu.CompilerParams(
            dimension_semantics=("parallel", "parallel", "arbitrary"),
            vmem_limit_bytes=48 * 1024 * 1024,   # fits the 64 MiB v7x budget with headroom
        ),
        cost_estimate=cost,
    )(x_aug, wst_aug, wfc_row)

    # AdaptiveAvgPool scale + fc bias (Dropout = identity at inference).
    pooled = partials.reshape(B, hw_splits).sum(axis=1, keepdims=True) / float(HW)
    return pooled + bfc.reshape(1, 1).astype(jnp.float32)


def init_params(key, c_in):
    k1, k2 = jax.random.split(key, 2)
    # Stand-in encoder stem: pointwise conv C_in -> 1792.
    ws = jax.random.normal(k1, (c_in, FEATURES), jnp.float32) / jnp.sqrt(float(c_in))
    bs = jnp.zeros((FEATURES,), jnp.float32)
    # fc = Linear(1792, 1)
    wfc = jax.random.normal(k2, (FEATURES, 1), jnp.float32) / jnp.sqrt(float(FEATURES))
    bfc = jnp.zeros((1, 1), jnp.float32)
    return ws, bs, wfc, bfc


def _reference(x_nchw, params):
    """Pure-JAX reference with the same bf16 roundings as the kernel, f32 accumulation."""
    B, C, H, W = x_nchw.shape
    HW = H * W
    ws, bs, wfc, bfc = params
    f32 = jnp.float32
    x = x_nchw.reshape(B, C, HW).astype(jnp.bfloat16).astype(f32)
    x_aug = jnp.concatenate([x, jnp.ones((B, 1, HW), f32)], axis=1)
    wst_aug = jnp.concatenate([jnp.transpose(ws), bs.reshape(FEATURES, 1)],
                              axis=1).astype(jnp.bfloat16).astype(f32)        # (F, C+1)
    feat = jnp.einsum("fc,bcs->bfs", wst_aug, x_aug,
                      precision=jax.lax.Precision.HIGHEST)
    silu = 0.5 * feat * (1.0 + jnp.tanh(0.5 * feat))
    silu = silu.astype(jnp.bfloat16).astype(f32)
    wfc_row = wfc.reshape(FEATURES).astype(jnp.bfloat16).astype(f32)
    contrib = jnp.einsum("bfs,f->bs", silu, wfc_row,
                         precision=jax.lax.Precision.HIGHEST)
    pooled = contrib.sum(axis=1, keepdims=True) / float(HW)
    return pooled + bfc.reshape(1, 1)


if __name__ == "__main__":
    key = jax.random.PRNGKey(0)
    kx, kp, kx2 = jax.random.split(key, 3)

    # Case 1: B=2, tile_hw=128 -> grid (2, 1, 2): exercises the HW-tiled accumulator path.
    B, C, H, W = 2, 4, 16, 16
    x = jax.random.normal(kx, (B, C, H, W), jnp.float32)
    params = init_params(kp, C)
    out = deepfake_classifier_forward(x, params, tile_hw=128)
    jax.block_until_ready(out)
    assert out.shape == (B, 1) and out.dtype == jnp.float32
    ref = _reference(x, params)
    assert jnp.allclose(out, ref, atol=2e-3, rtol=2e-3), (out, ref)

    # Case 2: B=1 with HW=144 (not a multiple of 128): exercises the zero-padded
    # spatial columns and the HW-split (dual-TensorCore) partial-sum path.
    B2, C2, H2, W2 = 1, 3, 12, 12
    x2 = jax.random.normal(kx2, (B2, C2, H2, W2), jnp.float32)
    params2 = init_params(jax.random.fold_in(kp, 1), C2)
    out2 = deepfake_classifier_forward(x2, params2, tile_hw=128)
    jax.block_until_ready(out2)
    assert out2.shape == (B2, 1) and out2.dtype == jnp.float32
    ref2 = _reference(x2, params2)
    assert jnp.allclose(out2, ref2, atol=2e-3, rtol=2e-3), (out2, ref2)

    print("KERNEL_OK")
</pallas_src>

<mosaic_0001>
module attributes {stable_mosaic.version = 11 : i64} {
  func.func @kernel(%arg0: i32, %arg1: i32, %arg2: i32, %arg3: memref<1x5x128xbf16, #tpu.memory_space<vmem>>, %arg4: memref<1792x5xbf16, #tpu.memory_space<vmem>>, %arg5: memref<1x1792xbf16, #tpu.memory_space<vmem>>, %arg6: memref<1x1x1xf32, #tpu.memory_space<vmem>>, %arg7: memref<1x128xf32, #tpu.memory_space<vmem>>) attributes {dimension_semantics = [#tpu.dimension_semantics<parallel>, #tpu.dimension_semantics<parallel>, #tpu.dimension_semantics<arbitrary>], iteration_bounds = array<i64: 2, 1, 2>, scalar_prefetch = 0 : i64, scratch_operands = 1 : i64, tpu.core_type = #tpu.core_type<tc>, window_params = [{transform_indices = @transform_0, window_bounds = array<i64: 1, 5, 128>}, {pipeline_mode = #tpu.pipeline_mode<synchronous>, transform_indices = @transform_1, window_bounds = array<i64: 1792, 5>}, {pipeline_mode = #tpu.pipeline_mode<synchronous>, transform_indices = @transform_2, window_bounds = array<i64: 1, 1792>}, {transform_indices = @transform_3, window_bounds = array<i64: 1, 1, 1>}]} {
    %c0_i32 = arith.constant 0 : i32
    %0 = arith.cmpi eq, %arg2, %c0_i32 : i32
    %1 = arith.extui %0 : i1 to i32
    %c0_i32_0 = arith.constant 0 : i32
    %2 = arith.cmpi ne, %1, %c0_i32_0 : i32
    scf.if %2 {
      %cst_65 = arith.constant 0.000000e+00 : f32
      %138 = vector.broadcast %cst_65 : f32 to vector<1x128xf32>
      %c0_66 = arith.constant 0 : index
      %c0_67 = arith.constant 0 : index
      %139 = vector.load %arg7[%c0_66, %c0_67] : memref<1x128xf32, #tpu.memory_space<vmem>>, vector<1x128xf32>
      tpu.vector_store %arg7[%c0_66, %c0_67], %138 {strides = array<i32>} : memref<1x128xf32, #tpu.memory_space<vmem>>, vector<1x128xf32>,
    } else {
    }
    %c0 = arith.constant 0 : index
    %c0_1 = arith.constant 0 : index
    %c0_2 = arith.constant 0 : index
    %3 = vector.load %arg3[%c0, %c0_1, %c0_2] : memref<1x5x128xbf16, #tpu.memory_space<vmem>>, vector<1x5x128xbf16>
    %4 = vector.shape_cast %3 : vector<1x5x128xbf16> to vector<5x128xbf16>
    %c0_3 = arith.constant 0 : index
    %c0_4 = arith.constant 0 : index
    %5 = vector.load %arg7[%c0_3, %c0_4] : memref<1x128xf32, #tpu.memory_space<vmem>>, vector<1x128xf32>
    %cst = arith.constant 0.000000e+00 : f32
    %6 = vector.broadcast %cst : f32 to vector<1x128xf32>
    %c0_i32_5 = arith.constant 0 : i32
    %c256_i32 = arith.constant 256 : i32
    %7 = arith.muli %c0_i32_5, %c256_i32 : i32
    %8 = tpu.assume_multiple %7, 256 : i32
    %9 = arith.index_cast %8 : i32 to index
    %c0_6 = arith.constant 0 : index
    %10 = vector.load %arg4[%9, %c0_6] : memref<1792x5xbf16, #tpu.memory_space<vmem>>, vector<256x5xbf16>
    %cst_7 = arith.constant dense<0.000000e+00> : vector<256x128xf32>
    %11 = tpu.matmul %10, %4, %cst_7 {dimension_numbers = #tpu.dot_dimension_numbers<[1], [0], [0], [1], [0, 0, 1, 1], [], []>} : vector<256x5xbf16>, vector<5x128xbf16>, vector<256x128xf32> -> vector<256x128xf32>
    %cst_8 = arith.constant 5.000000e-01 : f32
    %12 = vector.broadcast %cst_8 : f32 to vector<256x128xf32>
    %13 = arith.mulf %12, %11 : vector<256x128xf32>
    %cst_9 = arith.constant 5.000000e-01 : f32
    %14 = vector.broadcast %cst_9 : f32 to vector<256x128xf32>
    %15 = arith.mulf %14, %11 : vector<256x128xf32>
    %16 = math.tanh %15 : vector<256x128xf32>
    %cst_10 = arith.constant 1.000000e+00 : f32
    %17 = vector.broadcast %cst_10 : f32 to vector<256x128xf32>
    %18 = arith.addf %17, %16 : vector<256x128xf32>
    %19 = arith.mulf %13, %18 : vector<256x128xf32>
    %c0_11 = arith.constant 0 : index
    %20 = arith.index_cast %8 : i32 to index
    %21 = vector.load %arg5[%c0_11, %20] : memref<1x1792xbf16, #tpu.memory_space<vmem>>, vector<1x256xbf16>
    %22 = arith.truncf %19 : vector<256x128xf32> to vector<256x128xbf16>
    %cst_12 = arith.constant dense<0.000000e+00> : vector<1x128xf32>
    %23 = tpu.matmul %21, %22, %cst_12 {dimension_numbers = #tpu.dot_dimension_numbers<[1], [0], [0], [1], [0, 0, 1, 1], [], []>} : vector<1x256xbf16>, vector<256x128xbf16>, vector<1x128xf32> -> vector<1x128xf32>
    %24 = arith.addf %6, %23 : vector<1x128xf32>
    %c1_i32 = arith.constant 1 : i32
    %c256_i32_13 = arith.constant 256 : i32
    %25 = arith.muli %c1_i32, %c256_i32_13 : i32
    %26 = tpu.assume_multiple %25, 256 : i32
    %27 = arith.index_cast %26 : i32 to index
    %c0_14 = arith.constant 0 : index
    %28 = vector.load %arg4[%27, %c0_14] : memref<1792x5xbf16, #tpu.memory_space<vmem>>, vector<256x5xbf16>
    %cst_15 = arith.constant dense<0.000000e+00> : vector<256x128xf32>
    %29 = tpu.matmul %28, %4, %cst_15 {dimension_numbers = #tpu.dot_dimension_numbers<[1], [0], [0], [1], [0, 0, 1, 1], [], []>} : vector<256x5xbf16>, vector<5x128xbf16>, vector<256x128xf32> -> vector<256x128xf32>
    %cst_16 = arith.constant 5.000000e-01 : f32
    %30 = vector.broadcast %cst_16 : f32 to vector<256x128xf32>
    %31 = arith.mulf %30, %29 : vector<256x128xf32>
    %cst_17 = arith.constant 5.000000e-01 : f32
    %32 = vector.broadcast %cst_17 : f32 to vector<256x128xf32>
    %33 = arith.mulf %32, %29 : vector<256x128xf32>
    %34 = math.tanh %33 : vector<256x128xf32>
    %cst_18 = arith.constant 1.000000e+00 : f32
    %35 = vector.broadcast %cst_18 : f32 to vector<256x128xf32>
    %36 = arith.addf %35, %34 : vector<256x128xf32>
    %37 = arith.mulf %31, %36 : vector<256x128xf32>
    %c0_19 = arith.constant 0 : index
    %38 = arith.index_cast %26 : i32 to index
    %39 = vector.load %arg5[%c0_19, %38] : memref<1x1792xbf16, #tpu.memory_space<vmem>>, vector<1x256xbf16>
    %40 = arith.truncf %37 : vector<256x128xf32> to vector<256x128xbf16>
    %cst_20 = arith.constant dense<0.000000e+00> : vector<1x128xf32>
    %41 = tpu.matmul %39, %40, %cst_20 {dimension_numbers = #tpu.dot_dimension_numbers<[1], [0], [0], [1], [0, 0, 1, 1], [], []>} : vector<1x256xbf16>, vector<256x128xbf16>, vector<1x128xf32> -> vector<1x128xf32>
    %42 = arith.addf %24, %41 : vector<1x128xf32>
    %c2_i32 = arith.constant 2 : i32
    %c256_i32_21 = arith.constant 256 : i32
    %43 = arith.muli %c2_i32, %c256_i32_21 : i32
    %44 = tpu.assume_multiple %43, 256 : i32
    %45 = arith.index_cast %44 : i32 to index
    %c0_22 = arith.constant 0 : index
    %46 = vector.load %arg4[%45, %c0_22] : memref<1792x5xbf16, #tpu.memory_space<vmem>>, vector<256x5xbf16>
    %cst_23 = arith.constant dense<0.000000e+00> : vector<256x128xf32>
    %47 = tpu.matmul %46, %4, %cst_23 {dimension_numbers = #tpu.dot_dimension_numbers<[1], [0], [0], [1], [0, 0, 1, 1], [], []>} : vector<256x5xbf16>, vector<5x128xbf16>, vector<256x128xf32> -> vector<256x128xf32>
    %cst_24 = arith.constant 5.000000e-01 : f32
    %48 = vector.broadcast %cst_24 : f32 to vector<256x128xf32>
    %49 = arith.mulf %48, %47 : vector<256x128xf32>
    %cst_25 = arith.constant 5.000000e-01 : f32
    %50 = vector.broadcast %cst_25 : f32 to vector<256x128xf32>
    %51 = arith.mulf %50, %47 : vector<256x128xf32>
    %52 = math.tanh %51 : vector<256x128xf32>
    %cst_26 = arith.constant 1.000000e+00 : f32
    %53 = vector.broadcast %cst_26 : f32 to vector<256x128xf32>
    %54 = arith.addf %53, %52 : vector<256x128xf32>
    %55 = arith.mulf %49, %54 : vector<256x128xf32>
    %c0_27 = arith.constant 0 : index
    %56 = arith.index_cast %44 : i32 to index
    %57 = vector.load %arg5[%c0_27, %56] : memref<1x1792xbf16, #tpu.memory_space<vmem>>, vector<1x256xbf16>
    %58 = arith.truncf %55 : vector<256x128xf32> to vector<256x128xbf16>
    %cst_28 = arith.constant dense<0.000000e+00> : vector<1x128xf32>
    %59 = tpu.matmul %57, %58, %cst_28 {dimension_numbers = #tpu.dot_dimension_numbers<[1], [0], [0], [1], [0, 0, 1, 1], [], []>} : vector<1x256xbf16>, vector<256x128xbf16>, vector<1x128xf32> -> vector<1x128xf32>
    %60 = arith.addf %42, %59 : vector<1x128xf32>
    %c3_i32 = arith.constant 3 : i32
    %c256_i32_29 = arith.constant 256 : i32
    %61 = arith.muli %c3_i32, %c256_i32_29 : i32
    %62 = tpu.assume_multiple %61, 256 : i32
    %63 = arith.index_cast %62 : i32 to index
    %c0_30 = arith.constant 0 : index
    %64 = vector.load %arg4[%63, %c0_30] : memref<1792x5xbf16, #tpu.memory_space<vmem>>, vector<256x5xbf16>
    %cst_31 = arith.constant dense<0.000000e+00> : vector<256x128xf32>
    %65 = tpu.matmul %64, %4, %cst_31 {dimension_numbers = #tpu.dot_dimension_numbers<[1], [0], [0], [1], [0, 0, 1, 1], [], []>} : vector<256x5xbf16>, vector<5x128xbf16>, vector<256x128xf32> -> vector<256x128xf32>
    %cst_32 = arith.constant 5.000000e-01 : f32
    %66 = vector.broadcast %cst_32 : f32 to vector<256x128xf32>
    %67 = arith.mulf %66, %65 : vector<256x128xf32>
    %cst_33 = arith.constant 5.000000e-01 : f32
    %68 = vector.broadcast %cst_33 : f32 to vector<256x128xf32>
    %69 = arith.mulf %68, %65 : vector<256x128xf32>
    %70 = math.tanh %69 : vector<256x128xf32>
    %cst_34 = arith.constant 1.000000e+00 : f32
    %71 = vector.broadcast %cst_34 : f32 to vector<256x128xf32>
    %72 = arith.addf %71, %70 : vector<256x128xf32>
    %73 = arith.mulf %67, %72 : vector<256x128xf32>
    %c0_35 = arith.constant 0 : index
    %74 = arith.index_cast %62 : i32 to index
    %75 = vector.load %arg5[%c0_35, %74] : memref<1x1792xbf16, #tpu.memory_space<vmem>>, vector<1x256xbf16>
    %76 = arith.truncf %73 : vector<256x128xf32> to vector<256x128xbf16>
    %cst_36 = arith.constant dense<0.000000e+00> : vector<1x128xf32>
    %77 = tpu.matmul %75, %76, %cst_36 {dimension_numbers = #tpu.dot_dimension_numbers<[1], [0], [0], [1], [0, 0, 1, 1], [], []>} : vector<1x256xbf16>, vector<256x128xbf16>, vector<1x128xf32> -> vector<1x128xf32>
    %78 = arith.addf %60, %77 : vector<1x128xf32>
    %c4_i32 = arith.constant 4 : i32
    %c256_i32_37 = arith.constant 256 : i32
    %79 = arith.muli %c4_i32, %c256_i32_37 : i32
    %80 = tpu.assume_multiple %79, 256 : i32
    %81 = arith.index_cast %80 : i32 to index
    %c0_38 = arith.constant 0 : index
    %82 = vector.load %arg4[%81, %c0_38] : memref<1792x5xbf16, #tpu.memory_space<vmem>>, vector<256x5xbf16>
    %cst_39 = arith.constant dense<0.000000e+00> : vector<256x128xf32>
    %83 = tpu.matmul %82, %4, %cst_39 {dimension_numbers = #tpu.dot_dimension_numbers<[1], [0], [0], [1], [0, 0, 1, 1], [], []>} : vector<256x5xbf16>, vector<5x128xbf16>, vector<256x128xf32> -> vector<256x128xf32>
    %cst_40 = arith.constant 5.000000e-01 : f32
    %84 = vector.broadcast %cst_40 : f32 to vector<256x128xf32>
    %85 = arith.mulf %84, %83 : vector<256x128xf32>
    %cst_41 = arith.constant 5.000000e-01 : f32
    %86 = vector.broadcast %cst_41 : f32 to vector<256x128xf32>
    %87 = arith.mulf %86, %83 : vector<256x128xf32>
    %88 = math.tanh %87 : vector<256x128xf32>
    %cst_42 = arith.constant 1.000000e+00 : f32
    %89 = vector.broadcast %cst_42 : f32 to vector<256x128xf32>
    %90 = arith.addf %89, %88 : vector<256x128xf32>
    %91 = arith.mulf %85, %90 : vector<256x128xf32>
    %c0_43 = arith.constant 0 : index
    %92 = arith.index_cast %80 : i32 to index
    %93 = vector.load %arg5[%c0_43, %92] : memref<1x1792xbf16, #tpu.memory_space<vmem>>, vector<1x256xbf16>
    %94 = arith.truncf %91 : vector<256x128xf32> to vector<256x128xbf16>
    %cst_44 = arith.constant dense<0.000000e+00> : vector<1x128xf32>
    %95 = tpu.matmul %93, %94, %cst_44 {dimension_numbers = #tpu.dot_dimension_numbers<[1], [0], [0], [1], [0, 0, 1, 1], [], []>} : vector<1x256xbf16>, vector<256x128xbf16>, vector<1x128xf32> -> vector<1x128xf32>
    %96 = arith.addf %78, %95 : vector<1x128xf32>
    %c5_i32 = arith.constant 5 : i32
    %c256_i32_45 = arith.constant 256 : i32
    %97 = arith.muli %c5_i32, %c256_i32_45 : i32
    %98 = tpu.assume_multiple %97, 256 : i32
    %99 = arith.index_cast %98 : i32 to index
    %c0_46 = arith.constant 0 : index
    %100 = vector.load %arg4[%99, %c0_46] : memref<1792x5xbf16, #tpu.memory_space<vmem>>, vector<256x5xbf16>
    %cst_47 = arith.constant dense<0.000000e+00> : vector<256x128xf32>
    %101 = tpu.matmul %100, %4, %cst_47 {dimension_numbers = #tpu.dot_dimension_numbers<[1], [0], [0], [1], [0, 0, 1, 1], [], []>} : vector<256x5xbf16>, vector<5x128xbf16>, vector<256x128xf32> -> vector<256x128xf32>
    %cst_48 = arith.constant 5.000000e-01 : f32
    %102 = vector.broadcast %cst_48 : f32 to vector<256x128xf32>
    %103 = arith.mulf %102, %101 : vector<256x128xf32>
    %cst_49 = arith.constant 5.000000e-01 : f32
    %104 = vector.broadcast %cst_49 : f32 to vector<256x128xf32>
    %105 = arith.mulf %104, %101 : vector<256x128xf32>
    %106 = math.tanh %105 : vector<256x128xf32>
    %cst_50 = arith.constant 1.000000e+00 : f32
    %107 = vector.broadcast %cst_50 : f32 to vector<256x128xf32>
    %108 = arith.addf %107, %106 : vector<256x128xf32>
    %109 = arith.mulf %103, %108 : vector<256x128xf32>
    %c0_51 = arith.constant 0 : index
    %110 = arith.index_cast %98 : i32 to index
    %111 = vector.load %arg5[%c0_51, %110] : memref<1x1792xbf16, #tpu.memory_space<vmem>>, vector<1x256xbf16>
    %112 = arith.truncf %109 : vector<256x128xf32> to vector<256x128xbf16>
    %cst_52 = arith.constant dense<0.000000e+00> : vector<1x128xf32>
    %113 = tpu.matmul %111, %112, %cst_52 {dimension_numbers = #tpu.dot_dimension_numbers<[1], [0], [0], [1], [0, 0, 1, 1], [], []>} : vector<1x256xbf16>, vector<256x128xbf16>, vector<1x128xf32> -> vector<1x128xf32>
    %114 = arith.addf %96, %113 : vector<1x128xf32>
    %c6_i32 = arith.constant 6 : i32
    %c256_i32_53 = arith.constant 256 : i32
    %115 = arith.muli %c6_i32, %c256_i32_53 : i32
    %116 = tpu.assume_multiple %115, 256 : i32
    %117 = arith.index_cast %116 : i32 to index
    %c0_54 = arith.constant 0 : index
    %118 = vector.load %arg4[%117, %c0_54] : memref<1792x5xbf16, #tpu.memory_space<vmem>>, vector<256x5xbf16>
    %cst_55 = arith.constant dense<0.000000e+00> : vector<256x128xf32>
    %119 = tpu.matmul %118, %4, %cst_55 {dimension_numbers = #tpu.dot_dimension_numbers<[1], [0], [0], [1], [0, 0, 1, 1], [], []>} : vector<256x5xbf16>, vector<5x128xbf16>, vector<256x128xf32> -> vector<256x128xf32>
    %cst_56 = arith.constant 5.000000e-01 : f32
    %120 = vector.broadcast %cst_56 : f32 to vector<256x128xf32>
    %121 = arith.mulf %120, %119 : vector<256x128xf32>
    %cst_57 = arith.constant 5.000000e-01 : f32
    %122 = vector.broadcast %cst_57 : f32 to vector<256x128xf32>
    %123 = arith.mulf %122, %119 : vector<256x128xf32>
    %124 = math.tanh %123 : vector<256x128xf32>
    %cst_58 = arith.constant 1.000000e+00 : f32
    %125 = vector.broadcast %cst_58 : f32 to vector<256x128xf32>
    %126 = arith.addf %125, %124 : vector<256x128xf32>
    %127 = arith.mulf %121, %126 : vector<256x128xf32>
    %c0_59 = arith.constant 0 : index
    %128 = arith.index_cast %116 : i32 to index
    %129 = vector.load %arg5[%c0_59, %128] : memref<1x1792xbf16, #tpu.memory_space<vmem>>, vector<1x256xbf16>
    %130 = arith.truncf %127 : vector<256x128xf32> to vector<256x128xbf16>
    %cst_60 = arith.constant dense<0.000000e+00> : vector<1x128xf32>
    %131 = tpu.matmul %129, %130, %cst_60 {dimension_numbers = #tpu.dot_dimension_numbers<[1], [0], [0], [1], [0, 0, 1, 1], [], []>} : vector<1x256xbf16>, vector<256x128xbf16>, vector<1x128xf32> -> vector<1x128xf32>
    %132 = arith.addf %114, %131 : vector<1x128xf32>
    %c7_i32 = arith.constant 7 : i32
    %133 = arith.addf %5, %132 : vector<1x128xf32>
    %c0_61 = arith.constant 0 : index
    %c0_62 = arith.constant 0 : index
    %134 = vector.load %arg7[%c0_61, %c0_62] : memref<1x128xf32, #tpu.memory_space<vmem>>, vector<1x128xf32>
    tpu.vector_store %arg7[%c0_61, %c0_62], %133 {strides = array<i32>} : memref<1x128xf32, #tpu.memory_space<vmem>>, vector<1x128xf32>,
    %c1_i32_63 = arith.constant 1 : i32
    %135 = arith.cmpi eq, %arg2, %c1_i32_63 : i32
    %136 = arith.extui %135 : i1 to i32
    %c0_i32_64 = arith.constant 0 : i32
    %137 = arith.cmpi ne, %136, %c0_i32_64 : i32
    scf.if %137 {
      %c0_65 = arith.constant 0 : index
      %c0_66 = arith.constant 0 : index
      %138 = vector.load %arg7[%c0_65, %c0_66] : memref<1x128xf32, #tpu.memory_space<vmem>>, vector<1x128xf32>
      %139 = vector.shape_cast %138 : vector<1x128xf32> to vector<1x1x128xf32>
      %cst_67 = arith.constant dense<0.000000e+00> : vector<1xf32>
      %140 = vector.multi_reduction <add>, %139, %cst_67 [1, 2] : vector<1x1x128xf32> to vector<1xf32>
      %141 = vector.shape_cast %140 : vector<1xf32> to vector<1x1x1xf32>
      %142 = vector.extract %141[0, 0, 0] : f32 from vector<1x1x1xf32>
      %143 = vector.broadcast %142 : f32 to vector<1x1xf32>
      %c0_68 = arith.constant 0 : index
      %c0_69 = arith.constant 0 : index
      %c0_70 = arith.constant 0 : index
      %144 = vector.load %arg6[%c0_68, %c0_69, %c0_70] : memref<1x1x1xf32, #tpu.memory_space<vmem>>, vector<1x1x1xf32>
      %145 = vector.shape_cast %144 : vector<1x1x1xf32> to vector<1x1xf32>
      %146 = vector.shape_cast %143 : vector<1x1xf32> to vector<1x1x1xf32>
      tpu.vector_store %arg6[%c0_68, %c0_69, %c0_70], %146 {strides = array<i32>} : memref<1x1x1xf32, #tpu.memory_space<vmem>>, vector<1x1x1xf32>,
    } else {
    }
    return
  }
  func.func @transform_0(%arg0: i32, %arg1: i32, %arg2: i32) -> (i32, i32, i32) {
    %c2_i32 = arith.constant 2 : i32
    %0 = arith.muli %arg1, %c2_i32 : i32
    %1 = arith.addi %0, %arg2 : i32
    %c0_i32 = arith.constant 0 : i32
    %c0_i32_0 = arith.constant 0 : i32
    return %arg0, %c0_i32, %1 : i32, i32, i32
  }
  func.func @transform_1(%arg0: i32, %arg1: i32, %arg2: i32) -> (i32, i32) {
    %c0_i32 = arith.constant 0 : i32
    %c0_i32_0 = arith.constant 0 : i32
    %c0_i32_1 = arith.constant 0 : i32
    return %c0_i32, %c0_i32_0 : i32, i32
  }
  func.func @transform_2(%arg0: i32, %arg1: i32, %arg2: i32) -> (i32, i32) {
    %c0_i32 = arith.constant 0 : i32
    %c0_i32_0 = arith.constant 0 : i32
    %c0_i32_1 = arith.constant 0 : i32
    return %c0_i32, %c0_i32_0 : i32, i32
  }
  func.func @transform_3(%arg0: i32, %arg1: i32, %arg2: i32) -> (i32, i32, i32) {
    %c1_i32 = arith.constant 1 : i32
    %0 = arith.muli %arg0, %c1_i32 : i32
    %1 = arith.addi %0, %arg1 : i32
    %c0_i32 = arith.constant 0 : i32
    %c0_i32_0 = arith.constant 0 : i32
    %c0_i32_1 = arith.constant 0 : i32
    return %1, %c0_i32, %c0_i32_0 : i32, i32, i32
  }
}

</mosaic_0001>

<llo_original>
// kernel: tpu_custom_call.1
$region0: #{tpu_custom_call.1}
  #allocation0 [shape = 'u32[]', space=smem, size = 0x4, offset = 0x4, fixed_abs, tag = 'smem constant byte address 0x4 - core index']
  #allocation1 [shape = 'u32[144,128]{1,0:T(1,128)}', space=vmem, size = 0x12000, scoped, tag = 'internal scratch']
  #allocation2 [shape = 'f32[1,128]{1,0:T(1,128)}', space=vmem, size = 0x200, scoped, tag = 'scratch operand']
  %s0 = inlined_call_operand.vmem [shape: bf16[2,5,256], index: 0, kind: input, shape index: {}]
  %s1 = inlined_call_operand.vmem [shape: bf16[1792,5], index: 1, kind: input, shape index: {}]
  %s2 = inlined_call_operand.vmem [shape: bf16[1,1792], index: 2, kind: input, shape index: {}]
  %s3 = inlined_call_operand.vmem [shape: f32[2,1,1], index: 3, kind: output, shape index: {}]
  %s4 = sld [smem:[#allocation0]]
  $region53: #{tpu_custom_call.1} parent=0
    _
  %s6 = ssub.s32 1, %s4
  %s7 = scalar_select 0, %s6, %s4
  loop: start=0, step=1, limit=6
  $region2: #{tpu_custom_call.1} parent=0 // loop_pre_header
    _
  $region3: #{tpu_custom_call.1} parent=0 // loop_header
    %s9 = sphi 0, %s13
    %p10 = scmp.ge.s32.totalorder %s9, 6
    %s16 = sphi 0, %s35
    %s17 = sphi 0, %s31
    %s18 = sphi 0, %s27
    %s19 = sphi 0, %s16
    %s20 = sphi 0, %s17
    %s21 = sphi 0, %s18
    %s22 = sphi 0, %s19
    %s23 = sphi 0, %s20
    %s24 = sphi 0, %s21
    %s44 = sphi 0, %s46
    %s47 = sphi 0, %s44
    %s48 = sphi 0, %s47
    %s64 = sphi 0, %s48
    %s68 = sphi 0, %s68
    %s70 = sphi 0, %s68
    %s71 = sphi 0, %s70
    %s85 = sphi 0, %s71
    %s89 = sphi 0, %s89
    %s91 = sphi 0, %s89
    %s92 = sphi 0, %s91
    %s106 = sphi 0, %s92
    %s114 = sphi 0, %s116
    %s117 = sphi 0, %s114
    %s118 = sphi 0, %s117
    %s134 = sphi 0, %s118
  $region4: #{tpu_custom_call.1} parent=0 // loop_header_branch
    %12 = sbr.rel (%p10) target = $region8
  $region5: #{tpu_custom_call.1} parent=0 // loop_body
    %s14 = ssub.s32 %s9, 1
    %s15 = ssub.s32 %s9, 2
    %s25 = sadd.s32 1, %s18
    %p26 = scmp.ge.s32.totalorder %s25, 2
    %s27 = scalar_select %p26, 0, %s25
    %s28 = sadd.s32 1, %s17
    %s29 = scalar_select %p26, %s28, %s17
    %p30 = scmp.ge.s32.totalorder %s29, 1
    %s31 = scalar_select %p30, 0, %s29
    %s32 = sadd.s32 1, %s16
    %s33 = scalar_select %p30, %s32, %s16
    %p34 = scmp.ge.s32.totalorder %s33, 2
    %s35 = scalar_select %p34, 0, %s33
    %s36 = smul.u32 %s17, 2
    %s37 = sadd.s32 %s36, %s18
    %s38 = smul.u32 %s31, 2
    %s39 = sadd.s32 %s38, %s27
    %s40 = ssub.s32 %s16, %s35
    %s41 = ssub.s32 %s37, %s39
    %s42 = sor.u32 %s40, %s41
    %p43 = scmp.eq.s32.totalorder %s42, 0
    %s45 = sadd.s32 %s44, 1
    %s46 = scalar_select %p43, %s44, %s45
    %p49 = pneg %p43
    %p50 = scmp.eq.s32.totalorder %s9, 3
    %p51 = por %p49, %p50
    %p52 = scmp.ne.s32.totalorder %s44, %s47
    %p53 = scmp.eq.s32.totalorder %s9, 0
    %p54 = por %p52, %p53
    %p55 = scmp.ne.s32.totalorder %s44, %s47
    %p56 = scmp.eq.s32.totalorder %s14, 3
    %p57 = por %p55, %p56
    %p58 = scmp.ne.s32.totalorder %s47, %s48
    %p59 = scmp.eq.s32.totalorder %s14, 0
    %p60 = por %p58, %p59
    %p61 = scmp.ne.s32.totalorder %s47, %s48
    %p62 = scmp.eq.s32.totalorder %s15, 3
    %p63 = por %p61, %p62
    %p65 = scmp.ne.s32.totalorder %s48, %s64
    %p66 = scmp.eq.s32.totalorder %s15, 0
    %p67 = por %p65, %p66
    %s69 = sadd.s32 %s68, 1
    %p72 = scmp.eq.s32.totalorder %s9, 3
    %p73 = scmp.ne.s32.totalorder %s68, %s70
    %p74 = scmp.eq.s32.totalorder %s9, 0
    %p75 = por %p73, %p74
    %p76 = scmp.ne.s32.totalorder %s68, %s70
    %p77 = scmp.eq.s32.totalorder %s14, 3
    %p78 = por %p76, %p77
    %p79 = scmp.ne.s32.totalorder %s70, %s71
    %p80 = scmp.eq.s32.totalorder %s14, 0
    %p81 = por %p79, %p80
    %p82 = scmp.ne.s32.totalorder %s70, %s71
    %p83 = scmp.eq.s32.totalorder %s15, 3
    %p84 = por %p82, %p83
    %p86 = scmp.ne.s32.totalorder %s71, %s85
    %p87 = scmp.eq.s32.totalorder %s15, 0
    %p88 = por %p86, %p87
    %s90 = sadd.s32 %s89, 1
    %p93 = scmp.eq.s32.totalorder %s9, 3
    %p94 = scmp.ne.s32.totalorder %s89, %s91
    %p95 = scmp.eq.s32.totalorder %s9, 0
    %p96 = por %p94, %p95
    %p97 = scmp.ne.s32.totalorder %s89, %s91
    %p98 = scmp.eq.s32.totalorder %s14, 3
    %p99 = por %p97, %p98
    %p100 = scmp.ne.s32.totalorder %s91, %s92
    %p101 = scmp.eq.s32.totalorder %s14, 0
    %p102 = por %p100, %p101
    %p103 = scmp.ne.s32.totalorder %s91, %s92
    %p104 = scmp.eq.s32.totalorder %s15, 3
    %p105 = por %p103, %p104
    %p107 = scmp.ne.s32.totalorder %s92, %s106
    %p108 = scmp.eq.s32.totalorder %s15, 0
    %p109 = por %p107, %p108
    %s110 = sadd.s32 %s16, %s17
    %s111 = sadd.s32 %s35, %s31
    %s112 = ssub.s32 %s110, %s111
    %p113 = scmp.eq.s32.totalorder %s112, 0
    %s115 = sadd.s32 %s114, 1
    %s116 = scalar_select %p113, %s114, %s115
    %p119 = pneg %p113
    %p120 = scmp.eq.s32.totalorder %s9, 3
    %p121 = por %p119, %p120
    %p122 = scmp.ne.s32.totalorder %s114, %s117
    %p123 = scmp.eq.s32.totalorder %s9, 0
    %p124 = por %p122, %p123
    %p125 = scmp.ne.s32.totalorder %s114, %s117
    %p126 = scmp.eq.s32.totalorder %s14, 3
    %p127 = por %p125, %p126
    %p128 = scmp.ne.s32.totalorder %s117, %s118
    %p129 = scmp.eq.s32.totalorder %s14, 0
    %p130 = por %p128, %p129
    %p131 = scmp.ne.s32.totalorder %s117, %s118
    %p132 = scmp.eq.s32.totalorder %s15, 3
    %p133 = por %p131, %p132
    %p135 = scmp.ne.s32.totalorder %s118, %s134
    %p136 = scmp.eq.s32.totalorder %s15, 0
    %p137 = por %p135, %p136
    %p138 = scmp.le.s32.totalorder 1, %s9
    %p139 = scmp.lt.s32.totalorder %s9, 5
    %p140 = pnand %p138, %p139
    %p141 = pneg %p140
    // Predicated region
    $region9: #{tpu_custom_call.1} parent=5 // pred_check
      _
    $region10: #{tpu_custom_call.1} parent=5 // pred_check_branch
      %143 = sbr.rel (%p140) target = $region12
    $region11: #{tpu_custom_call.1} parent=5 // pred_region
      %s144 = ssub.s32 %s9, 1
      // Predicated region
      $region13: #{tpu_custom_call.1} parent=11 // pred_check
        %p145 = pneg %p81
      $region14: #{tpu_custom_call.1} parent=11 // pred_check_branch
        %147 = sbr.rel (%p145) target = $region16
      $region15: #{tpu_custom_call.1} parent=11 // pred_region
        _
      $region16: #{tpu_custom_call.1} parent=11 // pred_fallthru
        _
      // Predicated region
      $region17: #{tpu_custom_call.1} parent=11 // pred_check
        %p148 = pneg %p102
      $region18: #{tpu_custom_call.1} parent=11 // pred_check_branch
        %150 = sbr.rel (%p148) target = $region20
      $region19: #{tpu_custom_call.1} parent=11 // pred_region
        _
      $region20: #{tpu_custom_call.1} parent=11 // pred_fallthru
        _
    $region12: #{tpu_custom_call.1} parent=5 // pred_fallthru
      _
    %p151 = scmp.lt.s32.totalorder %s9, 4
    // Predicated region
    $region21: #{tpu_custom_call.1} parent=5 // pred_check
      %p152 = pneg %p151
    $region22: #{tpu_custom_call.1} parent=5 // pred_check_branch
      %154 = sbr.rel (%p152) target = $region24
    $region23: #{tpu_custom_call.1} parent=5 // pred_region
      // Predicated region
      $region25: #{tpu_custom_call.1} parent=23 // pred_check
        %p155 = pneg %p54
      $region26: #{tpu_custom_call.1} parent=23 // pred_check_branch
        %157 = sbr.rel (%p155) target = $region28
      $region27: #{tpu_custom_call.1} parent=23 // pred_region
        %s158 = smul.u32 %s17, 2
        %s159 = sadd.s32 %s158, %s18
        %p160 = scmp.lt.s32.totalorder %s16, 1
        %s161 = scalar_select %p160, %s16, 1
        %p162 = scmp.lt.s32.totalorder %s159, 1
        %s163 = scalar_select %p162, %s159, 1
        %s164 = smul.addr %s161, 2
        %s165 = sadd.s32 %s163, %s164
        %s166 = smul.addr %s165, 4
        %s167 = scalar_lea.vmem %s0, %s166
        %s168 = smul.u32 %s17, 2
        %s169 = sadd.s32 %s168, %s18
      $region28: #{tpu_custom_call.1} parent=23 // pred_fallthru
        _
    $region24: #{tpu_custom_call.1} parent=5 // pred_fallthru
      _
    %p170 = scmp.le.s32.totalorder 1, %s9
    %p171 = scmp.lt.s32.totalorder %s9, 5
    %p172 = pnand %p170, %p171
    %p173 = pneg %p172
    // Predicated region
    $region29: #{tpu_custom_call.1} parent=5 // pred_check
      _
    $region30: #{tpu_custom_call.1} parent=5 // pred_check_branch
      %175 = sbr.rel (%p172) target = $region32
    $region31: #{tpu_custom_call.1} parent=5 // pred_region
      %s176 = ssub.s32 %s9, 1
      %s177 = smul.u32 %s20, 2
      %s178 = sadd.s32 %s177, %s21
      %p179 = scmp.lt.s32.totalorder %s19, 1
      %s180 = scalar_select %p179, %s19, 1
      %p181 = scmp.lt.s32.totalorder %s178, 1
      %s182 = scalar_select %p181, %s178, 1
      %s183 = smul.addr %s180, 2
      %s184 = sadd.s32 %s182, %s183
      %s185 = smul.addr %s184, 4
      %s186 = scalar_lea.vmem %s0, %s185
      %p187 = pneg %p60
      %p188 = pneg %p57
      %p189 = pneg %p81
      %p190 = pneg %p78
      %p191 = pneg %p102
      %p192 = pneg %p99
      %p193 = pneg %p130
      %p194 = pneg %p127
      %s195 = sadd.s32 %s19, %s20
      %p196 = scmp.lt.s32.totalorder %s195, 1
      %s197 = scalar_select %p196, %s195, 1
      %s198 = scalar_lea.vmem %s3, %s197
      %s199 = smul.u32 %s20, 2
      %s200 = sadd.s32 %s199, %s21
      %p201 = scmp.lt.s32.totalorder %s19, 1
      %s202 = scalar_select %p201, %s19, 1
      %p203 = scmp.lt.s32.totalorder %s200, 1
      %s204 = scalar_select %p203, %s200, 1
      %s205 = smul.addr %s202, 2
      %s206 = sadd.s32 %s204, %s205
      %s207 = smul.addr %s206, 4
      %s208 = scalar_lea.vmem %s0, %s207
      %s209 = smul.u32 %s20, 2
      %s210 = sadd.s32 %s209, %s21
      %s211 = sadd.s32 %s19, %s20
      %p212 = scmp.lt.s32.totalorder %s211, 1
      %s213 = scalar_select %p212, %s211, 1
      %s214 = scalar_lea.vmem %s3, %s213
      %s215 = sadd.s32 %s19, %s20
      %p217 = scmp.eq.s32.totalorder %s21, 0
      // Predicated region
      $region33: #{tpu_custom_call.1} parent=31 // pred_check
        %p218 = pneg %p217
      $region34: #{tpu_custom_call.1} parent=31 // pred_check_branch
        %220 = sbr.rel (%p218) target = $region36
      $region35: #{tpu_custom_call.1} parent=31 // pred_region
        %221 = vst [vmem:[#allocation2] sm:$0x1] 0.0
      $region36: #{tpu_custom_call.1} parent=31 // pred_fallthru
        _
      %v222 = vld [vmem:[%s208] sm:$0x7]
      %v223 = vld [vmem:[#allocation2] sm:$0x1]
      %v224 = vld [vmem:[%s1] sm:$0xf]
      %v225 = vld [vmem:[%s1 + $0x4] sm:$0xf]
      %v226 = vld [vmem:[%s1 + $0x8] sm:$0xf]
      %v227 = vld [vmem:[%s1 + $0xc] sm:$0xf]
      %v228 = vld [vmem:[%s1 + $0x10] sm:$0xf]
      %v229 = vld [vmem:[%s1 + $0x14] sm:$0xf]
      %v230 = vld [vmem:[%s1 + $0x18] sm:$0xf]
      %v231 = vld [vmem:[%s1 + $0x1c] sm:$0xf]
      %v232 = vld [vmem:[%s1 + $0x20] sm:$0xf]
      %v233 = vld [vmem:[%s1 + $0x24] sm:$0xf]
      %v234 = vld [vmem:[%s1 + $0x28] sm:$0xf]
      %v235 = vld [vmem:[%s1 + $0x2c] sm:$0xf]
      %v236 = vld [vmem:[%s1 + $0x30] sm:$0xf]
      %v237 = vld [vmem:[%s1 + $0x34] sm:$0xf]
      %v238 = vld [vmem:[%s1 + $0x38] sm:$0xf]
      %v239 = vld [vmem:[%s1 + $0x3c] sm:$0xf]
      %v240 = vld [vmem:[%s1 + $0x40] sm:$0xf]
      %v241 = vld [vmem:[%s1 + $0x44] sm:$0xf]
      %v242 = vld [vmem:[%s1 + $0x48] sm:$0xf]
      %v243 = vld [vmem:[%s1 + $0x4c] sm:$0xf]
      %v244 = vld [vmem:[%s1 + $0x50] sm:$0xf]
      %v245 = vld [vmem:[%s1 + $0x54] sm:$0xf]
      %v246 = vld [vmem:[%s1 + $0x58] sm:$0xf]
      %v247 = vld [vmem:[%s1 + $0x5c] sm:$0xf]
      %v248 = vld [vmem:[%s1 + $0x60] sm:$0xf]
      %v249 = vld [vmem:[%s1 + $0x64] sm:$0xf]
      %v250 = vld [vmem:[%s1 + $0x68] sm:$0xf]
      %v251 = vld [vmem:[%s1 + $0x6c] sm:$0xf]
      %v252 = vld [vmem:[%s1 + $0x70] sm:$0xf]
      %v253 = vld [vmem:[%s1 + $0x74] sm:$0xf]
      %v254 = vld [vmem:[%s1 + $0x78] sm:$0xf]
      %v255 = vld [vmem:[%s1 + $0x7c] sm:$0xf]
      %v288 = vunpack.c.l.b16 %v224
      %v289 = vunpack.c.l.b16 %v225
      %v290 = vunpack.c.l.b16 %v226
      %v291 = vunpack.c.l.b16 %v227
      %v292 = vunpack.c.l.b16 %v228
      %v293 = vunpack.c.l.b16 %v229
      %v294 = vunpack.c.l.b16 %v230
      %v295 = vunpack.c.l.b16 %v231
      %v296 = vunpack.c.l.b16 %v232
      %v297 = vunpack.c.l.b16 %v233
      %v298 = vunpack.c.l.b16 %v234
      %v299 = vunpack.c.l.b16 %v235
      %v300 = vunpack.c.l.b16 %v236
      %v301 = vunpack.c.l.b16 %v237
      %v302 = vunpack.c.l.b16 %v238
      %v303 = vunpack.c.l.b16 %v239
      %v304 = vunpack.c.l.b16 %v240
      %v305 = vunpack.c.l.b16 %v241
      %v306 = vunpack.c.l.b16 %v242
      %v307 = vunpack.c.l.b16 %v243
      %v308 = vunpack.c.l.b16 %v244
      %v309 = vunpack.c.l.b16 %v245
      %v310 = vunpack.c.l.b16 %v246
      %v311 = vunpack.c.l.b16 %v247
      %v312 = vunpack.c.l.b16 %v248
      %v313 = vunpack.c.l.b16 %v249
      %v314 = vunpack.c.l.b16 %v250
      %v315 = vunpack.c.l.b16 %v251
      %v316 = vunpack.c.l.b16 %v252
      %v317 = vunpack.c.l.b16 %v253
      %v318 = vunpack.c.l.b16 %v254
      %v319 = vunpack.c.l.b16 %v255
      %v320 = vpack.c.b16 %v289, %v288
      %v321 = vpack.c.b16 %v291, %v290
      %v322 = vpack.c.b16 %v293, %v292
      %v323 = vpack.c.b16 %v295, %v294
      %v324 = vpack.c.b16 %v297, %v296
      %v325 = vpack.c.b16 %v299, %v298
      %v326 = vpack.c.b16 %v301, %v300
      %v327 = vpack.c.b16 %v303, %v302
      %v328 = vpack.c.b16 %v305, %v304
      %v329 = vpack.c.b16 %v307, %v306
      %v330 = vpack.c.b16 %v309, %v308
      %v331 = vpack.c.b16 %v311, %v310
      %v332 = vpack.c.b16 %v313, %v312
      %v333 = vpack.c.b16 %v315, %v314
      %v334 = vpack.c.b16 %v317, %v316
      %v335 = vpack.c.b16 %v319, %v318
      %vm336 = vcmask 39936
      %v338 = vsel %vm336, %v320, 0
      %v341 = vsel %vm336, %v321, 0
      %v344 = vsel %vm336, %v322, 0
      %v347 = vsel %vm336, %v323, 0
      %v350 = vsel %vm336, %v324, 0
      %v353 = vsel %vm336, %v325, 0
      %v356 = vsel %vm336, %v326, 0
      %v359 = vsel %vm336, %v327, 0
      %v362 = vsel %vm336, %v328, 0
      %v365 = vsel %vm336, %v329, 0
      %v368 = vsel %vm336, %v330, 0
      %v371 = vsel %vm336, %v331, 0
      %v374 = vsel %vm336, %v332, 0
      %v377 = vsel %vm336, %v333, 0
      %v380 = vsel %vm336, %v334, 0
      %v383 = vsel %vm336, %v335, 0
      %vm385 = vcmask 1041408
      %vm386 = vcmask 1042432
      %v387 = vsel %vm385, 4294967295, 65535
      %v388 = vsel %vm386, %v387, 0
      %v390 = vand.u32 %v222, %v388
      %392 = vmatprep.subr.bf16.mxu0 0
      %393 = vmatpush1.bf16.msra.mxu0 0
      %394 = vmatprep.subr.bf16.mxu0 0
      %395 = vmatpush1.bf16.msra.mxu0 0
      %396 = vmatprep.subr.bf16.mxu0 0
      %397 = vmatpush1.bf16.msra.mxu0 0
      %398 = vmatprep.subr.bf16.mxu0 0
      %399 = vmatpush1.bf16.msra.mxu0 0
      %400 = vmatprep.subr.bf16.mxu0 0
      %401 = vmatpush1.bf16.msra.mxu0 0
      %402 = vmatprep.subr.bf16.mxu0 0
      %403 = vmatpush1.bf16.msra.mxu0 0
      %404 = vmatprep.subr.bf16.mxu0 0
      %405 = vmatpush1.bf16.msra.mxu0 0
      %406 = vmatprep.subr.bf16.mxu0 0
      %407 = vmatpush1.bf16.msra.mxu0 %v390
      %408 = vmatprep.subr.bf16.mxu0 0
      %409 = vmatpush2.bf16.msra.mxu0 0
      %410 = vmatprep.subr.bf16.mxu0 0
      %411 = vmatpush2.bf16.msra.mxu0 0
      %412 = vmatprep.subr.bf16.mxu0 0
      %413 = vmatpush2.bf16.msra.mxu0 0
      %414 = vmatprep.subr.bf16.mxu0 0
      %415 = vmatpush2.bf16.msra.mxu0 0
      %416 = vmatprep.subr.bf16.mxu0 0
      %417 = vmatpush2.bf16.msra.mxu0 0
      %418 = vmatprep.subr.bf16.mxu0 0
      %419 = vmatpush2.bf16.msra.mxu0 0
      %420 = vmatprep.subr.bf16.mxu0 0
      %421 = vmatpush2.bf16.msra.mxu0 0
      %422 = vmatprep.subr.bf16.mxu0 0
      %423 = vmatpush2.bf16.msra.mxu0 0
      %424 = vmatprep.mubr.bf16.mxu0 0
      %425 = vmatmul.mubr.bf16.gmra.mxu0 %v338
      %v426 = vpop.f32.mrf.mxu0
      %v427 = vadd.f32 0.0, %v426
      %v428 = vpop.f32.mrf.mxu0
      %v429 = vpop.f32.mrf.mxu0
      %v430 = vadd.f32 0.0, %v429
      %v431 = vpop.f32.mrf.mxu0
      %432 = vmatprep.mubr.bf16.mxu0 0
      %433 = vmatmul.mubr.bf16.gmra.mxu0 %v341
      %v434 = vpop.f32.mrf.mxu0
      %v435 = vadd.f32 0.0, %v434
      %v436 = vpop.f32.mrf.mxu0
      %v437 = vpop.f32.mrf.mxu0
      %v438 = vadd.f32 0.0, %v437
      %v439 = vpop.f32.mrf.mxu0
      %440 = vmatprep.mubr.bf16.mxu0 0
      %441 = vmatmul.mubr.bf16.gmra.mxu0 %v344
      %v442 = vpop.f32.mrf.mxu0
      %v443 = vadd.f32 0.0, %v442
      %v444 = vpop.f32.mrf.mxu0
      %v445 = vpop.f32.mrf.mxu0
      %v446 = vadd.f32 0.0, %v445
      %v447 = vpop.f32.mrf.mxu0
      %448 = vmatprep.mubr.bf16.mxu0 0
      %449 = vmatmul.mubr.bf16.gmra.mxu0 %v347
      %v450 = vpop.f32.mrf.mxu0
      %v451 = vadd.f32 0.0, %v450
      %v452 = vpop.f32.mrf.mxu0
      %v453 = vpop.f32.mrf.mxu0
      %v454 = vadd.f32 0.0, %v453
      %v455 = vpop.f32.mrf.mxu0
      %456 = vmatprep.mubr.bf16.mxu0 0
      %457 = vmatmul.mubr.bf16.gmra.mxu0 %v350
      %v458 = vpop.f32.mrf.mxu0
      %v459 = vadd.f32 0.0, %v458
      %v460 = vpop.f32.mrf.mxu0
      %v461 = vpop.f32.mrf.mxu0
      %v462 = vadd.f32 0.0, %v461
      %v463 = vpop.f32.mrf.mxu0
      %464 = vmatprep.mubr.bf16.mxu0 0
      %465 = vmatmul.mubr.bf16.gmra.mxu0 %v353
      %v466 = vpop.f32.mrf.mxu0
      %v467 = vadd.f32 0.0, %v466
      %v468 = vpop.f32.mrf.mxu0
      %v469 = vpop.f32.mrf.mxu0
      %v470 = vadd.f32 0.0, %v469
      %v471 = vpop.f32.mrf.mxu0
      %472 = vmatprep.mubr.bf16.mxu0 0
      %473 = vmatmul.mubr.bf16.gmra.mxu0 %v356
      %v474 = vpop.f32.mrf.mxu0
      %v475 = vadd.f32 0.0, %v474
      %v476 = vpop.f32.mrf.mxu0
      %v477 = vpop.f32.mrf.mxu0
      %v478 = vadd.f32 0.0, %v477
      %v479 = vpop.f32.mrf.mxu0
      %480 = vmatprep.mubr.bf16.mxu0 0
      %481 = vmatmul.mubr.bf16.gmra.mxu0 %v359
      %v482 = vpop.f32.mrf.mxu0
      %v483 = vadd.f32 0.0, %v482
      %v484 = vpop.f32.mrf.mxu0
      %v485 = vpop.f32.mrf.mxu0
      %v486 = vadd.f32 0.0, %v485
      %v487 = vpop.f32.mrf.mxu0
      %488 = vmatprep.mubr.bf16.mxu0 0
      %489 = vmatmul.mubr.bf16.gmra.mxu0 %v362
      %v490 = vpop.f32.mrf.mxu0
      %v491 = vadd.f32 0.0, %v490
      %v492 = vpop.f32.mrf.mxu0
      %v493 = vpop.f32.mrf.mxu0
      %v494 = vadd.f32 0.0, %v493
      %v495 = vpop.f32.mrf.mxu0
      %496 = vmatprep.mubr.bf16.mxu0 0
      %497 = vmatmul.mubr.bf16.gmra.mxu0 %v365
      %v498 = vpop.f32.mrf.mxu0
      %v499 = vadd.f32 0.0, %v498
      %v500 = vpop.f32.mrf.mxu0
      %v501 = vpop.f32.mrf.mxu0
      %v502 = vadd.f32 0.0, %v501
      %v503 = vpop.f32.mrf.mxu0
      %504 = vmatprep.mubr.bf16.mxu0 0
      %505 = vmatmul.mubr.bf16.gmra.mxu0 %v368
      %v506 = vpop.f32.mrf.mxu0
      %v507 = vadd.f32 0.0, %v506
      %v508 = vpop.f32.mrf.mxu0
      %v509 = vpop.f32.mrf.mxu0
      %v510 = vadd.f32 0.0, %v509
      %v511 = vpop.f32.mrf.mxu0
      %512 = vmatprep.mubr.bf16.mxu0 0
      %513 = vmatmul.mubr.bf16.gmra.mxu0 %v371
      %v514 = vpop.f32.mrf.mxu0
      %v515 = vadd.f32 0.0, %v514
      %v516 = vpop.f32.mrf.mxu0
      %v517 = vpop.f32.mrf.mxu0
      %v518 = vadd.f32 0.0, %v517
      %v519 = vpop.f32.mrf.mxu0
      %520 = vmatprep.mubr.bf16.mxu0 0
      %521 = vmatmul.mubr.bf16.gmra.mxu0 %v374
      %v522 = vpop.f32.mrf.mxu0
      %v523 = vadd.f32 0.0, %v522
      %v524 = vpop.f32.mrf.mxu0
      %v525 = vpop.f32.mrf.mxu0
      %v526 = vadd.f32 0.0, %v525
      %v527 = vpop.f32.mrf.mxu0
      %528 = vmatprep.mubr.bf16.mxu0 0
      %529 = vmatmul.mubr.bf16.gmra.mxu0 %v377
      %v530 = vpop.f32.mrf.mxu0
      %v531 = vadd.f32 0.0, %v530
      %v532 = vpop.f32.mrf.mxu0
      %v533 = vpop.f32.mrf.mxu0
      %v534 = vadd.f32 0.0, %v533
      %v535 = vpop.f32.mrf.mxu0
      %536 = vmatprep.mubr.bf16.mxu0 0
      %537 = vmatmul.mubr.bf16.gmra.mxu0 %v380
      %v538 = vpop.f32.mrf.mxu0
      %v539 = vadd.f32 0.0, %v538
      %v540 = vpop.f32.mrf.mxu0
      %v541 = vpop.f32.mrf.mxu0
      %v542 = vadd.f32 0.0, %v541
      %v543 = vpop.f32.mrf.mxu0
      %544 = vmatprep.mubr.bf16.mxu0 0
      %545 = vmatmul.mubr.bf16.gmra.mxu0 %v383
      %v546 = vpop.f32.mrf.mxu0
      %v547 = vadd.f32 0.0, %v546
      %v548 = vpop.f32.mrf.mxu0
      %v549 = vpop.f32.mrf.mxu0
      %v550 = vadd.f32 0.0, %v549
      %v551 = vpop.f32.mrf.mxu0
      %552 = vdwg.mxu0
      %v553 = vmul.f32 %v427, 0.5
      %v554 = vmul.f32 %v430, 0.5
      %v555 = vmul.f32 %v435, 0.5
      %v556 = vmul.f32 %v438, 0.5
      %v557 = vmul.f32 %v443, 0.5
      %v558 = vmul.f32 %v446, 0.5
      %v559 = vmul.f32 %v451, 0.5
      %v560 = vmul.f32 %v454, 0.5
      %v561 = vmul.f32 %v459, 0.5
      %v562 = vmul.f32 %v462, 0.5
      %v563 = vmul.f32 %v467, 0.5
      %v564 = vmul.f32 %v470, 0.5
      %v565 = vmul.f32 %v475, 0.5
      %v566 = vmul.f32 %v478, 0.5
      %v567 = vmul.f32 %v483, 0.5
      %v568 = vmul.f32 %v486, 0.5
      %v569 = vmul.f32 %v491, 0.5
      %v570 = vmul.f32 %v494, 0.5
      %v571 = vmul.f32 %v499, 0.5
      %v572 = vmul.f32 %v502, 0.5
      %v573 = vmul.f32 %v507, 0.5
      %v574 = vmul.f32 %v510, 0.5
      %v575 = vmul.f32 %v515, 0.5
      %v576 = vmul.f32 %v518, 0.5
      %v577 = vmul.f32 %v523, 0.5
      %v578 = vmul.f32 %v526, 0.5
      %v579 = vmul.f32 %v531, 0.5
      %v580 = vmul.f32 %v534, 0.5
      %v581 = vmul.f32 %v539, 0.5
      %v582 = vmul.f32 %v542, 0.5
      %v583 = vmul.f32 %v547, 0.5
      %v584 = vmul.f32 %v550, 0.5
      %v585 = vtanh.pop %v553
      %v586 = vtanh.pop %v554
      %v587 = vtanh.pop %v555
      %v588 = vtanh.pop %v556
      %v589 = vtanh.pop %v557
      %v590 = vtanh.pop %v558
      %v591 = vtanh.pop %v559
      %v592 = vtanh.pop %v560
      %v593 = vtanh.pop %v561
      %v594 = vtanh.pop %v562
      %v595 = vtanh.pop %v563
      %v596 = vtanh.pop %v564
      %v597 = vtanh.pop %v565
      %v598 = vtanh.pop %v566
      %v599 = vtanh.pop %v567
      %v600 = vtanh.pop %v568
      %v601 = vtanh.pop %v569
      %v602 = vtanh.pop %v570
      %v603 = vtanh.pop %v571
      %v604 = vtanh.pop %v572
      %v605 = vtanh.pop %v573
      %v606 = vtanh.pop %v574
      %v607 = vtanh.pop %v575
      %v608 = vtanh.pop %v576
      %v609 = vtanh.pop %v577
      %v610 = vtanh.pop %v578
      %v611 = vtanh.pop %v579
      %v612 = vtanh.pop %v580
      %v613 = vtanh.pop %v581
      %v614 = vtanh.pop %v582
      %v615 = vtanh.pop %v583
      %v616 = vtanh.pop %v584
      %v617 = vadd.f32 %v585, 1.0
      %v618 = vadd.f32 %v586, 1.0
      %v619 = vadd.f32 %v587, 1.0
      %v620 = vadd.f32 %v588, 1.0
      %v621 = vadd.f32 %v589, 1.0
      %v622 = vadd.f32 %v590, 1.0
      %v623 = vadd.f32 %v591, 1.0
      %v624 = vadd.f32 %v592, 1.0
      %v625 = vadd.f32 %v593, 1.0
      %v626 = vadd.f32 %v594, 1.0
      %v627 = vadd.f32 %v595, 1.0
      %v628 = vadd.f32 %v596, 1.0
      %v629 = vadd.f32 %v597, 1.0
      %v630 = vadd.f32 %v598, 1.0
      %v631 = vadd.f32 %v599, 1.0
      %v632 = vadd.f32 %v600, 1.0
      %v633 = vadd.f32 %v601, 1.0
      %v634 = vadd.f32 %v602, 1.0
      %v635 = vadd.f32 %v603, 1.0
      %v636 = vadd.f32 %v604, 1.0
      %v637 = vadd.f32 %v605, 1.0
      %v638 = vadd.f32 %v606, 1.0
      %v639 = vadd.f32 %v607, 1.0
      %v640 = vadd.f32 %v608, 1.0
      %v641 = vadd.f32 %v609, 1.0
      %v642 = vadd.f32 %v610, 1.0
      %v643 = vadd.f32 %v611, 1.0
      %v644 = vadd.f32 %v612, 1.0
      %v645 = vadd.f32 %v613, 1.0
      %v646 = vadd.f32 %v614, 1.0
      %v647 = vadd.f32 %v615, 1.0
      %v648 = vadd.f32 %v616, 1.0
      %v649 = vmul.f32 %v553, %v617
      %v650 = vmul.f32 %v554, %v618
      %v651 = vmul.f32 %v555, %v619
      %v652 = vmul.f32 %v556, %v620
      %v653 = vmul.f32 %v557, %v621
      %v654 = vmul.f32 %v558, %v622
      %v655 = vmul.f32 %v559, %v623
      %v656 = vmul.f32 %v560, %v624
      %v657 = vmul.f32 %v561, %v625
      %v658 = vmul.f32 %v562, %v626
      %v659 = vmul.f32 %v563, %v627
      %v660 = vmul.f32 %v564, %v628
      %v661 = vmul.f32 %v565, %v629
      %v662 = vmul.f32 %v566, %v630
      %v663 = vmul.f32 %v567, %v631
      %v664 = vmul.f32 %v568, %v632
      %v665 = vmul.f32 %v569, %v633
      %v666 = vmul.f32 %v570, %v634
      %v667 = vmul.f32 %v571, %v635
      %v668 = vmul.f32 %v572, %v636
      %v669 = vmul.f32 %v573, %v637
      %v670 = vmul.f32 %v574, %v638
      %v671 = vmul.f32 %v575, %v639
      %v672 = vmul.f32 %v576, %v640
      %v673 = vmul.f32 %v577, %v641
      %v674 = vmul.f32 %v578, %v642
      %v675 = vmul.f32 %v579, %v643
      %v676 = vmul.f32 %v580, %v644
      %v677 = vmul.f32 %v581, %v645
      %v678 = vmul.f32 %v582, %v646
      %v679 = vmul.f32 %v583, %v647
      %v680 = vmul.f32 %v584, %v648
      %v681 = vld [vmem:[%s2] sm:$0x3]
      %v682 = vpack.c.bf16 %v650, %v649
      %v683 = vpack.c.bf16 %v652, %v651
      %v684 = vpack.c.bf16 %v654, %v653
      %v685 = vpack.c.bf16 %v656, %v655
      %v686 = vpack.c.bf16 %v658, %v657
      %v687 = vpack.c.bf16 %v660, %v659
      %v688 = vpack.c.bf16 %v662, %v661
      %v689 = vpack.c.bf16 %v664, %v663
      %v690 = vpack.c.bf16 %v666, %v665
      %v691 = vpack.c.bf16 %v668, %v667
      %v692 = vpack.c.bf16 %v670, %v669
      %v693 = vpack.c.bf16 %v672, %v671
      %v694 = vpack.c.bf16 %v674, %v673
      %v695 = vpack.c.bf16 %v676, %v675
      %v696 = vpack.c.bf16 %v678, %v677
      %v697 = vpack.c.bf16 %v680, %v679
      %s698 = scalar_lea.vmem %s1, 128
      %v699 = vld [vmem:[%s698] sm:$0xf]
      %v700 = vld [vmem:[%s698 + $0x4] sm:$0xf]
      %v701 = vld [vmem:[%s698 + $0x8] sm:$0xf]
      %v702 = vld [vmem:[%s698 + $0xc] sm:$0xf]
      %v703 = vld [vmem:[%s698 + $0x10] sm:$0xf]
      %v704 = vld [vmem:[%s698 + $0x14] sm:$0xf]
      %v705 = vld [vmem:[%s698 + $0x18] sm:$0xf]
      %v706 = vld [vmem:[%s698 + $0x1c] sm:$0xf]
      %v707 = vld [vmem:[%s698 + $0x20] sm:$0xf]
      %v708 = vld [vmem:[%s698 + $0x24] sm:$0xf]
      %v709 = vld [vmem:[%s698 + $0x28] sm:$0xf]
      %v710 = vld [vmem:[%s698 + $0x2c] sm:$0xf]
      %v711 = vld [vmem:[%s698 + $0x30] sm:$0xf]
      %v712 = vld [vmem:[%s698 + $0x34] sm:$0xf]
      %v713 = vld [vmem:[%s698 + $0x38] sm:$0xf]
      %v714 = vld [vmem:[%s698 + $0x3c] sm:$0xf]
      %v715 = vld [vmem:[%s698 + $0x40] sm:$0xf]
      %v716 = vld [vmem:[%s698 + $0x44] sm:$0xf]
      %v717 = vld [vmem:[%s698 + $0x48] sm:$0xf]
      %v718 = vld [vmem:[%s698 + $0x4c] sm:$0xf]
      %v719 = vld [vmem:[%s698 + $0x50] sm:$0xf]
      %v720 = vld [vmem:[%s698 + $0x54] sm:$0xf]
      %v721 = vld [vmem:[%s698 + $0x58] sm:$0xf]
      %v722 = vld [vmem:[%s698 + $0x5c] sm:$0xf]
      %v723 = vld [vmem:[%s698 + $0x60] sm:$0xf]
      %v724 = vld [vmem:[%s698 + $0x64] sm:$0xf]
      %v725 = vld [vmem:[%s698 + $0x68] sm:$0xf]
      %v726 = vld [vmem:[%s698 + $0x6c] sm:$0xf]
      %v727 = vld [vmem:[%s698 + $0x70] sm:$0xf]
      %v728 = vld [vmem:[%s698 + $0x74] sm:$0xf]
      %v729 = vld [vmem:[%s698 + $0x78] sm:$0xf]
      %v730 = vld [vmem:[%s698 + $0x7c] sm:$0xf]
      %v763 = vunpack.c.l.b16 %v699
      %v764 = vunpack.c.l.b16 %v700
      %v765 = vunpack.c.l.b16 %v701
      %v766 = vunpack.c.l.b16 %v702
      %v767 = vunpack.c.l.b16 %v703
      %v768 = vunpack.c.l.b16 %v704
      %v769 = vunpack.c.l.b16 %v705
      %v770 = vunpack.c.l.b16 %v706
      %v771 = vunpack.c.l.b16 %v707
      %v772 = vunpack.c.l.b16 %v708
      %v773 = vunpack.c.l.b16 %v709
      %v774 = vunpack.c.l.b16 %v710
      %v775 = vunpack.c.l.b16 %v711
      %v776 = vunpack.c.l.b16 %v712
      %v777 = vunpack.c.l.b16 %v713
      %v778 = vunpack.c.l.b16 %v714
      %v779 = vunpack.c.l.b16 %v715
      %v780 = vunpack.c.l.b16 %v716
      %v781 = vunpack.c.l.b16 %v717
      %v782 = vunpack.c.l.b16 %v718
      %v783 = vunpack.c.l.b16 %v719
      %v784 = vunpack.c.l.b16 %v720
      %v785 = vunpack.c.l.b16 %v721
      %v786 = vunpack.c.l.b16 %v722
      %v787 = vunpack.c.l.b16 %v723
      %v788 = vunpack.c.l.b16 %v724
      %v789 = vunpack.c.l.b16 %v725
      %v790 = vunpack.c.l.b16 %v726
      %v791 = vunpack.c.l.b16 %v727
      %v792 = vunpack.c.l.b16 %v728
      %v793 = vunpack.c.l.b16 %v729
      %v794 = vunpack.c.l.b16 %v730
      %v795 = vpack.c.b16 %v764, %v763
      %v796 = vpack.c.b16 %v766, %v765
      %v797 = vpack.c.b16 %v768, %v767
      %v798 = vpack.c.b16 %v770, %v769
      %v799 = vpack.c.b16 %v772, %v771
      %v800 = vpack.c.b16 %v774, %v773
      %v801 = vpack.c.b16 %v776, %v775
      %v802 = vpack.c.b16 %v778, %v777
      %v803 = vpack.c.b16 %v780, %v779
      %v804 = vpack.c.b16 %v782, %v781
      %v805 = vpack.c.b16 %v784, %v783
      %v806 = vpack.c.b16 %v786, %v785
      %v807 = vpack.c.b16 %v788, %v787
      %v808 = vpack.c.b16 %v790, %v789
      %v809 = vpack.c.b16 %v792, %v791
      %v810 = vpack.c.b16 %v794, %v793
      %v812 = vsel %vm336, %v795, 0
      %v815 = vsel %vm336, %v796, 0
      %v818 = vsel %vm336, %v797, 0
      %v821 = vsel %vm336, %v798, 0
      %v824 = vsel %vm336, %v799, 0
      %v827 = vsel %vm336, %v800, 0
      %v830 = vsel %vm336, %v801, 0
      %v833 = vsel %vm336, %v802, 0
      %v836 = vsel %vm336, %v803, 0
      %v839 = vsel %vm336, %v804, 0
      %v842 = vsel %vm336, %v805, 0
      %v845 = vsel %vm336, %v806, 0
      %v848 = vsel %vm336, %v807, 0
      %v851 = vsel %vm336, %v808, 0
      %v854 = vsel %vm336, %v809, 0
      %v857 = vsel %vm336, %v810, 0
      %859 = vmatprep.subr.bf16.mxu0 0
      %860 = vmatpush1.bf16.msra.mxu0 0
      %861 = vmatprep.subr.bf16.mxu0 0
      %862 = vmatpush1.bf16.msra.mxu0 0
      %863 = vmatprep.subr.bf16.mxu0 0
      %864 = vmatpush1.bf16.msra.mxu0 0
      %865 = vmatprep.subr.bf16.mxu0 0
      %866 = vmatpush1.bf16.msra.mxu0 0
      %867 = vmatprep.subr.bf16.mxu0 0
      %868 = vmatpush1.bf16.msra.mxu0 0
      %869 = vmatprep.subr.bf16.mxu0 0
      %870 = vmatpush1.bf16.msra.mxu0 0
      %871 = vmatprep.subr.bf16.mxu0 0
      %872 = vmatpush1.bf16.msra.mxu0 0
      %873 = vmatprep.subr.bf16.mxu0 0
      %874 = vmatpush1.bf16.msra.mxu0 %v390
      %875 = vmatprep.subr.bf16.mxu0 0
      %876 = vmatpush2.bf16.msra.mxu0 0
      %877 = vmatprep.subr.bf16.mxu0 0
      %878 = vmatpush2.bf16.msra.mxu0 0
      %879 = vmatprep.subr.bf16.mxu0 0
      %880 = vmatpush2.bf16.msra.mxu0 0
      %881 = vmatprep.subr.bf16.mxu0 0
      %882 = vmatpush2.bf16.msra.mxu0 0
      %883 = vmatprep.subr.bf16.mxu0 0
      %884 = vmatpush2.bf16.msra.mxu0 0
      %885 = vmatprep.subr.bf16.mxu0 0
      %886 = vmatpush2.bf16.msra.mxu0 0
      %887 = vmatprep.subr.bf16.mxu0 0
      %888 = vmatpush2.bf16.msra.mxu0 0
      %889 = vmatprep.subr.bf16.mxu0 0
      %890 = vmatpush2.bf16.msra.mxu0 0
      %891 = vmatprep.mubr.bf16.mxu0 0
      %892 = vmatmul.mubr.bf16.gmra.mxu0 %v812
      %v893 = vpop.f32.mrf.mxu0
      %v894 = vadd.f32 0.0, %v893
      %v895 = vpop.f32.mrf.mxu0
      %v896 = vpop.f32.mrf.mxu0
      %v897 = vadd.f32 0.0, %v896
      %v898 = vpop.f32.mrf.mxu0
      %899 = vmatprep.mubr.bf16.mxu0 0
      %900 = vmatmul.mubr.bf16.gmra.mxu0 %v815
      %v901 = vpop.f32.mrf.mxu0
      %v902 = vadd.f32 0.0, %v901
      %v903 = vpop.f32.mrf.mxu0
      %v904 = vpop.f32.mrf.mxu0
      %v905 = vadd.f32 0.0, %v904
      %v906 = vpop.f32.mrf.mxu0
      %907 = vmatprep.mubr.bf16.mxu0 0
      %908 = vmatmul.mubr.bf16.gmra.mxu0 %v818
      %v909 = vpop.f32.mrf.mxu0
      %v910 = vadd.f32 0.0, %v909
      %v911 = vpop.f32.mrf.mxu0
      %v912 = vpop.f32.mrf.mxu0
      %v913 = vadd.f32 0.0, %v912
      %v914 = vpop.f32.mrf.mxu0
      %915 = vmatprep.mubr.bf16.mxu0 0
      %916 = vmatmul.mubr.bf16.gmra.mxu0 %v821
      %v917 = vpop.f32.mrf.mxu0
      %v918 = vadd.f32 0.0, %v917
      %v919 = vpop.f32.mrf.mxu0
      %v920 = vpop.f32.mrf.mxu0
      %v921 = vadd.f32 0.0, %v920
      %v922 = vpop.f32.mrf.mxu0
      %923 = vmatprep.mubr.bf16.mxu0 0
      %924 = vmatmul.mubr.bf16.gmra.mxu0 %v824
      %v925 = vpop.f32.mrf.mxu0
      %v926 = vadd.f32 0.0, %v925
      %v927 = vpop.f32.mrf.mxu0
      %v928 = vpop.f32.mrf.mxu0
      %v929 = vadd.f32 0.0, %v928
      %v930 = vpop.f32.mrf.mxu0
      %931 = vmatprep.mubr.bf16.mxu0 0
      %932 = vmatmul.mubr.bf16.gmra.mxu0 %v827
      %v933 = vpop.f32.mrf.mxu0
      %v934 = vadd.f32 0.0, %v933
      %v935 = vpop.f32.mrf.mxu0
      %v936 = vpop.f32.mrf.mxu0
      %v937 = vadd.f32 0.0, %v936
      %v938 = vpop.f32.mrf.mxu0
      %939 = vmatprep.mubr.bf16.mxu0 0
      %940 = vmatmul.mubr.bf16.gmra.mxu0 %v830
      %v941 = vpop.f32.mrf.mxu0
      %v942 = vadd.f32 0.0, %v941
      %v943 = vpop.f32.mrf.mxu0
      %v944 = vpop.f32.mrf.mxu0
      %v945 = vadd.f32 0.0, %v944
      %v946 = vpop.f32.mrf.mxu0
      %947 = vmatprep.mubr.bf16.mxu0 0
      %948 = vmatmul.mubr.bf16.gmra.mxu0 %v833
      %v949 = vpop.f32.mrf.mxu0
      %v950 = vadd.f32 0.0, %v949
      %v951 = vpop.f32.mrf.mxu0
      %v952 = vpop.f32.mrf.mxu0
      %v953 = vadd.f32 0.0, %v952
      %v954 = vpop.f32.mrf.mxu0
      %955 = vmatprep.mubr.bf16.mxu0 0
      %956 = vmatmul.mubr.bf16.gmra.mxu0 %v836
      %v957 = vpop.f32.mrf.mxu0
      %v958 = vadd.f32 0.0, %v957
      %v959 = vpop.f32.mrf.mxu0
      %v960 = vpop.f32.mrf.mxu0
      %v961 = vadd.f32 0.0, %v960
      %v962 = vpop.f32.mrf.mxu0
      %963 = vmatprep.mubr.bf16.mxu0 0
      %964 = vmatmul.mubr.bf16.gmra.mxu0 %v839
      %v965 = vpop.f32.mrf.mxu0
      %v966 = vadd.f32 0.0, %v965
      %v967 = vpop.f32.mrf.mxu0
      %v968 = vpop.f32.mrf.mxu0
      %v969 = vadd.f32 0.0, %v968
      %v970 = vpop.f32.mrf.mxu0
      %971 = vmatprep.mubr.bf16.mxu0 0
      %972 = vmatmul.mubr.bf16.gmra.mxu0 %v842
      %v973 = vpop.f32.mrf.mxu0
      %v974 = vadd.f32 0.0, %v973
      %v975 = vpop.f32.mrf.mxu0
      %v976 = vpop.f32.mrf.mxu0
      %v977 = vadd.f32 0.0, %v976
      %v978 = vpop.f32.mrf.mxu0
      %979 = vmatprep.mubr.bf16.mxu0 0
      %980 = vmatmul.mubr.bf16.gmra.mxu0 %v845
      %v981 = vpop.f32.mrf.mxu0
      %v982 = vadd.f32 0.0, %v981
      %v983 = vpop.f32.mrf.mxu0
      %v984 = vpop.f32.mrf.mxu0
      %v985 = vadd.f32 0.0, %v984
      %v986 = vpop.f32.mrf.mxu0
      %987 = vmatprep.mubr.bf16.mxu0 0
      %988 = vmatmul.mubr.bf16.gmra.mxu0 %v848
      %v989 = vpop.f32.mrf.mxu0
      %v990 = vadd.f32 0.0, %v989
      %v991 = vpop.f32.mrf.mxu0
      %v992 = vpop.f32.mrf.mxu0
      %v993 = vadd.f32 0.0, %v992
      %v994 = vpop.f32.mrf.mxu0
      %995 = vmatprep.mubr.bf16.mxu0 0
      %996 = vmatmul.mubr.bf16.gmra.mxu0 %v851
      %v997 = vpop.f32.mrf.mxu0
      %v998 = vadd.f32 0.0, %v997
      %v999 = vpop.f32.mrf.mxu0
      %v1000 = vpop.f32.mrf.mxu0
      %v1001 = vadd.f32 0.0, %v1000
      %v1002 = vpop.f32.mrf.mxu0
      %1003 = vmatprep.mubr.bf16.mxu0 0
      %1004 = vmatmul.mubr.bf16.gmra.mxu0 %v854
      %v1005 = vpop.f32.mrf.mxu0
      %v1006 = vadd.f32 0.0, %v1005
      %v1007 = vpop.f32.mrf.mxu0
      %v1008 = vpop.f32.mrf.mxu0
      %v1009 = vadd.f32 0.0, %v1008
      %v1010 = vpop.f32.mrf.mxu0
      %1011 = vmatprep.mubr.bf16.mxu0 0
      %1012 = vmatmul.mubr.bf16.gmra.mxu0 %v857
      %v1013 = vpop.f32.mrf.mxu0
      %v1014 = vadd.f32 0.0, %v1013
      %v1015 = vpop.f32.mrf.mxu0
      %v1016 = vpop.f32.mrf.mxu0
      %v1017 = vadd.f32 0.0, %v1016
      %v1018 = vpop.f32.mrf.mxu0
      %1019 = vdwg.mxu0
      %v1020 = vmul.f32 %v894, 0.5
      %v1021 = vmul.f32 %v897, 0.5
      %v1022 = vmul.f32 %v902, 0.5
      %v1023 = vmul.f32 %v905, 0.5
      %v1024 = vmul.f32 %v910, 0.5
      %v1025 = vmul.f32 %v913, 0.5
      %v1026 = vmul.f32 %v918, 0.5
      %v1027 = vmul.f32 %v921, 0.5
      %v1028 = vmul.f32 %v926, 0.5
      %v1029 = vmul.f32 %v929, 0.5
      %v1030 = vmul.f32 %v934, 0.5
      %v1031 = vmul.f32 %v937, 0.5
      %v1032 = vmul.f32 %v942, 0.5
      %v1033 = vmul.f32 %v945, 0.5
      %v1034 = vmul.f32 %v950, 0.5
      %v1035 = vmul.f32 %v953, 0.5
      %v1036 = vmul.f32 %v958, 0.5
      %v1037 = vmul.f32 %v961, 0.5
      %v1038 = vmul.f32 %v966, 0.5
      %v1039 = vmul.f32 %v969, 0.5
      %v1040 = vmul.f32 %v974, 0.5
      %v1041 = vmul.f32 %v977, 0.5
      %v1042 = vmul.f32 %v982, 0.5
      %v1043 = vmul.f32 %v985, 0.5
      %v1044 = vmul.f32 %v990, 0.5
      %v1045 = vmul.f32 %v993, 0.5
      %v1046 = vmul.f32 %v998, 0.5
      %v1047 = vmul.f32 %v1001, 0.5
      %v1048 = vmul.f32 %v1006, 0.5
      %v1049 = vmul.f32 %v1009, 0.5
      %v1050 = vmul.f32 %v1014, 0.5
      %v1051 = vmul.f32 %v1017, 0.5
      %v1052 = vtanh.pop %v1020
      %v1053 = vtanh.pop %v1021
      %v1054 = vtanh.pop %v1022
      %v1055 = vtanh.pop %v1023
      %v1056 = vtanh.pop %v1024
      %v1057 = vtanh.pop %v1025
      %v1058 = vtanh.pop %v1026
      %v1059 = vtanh.pop %v1027
      %v1060 = vtanh.pop %v1028
      %v1061 = vtanh.pop %v1029
      %v1062 = vtanh.pop %v1030
      %v1063 = vtanh.pop %v1031
      %v1064 = vtanh.pop %v1032
      %v1065 = vtanh.pop %v1033
      %v1066 = vtanh.pop %v1034
      %v1067 = vtanh.pop %v1035
      %v1068 = vtanh.pop %v1036
      %v1069 = vtanh.pop %v1037
      %v1070 = vtanh.pop %v1038
      %v1071 = vtanh.pop %v1039
      %v1072 = vtanh.pop %v1040
      %v1073 = vtanh.pop %v1041
      %v1074 = vtanh.pop %v1042
      %v1075 = vtanh.pop %v1043
      %v1076 = vtanh.pop %v1044
      %v1077 = vtanh.pop %v1045
      %v1078 = vtanh.pop %v1046
      %v1079 = vtanh.pop %v1047
      %v1080 = vtanh.pop %v1048
      %v1081 = vtanh.pop %v1049
      %v1082 = vtanh.pop %v1050
      %v1083 = vtanh.pop %v1051
      %v1084 = vadd.f32 %v1052, 1.0
      %v1085 = vadd.f32 %v1053, 1.0
      %v1086 = vadd.f32 %v1054, 1.0
      %v1087 = vadd.f32 %v1055, 1.0
      %v1088 = vadd.f32 %v1056, 1.0
      %v1089 = vadd.f32 %v1057, 1.0
      %v1090 = vadd.f32 %v1058, 1.0
      %v1091 = vadd.f32 %v1059, 1.0
      %v1092 = vadd.f32 %v1060, 1.0
      %v1093 = vadd.f32 %v1061, 1.0
      %v1094 = vadd.f32 %v1062, 1.0
      %v1095 = vadd.f32 %v1063, 1.0
      %v1096 = vadd.f32 %v1064, 1.0
      %v1097 = vadd.f32 %v1065, 1.0
      %v1098 = vadd.f32 %v1066, 1.0
      %v1099 = vadd.f32 %v1067, 1.0
      %v1100 = vadd.f32 %v1068, 1.0
      %v1101 = vadd.f32 %v1069, 1.0
      %v1102 = vadd.f32 %v1070, 1.0
      %v1103 = vadd.f32 %v1071, 1.0
      %v1104 = vadd.f32 %v1072, 1.0
      %v1105 = vadd.f32 %v1073, 1.0
      %v1106 = vadd.f32 %v1074, 1.0
      %v1107 = vadd.f32 %v1075, 1.0
      %v1108 = vadd.f32 %v1076, 1.0
      %v1109 = vadd.f32 %v1077, 1.0
      %v1110 = vadd.f32 %v1078, 1.0
      %v1111 = vadd.f32 %v1079, 1.0
      %v1112 = vadd.f32 %v1080, 1.0
      %v1113 = vadd.f32 %v1081, 1.0
      %v1114 = vadd.f32 %v1082, 1.0
      %v1115 = vadd.f32 %v1083, 1.0
      %v1116 = vmul.f32 %v1020, %v1084
      %v1117 = vmul.f32 %v1021, %v1085
      %v1118 = vmul.f32 %v1022, %v1086
      %v1119 = vmul.f32 %v1023, %v1087
      %v1120 = vmul.f32 %v1024, %v1088
      %v1121 = vmul.f32 %v1025, %v1089
      %v1122 = vmul.f32 %v1026, %v1090
      %v1123 = vmul.f32 %v1027, %v1091
      %v1124 = vmul.f32 %v1028, %v1092
      %v1125 = vmul.f32 %v1029, %v1093
      %v1126 = vmul.f32 %v1030, %v1094
      %v1127 = vmul.f32 %v1031, %v1095
      %v1128 = vmul.f32 %v1032, %v1096
      %v1129 = vmul.f32 %v1033, %v1097
      %v1130 = vmul.f32 %v1034, %v1098
      %v1131 = vmul.f32 %v1035, %v1099
      %v1132 = vmul.f32 %v1036, %v1100
      %v1133 = vmul.f32 %v1037, %v1101
      %v1134 = vmul.f32 %v1038, %v1102
      %v1135 = vmul.f32 %v1039, %v1103
      %v1136 = vmul.f32 %v1040, %v1104
      %v1137 = vmul.f32 %v1041, %v1105
      %v1138 = vmul.f32 %v1042, %v1106
      %v1139 = vmul.f32 %v1043, %v1107
      %v1140 = vmul.f32 %v1044, %v1108
      %v1141 = vmul.f32 %v1045, %v1109
      %v1142 = vmul.f32 %v1046, %v1110
      %v1143 = vmul.f32 %v1047, %v1111
      %v1144 = vmul.f32 %v1048, %v1112
      %v1145 = vmul.f32 %v1049, %v1113
      %v1146 = vmul.f32 %v1050, %v1114
      %v1147 = vmul.f32 %v1051, %v1115
      %s1148 = scalar_lea.vmem %s2, 2
      %v1149 = vld [vmem:[%s1148] sm:$0x3]
      %v1150 = vpack.c.bf16 %v1117, %v1116
      %v1151 = vpack.c.bf16 %v1119, %v1118
      %v1152 = vpack.c.bf16 %v1121, %v1120
      %v1153 = vpack.c.bf16 %v1123, %v1122
      %v1154 = vpack.c.bf16 %v1125, %v1124
      %v1155 = vpack.c.bf16 %v1127, %v1126
      %v1156 = vpack.c.bf16 %v1129, %v1128
      %v1157 = vpack.c.bf16 %v1131, %v1130
      %v1158 = vpack.c.bf16 %v1133, %v1132
      %v1159 = vpack.c.bf16 %v1135, %v1134
      %v1160 = vpack.c.bf16 %v1137, %v1136
      %v1161 = vpack.c.bf16 %v1139, %v1138
      %v1162 = vpack.c.bf16 %v1141, %v1140
      %v1163 = vpack.c.bf16 %v1143, %v1142
      %v1164 = vpack.c.bf16 %v1145, %v1144
      %v1165 = vpack.c.bf16 %v1147, %v1146
      %v1168 = vunpack.c.l.s4 1966171168
      %v1169 = vunpack.c.0.s8 %v1168
      %v1170 = vlaneseq
      %v1171 = vshrl.u32 %v1170, 7
      %v1172 = vsub.s32 %v1169, %v1171
      %v1173 = vrot.slane %v1149, %v1172
      %v1174 = vcombine.high %v1173, %v1173
      %v1176 = vunpack.c.l.s4 1966171168
      %v1177 = vunpack.c.0.s8 %v1176
      %v1178 = vlaneseq
      %v1179 = vshrl.u32 %v1178, 7
      %v1180 = vsub.s32 %v1177, %v1179
      %v1181 = vrot.slane %v1173, %v1180
      %v1183 = vunpack.c.l.s4 1966171168
      %v1184 = vunpack.c.0.s8 %v1183
      %v1185 = vlaneseq
      %v1186 = vshrl.u32 %v1185, 7
      %v1187 = vsub.s32 %v1184, %v1186
      %v1188 = vrot.slane %v1174, %v1187
      %1191 = vmatprep.subr.bf16.mxu0 0
      %1192 = vmatpush1.bf16.msra.mxu0 %v1157
      %1193 = vmatprep.subr.bf16.mxu0 0
      %1194 = vmatpush1.bf16.msra.mxu0 %v1156
      %1195 = vmatprep.subr.bf16.mxu0 0
      %1196 = vmatpush1.bf16.msra.mxu0 %v1155
      %1197 = vmatprep.subr.bf16.mxu0 0
      %1198 = vmatpush1.bf16.msra.mxu0 %v1154
      %1199 = vmatprep.subr.bf16.mxu0 0
      %1200 = vmatpush1.bf16.msra.mxu0 %v1153
      %1201 = vmatprep.subr.bf16.mxu0 0
      %1202 = vmatpush1.bf16.msra.mxu0 %v1152
      %1203 = vmatprep.subr.bf16.mxu0 0
      %1204 = vmatpush1.bf16.msra.mxu0 %v1151
      %1205 = vmatprep.subr.bf16.mxu0 0
      %1206 = vmatpush1.bf16.msra.mxu0 %v1150
      %1207 = vmatprep.subr.bf16.mxu0 0
      %1208 = vmatpush2.bf16.msra.mxu0 %v1165
      %1209 = vmatprep.subr.bf16.mxu0 0
      %1210 = vmatpush2.bf16.msra.mxu0 %v1164
      %1211 = vmatprep.subr.bf16.mxu0 0
      %1212 = vmatpush2.bf16.msra.mxu0 %v1163
      %1213 = vmatprep.subr.bf16.mxu0 0
      %1214 = vmatpush2.bf16.msra.mxu0 %v1162
      %1215 = vmatprep.subr.bf16.mxu0 0
      %1216 = vmatpush2.bf16.msra.mxu0 %v1161
      %1217 = vmatprep.subr.bf16.mxu0 0
      %1218 = vmatpush2.bf16.msra.mxu0 %v1160
      %1219 = vmatprep.subr.bf16.mxu0 0
      %1220 = vmatpush2.bf16.msra.mxu0 %v1159
      %1221 = vmatprep.subr.bf16.mxu0 0
      %1222 = vmatpush2.bf16.msra.mxu0 %v1158
      %1223 = vmatprep.mubr.bf16.mxu0 %v1188
      %1224 = vmatmul.mubr.bf16.gmra.mxu0 %v1181
      %v1225 = vpop.f32.mrf.mxu0
      %v1226 = vadd.f32 0.0, %v1225
      %v1227 = vpop.f32.mrf.mxu0
      %v1228 = vpop.f32.mrf.mxu0
      %v1229 = vpop.f32.mrf.mxu0
      %1230 = vdwg.mxu0
      %v1233 = vunpack.c.l.s4 1966171168
      %v1234 = vunpack.c.0.s8 %v1233
      %v1235 = vlaneseq
      %v1236 = vshrl.u32 %v1235, 7
      %v1237 = vsub.s32 %v1234, %v1236
      %v1238 = vrot.slane %v681, %v1237
      %v1239 = vcombine.high %v1238, %v1238
      %v1241 = vunpack.c.l.s4 1966171168
      %v1242 = vunpack.c.0.s8 %v1241
      %v1243 = vlaneseq
      %v1244 = vshrl.u32 %v1243, 7
      %v1245 = vsub.s32 %v1242, %v1244
      %v1246 = vrot.slane %v1238, %v1245
      %v1248 = vunpack.c.l.s4 1966171168
      %v1249 = vunpack.c.0.s8 %v1248
      %v1250 = vlaneseq
      %v1251 = vshrl.u32 %v1250, 7
      %v1252 = vsub.s32 %v1249, %v1251
      %v1253 = vrot.slane %v1239, %v1252
      %1256 = vmatprep.subr.bf16.mxu0 0
      %1257 = vmatpush1.bf16.msra.mxu0 %v689
      %1258 = vmatprep.subr.bf16.mxu0 0
      %1259 = vmatpush1.bf16.msra.mxu0 %v688
      %1260 = vmatprep.subr.bf16.mxu0 0
      %1261 = vmatpush1.bf16.msra.mxu0 %v687
      %1262 = vmatprep.subr.bf16.mxu0 0
      %1263 = vmatpush1.bf16.msra.mxu0 %v686
      %1264 = vmatprep.subr.bf16.mxu0 0
      %1265 = vmatpush1.bf16.msra.mxu0 %v685
      %1266 = vmatprep.subr.bf16.mxu0 0
      %1267 = vmatpush1.bf16.msra.mxu0 %v684
      %1268 = vmatprep.subr.bf16.mxu0 0
      %1269 = vmatpush1.bf16.msra.mxu0 %v683
      %1270 = vmatprep.subr.bf16.mxu0 0
      %1271 = vmatpush1.bf16.msra.mxu0 %v682
      %1272 = vmatprep.subr.bf16.mxu0 0
      %1273 = vmatpush2.bf16.msra.mxu0 %v697
      %1274 = vmatprep.subr.bf16.mxu0 0
      %1275 = vmatpush2.bf16.msra.mxu0 %v696
      %1276 = vmatprep.subr.bf16.mxu0 0
      %1277 = vmatpush2.bf16.msra.mxu0 %v695
      %1278 = vmatprep.subr.bf16.mxu0 0
      %1279 = vmatpush2.bf16.msra.mxu0 %v694
      %1280 = vmatprep.subr.bf16.mxu0 0
      %1281 = vmatpush2.bf16.msra.mxu0 %v693
      %1282 = vmatprep.subr.bf16.mxu0 0
      %1283 = vmatpush2.bf16.msra.mxu0 %v692
      %1284 = vmatprep.subr.bf16.mxu0 0
      %1285 = vmatpush2.bf16.msra.mxu0 %v691
      %1286 = vmatprep.subr.bf16.mxu0 0
      %1287 = vmatpush2.bf16.msra.mxu0 %v690
      %1288 = vmatprep.mubr.bf16.mxu0 %v1253
      %1289 = vmatmul.mubr.bf16.gmra.mxu0 %v1246
      %v1290 = vpop.f32.mrf.mxu0
      %v1291 = vadd.f32 %v1226, %v1290
      %v1292 = vpop.f32.mrf.mxu0
      %v1293 = vpop.f32.mrf.mxu0
      %v1294 = vpop.f32.mrf.mxu0
      %1295 = vdwg.mxu0
      %s1296 = scalar_lea.vmem %s1, 256
      %v1297 = vld [vmem:[%s1296] sm:$0xf]
      %v1298 = vld [vmem:[%s1296 + $0x4] sm:$0xf]
      %v1299 = vld [vmem:[%s1296 + $0x8] sm:$0xf]
      %v1300 = vld [vmem:[%s1296 + $0xc] sm:$0xf]
      %v1301 = vld [vmem:[%s1296 + $0x10] sm:$0xf]
      %v1302 = vld [vmem:[%s1296 + $0x14] sm:$0xf]
      %v1303 = vld [vmem:[%s1296 + $0x18] sm:$0xf]
      %v1304 = vld [vmem:[%s1296 + $0x1c] sm:$0xf]
      %v1305 = vld [vmem:[%s1296 + $0x20] sm:$0xf]
      %v1306 = vld [vmem:[%s1296 + $0x24] sm:$0xf]
      %v1307 = vld [vmem:[%s1296 + $0x28] sm:$0xf]
      %v1308 = vld [vmem:[%s1296 + $0x2c] sm:$0xf]
      %v1309 = vld [vmem:[%s1296 + $0x30] sm:$0xf]
      %v1310 = vld [vmem:[%s1296 + $0x34] sm:$0xf]
      %v1311 = vld [vmem:[%s1296 + $0x38] sm:$0xf]
      %v1312 = vld [vmem:[%s1296 + $0x3c] sm:$0xf]
      %v1313 = vld [vmem:[%s1296 + $0x40] sm:$0xf]
      %v1314 = vld [vmem:[%s1296 + $0x44] sm:$0xf]
      %v1315 = vld [vmem:[%s1296 + $0x48] sm:$0xf]
      %v1316 = vld [vmem:[%s1296 + $0x4c] sm:$0xf]
      %v1317 = vld [vmem:[%s1296 + $0x50] sm:$0xf]
      %v1318 = vld [vmem:[%s1296 + $0x54] sm:$0xf]
      %v1319 = vld [vmem:[%s1296 + $0x58] sm:$0xf]
      %v1320 = vld [vmem:[%s1296 + $0x5c] sm:$0xf]
      %v1321 = vld [vmem:[%s1296 + $0x60] sm:$0xf]
      %v1322 = vld [vmem:[%s1296 + $0x64] sm:$0xf]
      %v1323 = vld [vmem:[%s1296 + $0x68] sm:$0xf]
      %v1324 = vld [vmem:[%s1296 + $0x6c] sm:$0xf]
      %v1325 = vld [vmem:[%s1296 + $0x70] sm:$0xf]
      %v1326 = vld [vmem:[%s1296 + $0x74] sm:$0xf]
      %v1327 = vld [vmem:[%s1296 + $0x78] sm:$0xf]
      %v1328 = vld [vmem:[%s1296 + $0x7c] sm:$0xf]
      %v1361 = vunpack.c.l.b16 %v1297
      %v1362 = vunpack.c.l.b16 %v1298
      %v1363 = vunpack.c.l.b16 %v1299
      %v1364 = vunpack.c.l.b16 %v1300
      %v1365 = vunpack.c.l.b16 %v1301
      %v1366 = vunpack.c.l.b16 %v1302
      %v1367 = vunpack.c.l.b16 %v1303
      %v1368 = vunpack.c.l.b16 %v1304
      %v1369 = vunpack.c.l.b16 %v1305
      %v1370 = vunpack.c.l.b16 %v1306
      %v1371 = vunpack.c.l.b16 %v1307
      %v1372 = vunpack.c.l.b16 %v1308
      %v1373 = vunpack.c.l.b16 %v1309
      %v1374 = vunpack.c.l.b16 %v1310
      %v1375 = vunpack.c.l.b16 %v1311
      %v1376 = vunpack.c.l.b16 %v1312
      %v1377 = vunpack.c.l.b16 %v1313
      %v1378 = vunpack.c.l.b16 %v1314
      %v1379 = vunpack.c.l.b16 %v1315
      %v1380 = vunpack.c.l.b16 %v1316
      %v1381 = vunpack.c.l.b16 %v1317
      %v1382 = vunpack.c.l.b16 %v1318
      %v1383 = vunpack.c.l.b16 %v1319
      %v1384 = vunpack.c.l.b16 %v1320
      %v1385 = vunpack.c.l.b16 %v1321
      %v1386 = vunpack.c.l.b16 %v1322
      %v1387 = vunpack.c.l.b16 %v1323
      %v1388 = vunpack.c.l.b16 %v1324
      %v1389 = vunpack.c.l.b16 %v1325
      %v1390 = vunpack.c.l.b16 %v1326
      %v1391 = vunpack.c.l.b16 %v1327
      %v1392 = vunpack.c.l.b16 %v1328
      %v1393 = vpack.c.b16 %v1362, %v1361
      %v1394 = vpack.c.b16 %v1364, %v1363
      %v1395 = vpack.c.b16 %v1366, %v1365
      %v1396 = vpack.c.b16 %v1368, %v1367
      %v1397 = vpack.c.b16 %v1370, %v1369
      %v1398 = vpack.c.b16 %v1372, %v1371
      %v1399 = vpack.c.b16 %v1374, %v1373
      %v1400 = vpack.c.b16 %v1376, %v1375
      %v1401 = vpack.c.b16 %v1378, %v1377
      %v1402 = vpack.c.b16 %v1380, %v1379
      %v1403 = vpack.c.b16 %v1382, %v1381
      %v1404 = vpack.c.b16 %v1384, %v1383
      %v1405 = vpack.c.b16 %v1386, %v1385
      %v1406 = vpack.c.b16 %v1388, %v1387
      %v1407 = vpack.c.b16 %v1390, %v1389
      %v1408 = vpack.c.b16 %v1392, %v1391
      %v1410 = vsel %vm336, %v1393, 0
      %v1413 = vsel %vm336, %v1394, 0
      %v1416 = vsel %vm336, %v1395, 0
      %v1419 = vsel %vm336, %v1396, 0
      %v1422 = vsel %vm336, %v1397, 0
      %v1425 = vsel %vm336, %v1398, 0
      %v1428 = vsel %vm336, %v1399, 0
      %v1431 = vsel %vm336, %v1400, 0
      %v1434 = vsel %vm336, %v1401, 0
      %v1437 = vsel %vm336, %v1402, 0
      %v1440 = vsel %vm336, %v1403, 0
      %v1443 = vsel %vm336, %v1404, 0
      %v1446 = vsel %vm336, %v1405, 0
      %v1449 = vsel %vm336, %v1406, 0
      %v1452 = vsel %vm336, %v1407, 0
      %v1455 = vsel %vm336, %v1408, 0
      %1457 = vmatprep.subr.bf16.mxu0 0
      %1458 = vmatpush1.bf16.msra.mxu0 0
      %1459 = vmatprep.subr.bf16.mxu0 0
      %1460 = vmatpush1.bf16.msra.mxu0 0
      %1461 = vmatprep.subr.bf16.mxu0 0
      %1462 = vmatpush1.bf16.msra.mxu0 0
      %1463 = vmatprep.subr.bf16.mxu0 0
      %1464 = vmatpush1.bf16.msra.mxu0 0
      %1465 = vmatprep.subr.bf16.mxu0 0
      %1466 = vmatpush1.bf16.msra.mxu0 0
      %1467 = vmatprep.subr.bf16.mxu0 0
      %1468 = vmatpush1.bf16.msra.mxu0 0
      %1469 = vmatprep.subr.bf16.mxu0 0
      %1470 = vmatpush1.bf16.msra.mxu0 0
      %1471 = vmatprep.subr.bf16.mxu0 0
      %1472 = vmatpush1.bf16.msra.mxu0 %v390
      %1473 = vmatprep.subr.bf16.mxu0 0
      %1474 = vmatpush2.bf16.msra.mxu0 0
      %1475 = vmatprep.subr.bf16.mxu0 0
      %1476 = vmatpush2.bf16.msra.mxu0 0
      %1477 = vmatprep.subr.bf16.mxu0 0
      %1478 = vmatpush2.bf16.msra.mxu0 0
      %1479 = vmatprep.subr.bf16.mxu0 0
      %1480 = vmatpush2.bf16.msra.mxu0 0
      %1481 = vmatprep.subr.bf16.mxu0 0
      %1482 = vmatpush2.bf16.msra.mxu0 0
      %1483 = vmatprep.subr.bf16.mxu0 0
      %1484 = vmatpush2.bf16.msra.mxu0 0
      %1485 = vmatprep.subr.bf16.mxu0 0
      %1486 = vmatpush2.bf16.msra.mxu0 0
      %1487 = vmatprep.subr.bf16.mxu0 0
      %1488 = vmatpush2.bf16.msra.mxu0 0
      %1489 = vmatprep.mubr.bf16.mxu0 0
      %1490 = vmatmul.mubr.bf16.gmra.mxu0 %v1410
      %v1491 = vpop.f32.mrf.mxu0
      %v1492 = vadd.f32 0.0, %v1491
      %v1493 = vpop.f32.mrf.mxu0
      %v1494 = vpop.f32.mrf.mxu0
      %v1495 = vadd.f32 0.0, %v1494
      %v1496 = vpop.f32.mrf.mxu0
      %1497 = vmatprep.mubr.bf16.mxu0 0
      %1498 = vmatmul.mubr.bf16.gmra.mxu0 %v1413
      %v1499 = vpop.f32.mrf.mxu0
      %v1500 = vadd.f32 0.0, %v1499
      %v1501 = vpop.f32.mrf.mxu0
      %v1502 = vpop.f32.mrf.mxu0
      %v1503 = vadd.f32 0.0, %v1502
      %v1504 = vpop.f32.mrf.mxu0
      %1505 = vmatprep.mubr.bf16.mxu0 0
      %1506 = vmatmul.mubr.bf16.gmra.mxu0 %v1416
      %v1507 = vpop.f32.mrf.mxu0
      %v1508 = vadd.f32 0.0, %v1507
      %v1509 = vpop.f32.mrf.mxu0
      %v1510 = vpop.f32.mrf.mxu0
      %v1511 = vadd.f32 0.0, %v1510
      %v1512 = vpop.f32.mrf.mxu0
      %1513 = vmatprep.mubr.bf16.mxu0 0
      %1514 = vmatmul.mubr.bf16.gmra.mxu0 %v1419
      %v1515 = vpop.f32.mrf.mxu0
      %v1516 = vadd.f32 0.0, %v1515
      %v1517 = vpop.f32.mrf.mxu0
      %v1518 = vpop.f32.mrf.mxu0
      %v1519 = vadd.f32 0.0, %v1518
      %v1520 = vpop.f32.mrf.mxu0
      %1521 = vmatprep.mubr.bf16.mxu0 0
      %1522 = vmatmul.mubr.bf16.gmra.mxu0 %v1422
      %v1523 = vpop.f32.mrf.mxu0
      %v1524 = vadd.f32 0.0, %v1523
      %v1525 = vpop.f32.mrf.mxu0
      %v1526 = vpop.f32.mrf.mxu0
      %v1527 = vadd.f32 0.0, %v1526
      %v1528 = vpop.f32.mrf.mxu0
      %1529 = vmatprep.mubr.bf16.mxu0 0
      %1530 = vmatmul.mubr.bf16.gmra.mxu0 %v1425
      %v1531 = vpop.f32.mrf.mxu0
      %v1532 = vadd.f32 0.0, %v1531
      %v1533 = vpop.f32.mrf.mxu0
      %v1534 = vpop.f32.mrf.mxu0
      %v1535 = vadd.f32 0.0, %v1534
      %v1536 = vpop.f32.mrf.mxu0
      %1537 = vmatprep.mubr.bf16.mxu0 0
      %1538 = vmatmul.mubr.bf16.gmra.mxu0 %v1428
      %v1539 = vpop.f32.mrf.mxu0
      %v1540 = vadd.f32 0.0, %v1539
      %v1541 = vpop.f32.mrf.mxu0
      %v1542 = vpop.f32.mrf.mxu0
      %v1543 = vadd.f32 0.0, %v1542
      %v1544 = vpop.f32.mrf.mxu0
      %1545 = vmatprep.mubr.bf16.mxu0 0
      %1546 = vmatmul.mubr.bf16.gmra.mxu0 %v1431
      %v1547 = vpop.f32.mrf.mxu0
      %v1548 = vadd.f32 0.0, %v1547
      %v1549 = vpop.f32.mrf.mxu0
      %v1550 = vpop.f32.mrf.mxu0
      %v1551 = vadd.f32 0.0, %v1550
      %v1552 = vpop.f32.mrf.mxu0
      %1553 = vmatprep.mubr.bf16.mxu0 0
      %1554 = vmatmul.mubr.bf16.gmra.mxu0 %v1434
      %v1555 = vpop.f32.mrf.mxu0
      %v1556 = vadd.f32 0.0, %v1555
      %v1557 = vpop.f32.mrf.mxu0
      %v1558 = vpop.f32.mrf.mxu0
      %v1559 = vadd.f32 0.0, %v1558
      %v1560 = vpop.f32.mrf.mxu0
      %1561 = vmatprep.mubr.bf16.mxu0 0
      %1562 = vmatmul.mubr.bf16.gmra.mxu0 %v1437
      %v1563 = vpop.f32.mrf.mxu0
      %v1564 = vadd.f32 0.0, %v1563
      %v1565 = vpop.f32.mrf.mxu0
      %v1566 = vpop.f32.mrf.mxu0
      %v1567 = vadd.f32 0.0, %v1566
      %v1568 = vpop.f32.mrf.mxu0
      %1569 = vmatprep.mubr.bf16.mxu0 0
      %1570 = vmatmul.mubr.bf16.gmra.mxu0 %v1440
      %v1571 = vpop.f32.mrf.mxu0
      %v1572 = vadd.f32 0.0, %v1571
      %v1573 = vpop.f32.mrf.mxu0
      %v1574 = vpop.f32.mrf.mxu0
      %v1575 = vadd.f32 0.0, %v1574
      %v1576 = vpop.f32.mrf.mxu0
      %1577 = vmatprep.mubr.bf16.mxu0 0
      %1578 = vmatmul.mubr.bf16.gmra.mxu0 %v1443
      %v1579 = vpop.f32.mrf.mxu0
      %v1580 = vadd.f32 0.0, %v1579
      %v1581 = vpop.f32.mrf.mxu0
      %v1582 = vpop.f32.mrf.mxu0
      %v1583 = vadd.f32 0.0, %v1582
      %v1584 = vpop.f32.mrf.mxu0
      %1585 = vmatprep.mubr.bf16.mxu0 0
      %1586 = vmatmul.mubr.bf16.gmra.mxu0 %v1446
      %v1587 = vpop.f32.mrf.mxu0
      %v1588 = vadd.f32 0.0, %v1587
      %v1589 = vpop.f32.mrf.mxu0
      %v1590 = vpop.f32.mrf.mxu0
      %v1591 = vadd.f32 0.0, %v1590
      %v1592 = vpop.f32.mrf.mxu0
      %1593 = vmatprep.mubr.bf16.mxu0 0
      %1594 = vmatmul.mubr.bf16.gmra.mxu0 %v1449
      %v1595 = vpop.f32.mrf.mxu0
      %v1596 = vadd.f32 0.0, %v1595
      %v1597 = vpop.f32.mrf.mxu0
      %v1598 = vpop.f32.mrf.mxu0
      %v1599 = vadd.f32 0.0, %v1598
      %v1600 = vpop.f32.mrf.mxu0
      %1601 = vmatprep.mubr.bf16.mxu0 0
      %1602 = vmatmul.mubr.bf16.gmra.mxu0 %v1452
      %v1603 = vpop.f32.mrf.mxu0
      %v1604 = vadd.f32 0.0, %v1603
      %v1605 = vpop.f32.mrf.mxu0
      %v1606 = vpop.f32.mrf.mxu0
      %v1607 = vadd.f32 0.0, %v1606
      %v1608 = vpop.f32.mrf.mxu0
      %1609 = vmatprep.mubr.bf16.mxu0 0
      %1610 = vmatmul.mubr.bf16.gmra.mxu0 %v1455
      %v1611 = vpop.f32.mrf.mxu0
      %v1612 = vadd.f32 0.0, %v1611
      %v1613 = vpop.f32.mrf.mxu0
      %v1614 = vpop.f32.mrf.mxu0
      %v1615 = vadd.f32 0.0, %v1614
      %v1616 = vpop.f32.mrf.mxu0
      %1617 = vdwg.mxu0
      %v1618 = vmul.f32 %v1492, 0.5
      %v1619 = vmul.f32 %v1495, 0.5
      %v1620 = vmul.f32 %v1500, 0.5
      %v1621 = vmul.f32 %v1503, 0.5
      %v1622 = vmul.f32 %v1508, 0.5
      %v1623 = vmul.f32 %v1511, 0.5
      %v1624 = vmul.f32 %v1516, 0.5
      %v1625 = vmul.f32 %v1519, 0.5
      %v1626 = vmul.f32 %v1524, 0.5
      %v1627 = vmul.f32 %v1527, 0.5
      %v1628 = vmul.f32 %v1532, 0.5
      %v1629 = vmul.f32 %v1535, 0.5
      %v1630 = vmul.f32 %v1540, 0.5
      %v1631 = vmul.f32 %v1543, 0.5
      %v1632 = vmul.f32 %v1548, 0.5
      %v1633 = vmul.f32 %v1551, 0.5
      %v1634 = vmul.f32 %v1556, 0.5
      %v1635 = vmul.f32 %v1559, 0.5
      %v1636 = vmul.f32 %v1564, 0.5
      %v1637 = vmul.f32 %v1567, 0.5
      %v1638 = vmul.f32 %v1572, 0.5
      %v1639 = vmul.f32 %v1575, 0.5
      %v1640 = vmul.f32 %v1580, 0.5
      %v1641 = vmul.f32 %v1583, 0.5
      %v1642 = vmul.f32 %v1588, 0.5
      %v1643 = vmul.f32 %v1591, 0.5
      %v1644 = vmul.f32 %v1596, 0.5
      %v1645 = vmul.f32 %v1599, 0.5
      %v1646 = vmul.f32 %v1604, 0.5
      %v1647 = vmul.f32 %v1607, 0.5
      %v1648 = vmul.f32 %v1612, 0.5
      %v1649 = vmul.f32 %v1615, 0.5
      %v1650 = vtanh.pop %v1618
      %v1651 = vtanh.pop %v1619
      %v1652 = vtanh.pop %v1620
      %v1653 = vtanh.pop %v1621
      %v1654 = vtanh.pop %v1622
      %v1655 = vtanh.pop %v1623
      %v1656 = vtanh.pop %v1624
      %v1657 = vtanh.pop %v1625
      %v1658 = vtanh.pop %v1626
      %v1659 = vtanh.pop %v1627
      %v1660 = vtanh.pop %v1628
      %v1661 = vtanh.pop %v1629
      %v1662 = vtanh.pop %v1630
      %v1663 = vtanh.pop %v1631
      %v1664 = vtanh.pop %v1632
      %v1665 = vtanh.pop %v1633
      %v1666 = vtanh.pop %v1634
      %v1667 = vtanh.pop %v1635
      %v1668 = vtanh.pop %v1636
      %v1669 = vtanh.pop %v1637
      %v1670 = vtanh.pop %v1638
      %v1671 = vtanh.pop %v1639
      %v1672 = vtanh.pop %v1640
      %v1673 = vtanh.pop %v1641
      %v1674 = vtanh.pop %v1642
      %v1675 = vtanh.pop %v1643
      %v1676 = vtanh.pop %v1644
      %v1677 = vtanh.pop %v1645
      %v1678 = vtanh.pop %v1646
      %v1679 = vtanh.pop %v1647
      %v1680 = vtanh.pop %v1648
      %v1681 = vtanh.pop %v1649
      %v1682 = vadd.f32 %v1650, 1.0
      %v1683 = vadd.f32 %v1651, 1.0
      %v1684 = vadd.f32 %v1652, 1.0
      %v1685 = vadd.f32 %v1653, 1.0
      %v1686 = vadd.f32 %v1654, 1.0
      %v1687 = vadd.f32 %v1655, 1.0
      %v1688 = vadd.f32 %v1656, 1.0
      %v1689 = vadd.f32 %v1657, 1.0
      %v1690 = vadd.f32 %v1658, 1.0
      %v1691 = vadd.f32 %v1659, 1.0
      %v1692 = vadd.f32 %v1660, 1.0
      %v1693 = vadd.f32 %v1661, 1.0
      %v1694 = vadd.f32 %v1662, 1.0
      %v1695 = vadd.f32 %v1663, 1.0
      %v1696 = vadd.f32 %v1664, 1.0
      %v1697 = vadd.f32 %v1665, 1.0
      %v1698 = vadd.f32 %v1666, 1.0
      %v1699 = vadd.f32 %v1667, 1.0
      %v1700 = vadd.f32 %v1668, 1.0
      %v1701 = vadd.f32 %v1669, 1.0
      %v1702 = vadd.f32 %v1670, 1.0
      %v1703 = vadd.f32 %v1671, 1.0
      %v1704 = vadd.f32 %v1672, 1.0
      %v1705 = vadd.f32 %v1673, 1.0
      %v1706 = vadd.f32 %v1674, 1.0
      %v1707 = vadd.f32 %v1675, 1.0
      %v1708 = vadd.f32 %v1676, 1.0
      %v1709 = vadd.f32 %v1677, 1.0
      %v1710 = vadd.f32 %v1678, 1.0
      %v1711 = vadd.f32 %v1679, 1.0
      %v1712 = vadd.f32 %v1680, 1.0
      %v1713 = vadd.f32 %v1681, 1.0
      %v1714 = vmul.f32 %v1618, %v1682
      %v1715 = vmul.f32 %v1619, %v1683
      %v1716 = vmul.f32 %v1620, %v1684
      %v1717 = vmul.f32 %v1621, %v1685
      %v1718 = vmul.f32 %v1622, %v1686
      %v1719 = vmul.f32 %v1623, %v1687
      %v1720 = vmul.f32 %v1624, %v1688
      %v1721 = vmul.f32 %v1625, %v1689
      %v1722 = vmul.f32 %v1626, %v1690
      %v1723 = vmul.f32 %v1627, %v1691
      %v1724 = vmul.f32 %v1628, %v1692
      %v1725 = vmul.f32 %v1629, %v1693
      %v1726 = vmul.f32 %v1630, %v1694
      %v1727 = vmul.f32 %v1631, %v1695
      %v1728 = vmul.f32 %v1632, %v1696
      %v1729 = vmul.f32 %v1633, %v1697
      %v1730 = vmul.f32 %v1634, %v1698
      %v1731 = vmul.f32 %v1635, %v1699
      %v1732 = vmul.f32 %v1636, %v1700
      %v1733 = vmul.f32 %v1637, %v1701
      %v1734 = vmul.f32 %v1638, %v1702
      %v1735 = vmul.f32 %v1639, %v1703
      %v1736 = vmul.f32 %v1640, %v1704
      %v1737 = vmul.f32 %v1641, %v1705
      %v1738 = vmul.f32 %v1642, %v1706
      %v1739 = vmul.f32 %v1643, %v1707
      %v1740 = vmul.f32 %v1644, %v1708
      %v1741 = vmul.f32 %v1645, %v1709
      %v1742 = vmul.f32 %v1646, %v1710
      %v1743 = vmul.f32 %v1647, %v1711
      %v1744 = vmul.f32 %v1648, %v1712
      %v1745 = vmul.f32 %v1649, %v1713
      %s1746 = scalar_lea.vmem %s2, 4
      %v1747 = vld [vmem:[%s1746] sm:$0x3]
      %v1748 = vpack.c.bf16 %v1715, %v1714
      %v1749 = vpack.c.bf16 %v1717, %v1716
      %v1750 = vpack.c.bf16 %v1719, %v1718
      %v1751 = vpack.c.bf16 %v1721, %v1720
      %v1752 = vpack.c.bf16 %v1723, %v1722
      %v1753 = vpack.c.bf16 %v1725, %v1724
      %v1754 = vpack.c.bf16 %v1727, %v1726
      %v1755 = vpack.c.bf16 %v1729, %v1728
      %v1756 = vpack.c.bf16 %v1731, %v1730
      %v1757 = vpack.c.bf16 %v1733, %v1732
      %v1758 = vpack.c.bf16 %v1735, %v1734
      %v1759 = vpack.c.bf16 %v1737, %v1736
      %v1760 = vpack.c.bf16 %v1739, %v1738
      %v1761 = vpack.c.bf16 %v1741, %v1740
      %v1762 = vpack.c.bf16 %v1743, %v1742
      %v1763 = vpack.c.bf16 %v1745, %v1744
      %v1766 = vunpack.c.l.s4 1966171168
      %v1767 = vunpack.c.0.s8 %v1766
      %v1768 = vlaneseq
      %v1769 = vshrl.u32 %v1768, 7
      %v1770 = vsub.s32 %v1767, %v1769
      %v1771 = vrot.slane %v1747, %v1770
      %v1772 = vcombine.high %v1771, %v1771
      %v1774 = vunpack.c.l.s4 1966171168
      %v1775 = vunpack.c.0.s8 %v1774
      %v1776 = vlaneseq
      %v1777 = vshrl.u32 %v1776, 7
      %v1778 = vsub.s32 %v1775, %v1777
      %v1779 = vrot.slane %v1771, %v1778
      %v1781 = vunpack.c.l.s4 1966171168
      %v1782 = vunpack.c.0.s8 %v1781
      %v1783 = vlaneseq
      %v1784 = vshrl.u32 %v1783, 7
      %v1785 = vsub.s32 %v1782, %v1784
      %v1786 = vrot.slane %v1772, %v1785
      %1789 = vmatprep.subr.bf16.mxu0 0
      %1790 = vmatpush1.bf16.msra.mxu0 %v1755
      %1791 = vmatprep.subr.bf16.mxu0 0
      %1792 = vmatpush1.bf16.msra.mxu0 %v1754
      %1793 = vmatprep.subr.bf16.mxu0 0
      %1794 = vmatpush1.bf16.msra.mxu0 %v1753
      %1795 = vmatprep.subr.bf16.mxu0 0
      %1796 = vmatpush1.bf16.msra.mxu0 %v1752
      %1797 = vmatprep.subr.bf16.mxu0 0
      %1798 = vmatpush1.bf16.msra.mxu0 %v1751
      %1799 = vmatprep.subr.bf16.mxu0 0
      %1800 = vmatpush1.bf16.msra.mxu0 %v1750
      %1801 = vmatprep.subr.bf16.mxu0 0
      %1802 = vmatpush1.bf16.msra.mxu0 %v1749
      %1803 = vmatprep.subr.bf16.mxu0 0
      %1804 = vmatpush1.bf16.msra.mxu0 %v1748
      %1805 = vmatprep.subr.bf16.mxu0 0
      %1806 = vmatpush2.bf16.msra.mxu0 %v1763
      %1807 = vmatprep.subr.bf16.mxu0 0
      %1808 = vmatpush2.bf16.msra.mxu0 %v1762
      %1809 = vmatprep.subr.bf16.mxu0 0
      %1810 = vmatpush2.bf16.msra.mxu0 %v1761
      %1811 = vmatprep.subr.bf16.mxu0 0
      %1812 = vmatpush2.bf16.msra.mxu0 %v1760
      %1813 = vmatprep.subr.bf16.mxu0 0
      %1814 = vmatpush2.bf16.msra.mxu0 %v1759
      %1815 = vmatprep.subr.bf16.mxu0 0
      %1816 = vmatpush2.bf16.msra.mxu0 %v1758
      %1817 = vmatprep.subr.bf16.mxu0 0
      %1818 = vmatpush2.bf16.msra.mxu0 %v1757
      %1819 = vmatprep.subr.bf16.mxu0 0
      %1820 = vmatpush2.bf16.msra.mxu0 %v1756
      %1821 = vmatprep.mubr.bf16.mxu0 %v1786
      %1822 = vmatmul.mubr.bf16.gmra.mxu0 %v1779
      %v1823 = vpop.f32.mrf.mxu0
      %v1824 = vadd.f32 0.0, %v1823
      %v1825 = vpop.f32.mrf.mxu0
      %v1826 = vpop.f32.mrf.mxu0
      %v1827 = vpop.f32.mrf.mxu0
      %1828 = vdwg.mxu0
      %v1829 = vadd.f32 %v1291, %v1824
      %s1830 = scalar_lea.vmem %s1, 384
      %v1831 = vld [vmem:[%s1830] sm:$0xf]
      %v1832 = vld [vmem:[%s1830 + $0x4] sm:$0xf]
      %v1833 = vld [vmem:[%s1830 + $0x8] sm:$0xf]
      %v1834 = vld [vmem:[%s1830 + $0xc] sm:$0xf]
      %v1835 = vld [vmem:[%s1830 + $0x10] sm:$0xf]
      %v1836 = vld [vmem:[%s1830 + $0x14] sm:$0xf]
      %v1837 = vld [vmem:[%s1830 + $0x18] sm:$0xf]
      %v1838 = vld [vmem:[%s1830 + $0x1c] sm:$0xf]
      %v1839 = vld [vmem:[%s1830 + $0x20] sm:$0xf]
      %v1840 = vld [vmem:[%s1830 + $0x24] sm:$0xf]
      %v1841 = vld [vmem:[%s1830 + $0x28] sm:$0xf]
      %v1842 = vld [vmem:[%s1830 + $0x2c] sm:$0xf]
      %v1843 = vld [vmem:[%s1830 + $0x30] sm:$0xf]
      %v1844 = vld [vmem:[%s1830 + $0x34] sm:$0xf]
      %v1845 = vld [vmem:[%s1830 + $0x38] sm:$0xf]
      %v1846 = vld [vmem:[%s1830 + $0x3c] sm:$0xf]
      %v1847 = vld [vmem:[%s1830 + $0x40] sm:$0xf]
      %v1848 = vld [vmem:[%s1830 + $0x44] sm:$0xf]
      %v1849 = vld [vmem:[%s1830 + $0x48] sm:$0xf]
      %v1850 = vld [vmem:[%s1830 + $0x4c] sm:$0xf]
      %v1851 = vld [vmem:[%s1830 + $0x50] sm:$0xf]
      %v1852 = vld [vmem:[%s1830 + $0x54] sm:$0xf]
      %v1853 = vld [vmem:[%s1830 + $0x58] sm:$0xf]
      %v1854 = vld [vmem:[%s1830 + $0x5c] sm:$0xf]
      %v1855 = vld [vmem:[%s1830 + $0x60] sm:$0xf]
      %v1856 = vld [vmem:[%s1830 + $0x64] sm:$0xf]
      %v1857 = vld [vmem:[%s1830 + $0x68] sm:$0xf]
      %v1858 = vld [vmem:[%s1830 + $0x6c] sm:$0xf]
      %v1859 = vld [vmem:[%s1830 + $0x70] sm:$0xf]
      %v1860 = vld [vmem:[%s1830 + $0x74] sm:$0xf]
      %v1861 = vld [vmem:[%s1830 + $0x78] sm:$0xf]
      %v1862 = vld [vmem:[%s1830 + $0x7c] sm:$0xf]
      %v1895 = vunpack.c.l.b16 %v1831
      %v1896 = vunpack.c.l.b16 %v1832
      %v1897 = vunpack.c.l.b16 %v1833
      %v1898 = vunpack.c.l.b16 %v1834
      %v1899 = vunpack.c.l.b16 %v1835
      %v1900 = vunpack.c.l.b16 %v1836
      %v1901 = vunpack.c.l.b16 %v1837
      %v1902 = vunpack.c.l.b16 %v1838
      %v1903 = vunpack.c.l.b16 %v1839
      %v1904 = vunpack.c.l.b16 %v1840
      %v1905 = vunpack.c.l.b16 %v1841
      %v1906 = vunpack.c.l.b16 %v1842
      %v1907 = vunpack.c.l.b16 %v1843
      %v1908 = vunpack.c.l.b16 %v1844
      %v1909 = vunpack.c.l.b16 %v1845
      %v1910 = vunpack.c.l.b16 %v1846
      %v1911 = vunpack.c.l.b16 %v1847
      %v1912 = vunpack.c.l.b16 %v1848
      %v1913 = vunpack.c.l.b16 %v1849
      %v1914 = vunpack.c.l.b16 %v1850
      %v1915 = vunpack.c.l.b16 %v1851
      %v1916 = vunpack.c.l.b16 %v1852
      %v1917 = vunpack.c.l.b16 %v1853
      %v1918 = vunpack.c.l.b16 %v1854
      %v1919 = vunpack.c.l.b16 %v1855
      %v1920 = vunpack.c.l.b16 %v1856
      %v1921 = vunpack.c.l.b16 %v1857
      %v1922 = vunpack.c.l.b16 %v1858
      %v1923 = vunpack.c.l.b16 %v1859
      %v1924 = vunpack.c.l.b16 %v1860
      %v1925 = vunpack.c.l.b16 %v1861
      %v1926 = vunpack.c.l.b16 %v1862
      %v1927 = vpack.c.b16 %v1896, %v1895
      %v1928 = vpack.c.b16 %v1898, %v1897
      %v1929 = vpack.c.b16 %v1900, %v1899
      %v1930 = vpack.c.b16 %v1902, %v1901
      %v1931 = vpack.c.b16 %v1904, %v1903
      %v1932 = vpack.c.b16 %v1906, %v1905
      %v1933 = vpack.c.b16 %v1908, %v1907
      %v1934 = vpack.c.b16 %v1910, %v1909
      %v1935 = vpack.c.b16 %v1912, %v1911
      %v1936 = vpack.c.b16 %v1914, %v1913
      %v1937 = vpack.c.b16 %v1916, %v1915
      %v1938 = vpack.c.b16 %v1918, %v1917
      %v1939 = vpack.c.b16 %v1920, %v1919
      %v1940 = vpack.c.b16 %v1922, %v1921
      %v1941 = vpack.c.b16 %v1924, %v1923
      %v1942 = vpack.c.b16 %v1926, %v1925
      %v1944 = vsel %vm336, %v1927, 0
      %v1947 = vsel %vm336, %v1928, 0
      %v1950 = vsel %vm336, %v1929, 0
      %v1953 = vsel %vm336, %v1930, 0
      %v1956 = vsel %vm336, %v1931, 0
      %v1959 = vsel %vm336, %v1932, 0
      %v1962 = vsel %vm336, %v1933, 0
      %v1965 = vsel %vm336, %v1934, 0
      %v1968 = vsel %vm336, %v1935, 0
      %v1971 = vsel %vm336, %v1936, 0
      %v1974 = vsel %vm336, %v1937, 0
      %v1977 = vsel %vm336, %v1938, 0
      %v1980 = vsel %vm336, %v1939, 0
      %v1983 = vsel %vm336, %v1940, 0
      %v1986 = vsel %vm336, %v1941, 0
      %v1989 = vsel %vm336, %v1942, 0
      %1991 = vmatprep.subr.bf16.mxu0 0
      %1992 = vmatpush1.bf16.msra.mxu0 0
      %1993 = vmatprep.subr.bf16.mxu0 0
      %1994 = vmatpush1.bf16.msra.mxu0 0
      %1995 = vmatprep.subr.bf16.mxu0 0
      %1996 = vmatpush1.bf16.msra.mxu0 0
      %1997 = vmatprep.subr.bf16.mxu0 0
      %1998 = vmatpush1.bf16.msra.mxu0 0
      %1999 = vmatprep.subr.bf16.mxu0 0
      %2000 = vmatpush1.bf16.msra.mxu0 0
      %2001 = vmatprep.subr.bf16.mxu0 0
      %2002 = vmatpush1.bf16.msra.mxu0 0
      %2003 = vmatprep.subr.bf16.mxu0 0
      %2004 = vmatpush1.bf16.msra.mxu0 0
      %2005 = vmatprep.subr.bf16.mxu0 0
      %2006 = vmatpush1.bf16.msra.mxu0 %v390
      %2007 = vmatprep.subr.bf16.mxu0 0
      %2008 = vmatpush2.bf16.msra.mxu0 0
      %2009 = vmatprep.subr.bf16.mxu0 0
      %2010 = vmatpush2.bf16.msra.mxu0 0
      %2011 = vmatprep.subr.bf16.mxu0 0
      %2012 = vmatpush2.bf16.msra.mxu0 0
      %2013 = vmatprep.subr.bf16.mxu0 0
      %2014 = vmatpush2.bf16.msra.mxu0 0
      %2015 = vmatprep.subr.bf16.mxu0 0
      %2016 = vmatpush2.bf16.msra.mxu0 0
      %2017 = vmatprep.subr.bf16.mxu0 0
      %2018 = vmatpush2.bf16.msra.mxu0 0
      %2019 = vmatprep.subr.bf16.mxu0 0
      %2020 = vmatpush2.bf16.msra.mxu0 0
      %2021 = vmatprep.subr.bf16.mxu0 0
      %2022 = vmatpush2.bf16.msra.mxu0 0
      %2023 = vmatprep.mubr.bf16.mxu0 0
      %2024 = vmatmul.mubr.bf16.gmra.mxu0 %v1944
      %v2025 = vpop.f32.mrf.mxu0
      %v2026 = vadd.f32 0.0, %v2025
      %v2027 = vpop.f32.mrf.mxu0
      %v2028 = vpop.f32.mrf.mxu0
      %v2029 = vadd.f32 0.0, %v2028
      %v2030 = vpop.f32.mrf.mxu0
      %2031 = vmatprep.mubr.bf16.mxu0 0
      %2032 = vmatmul.mubr.bf16.gmra.mxu0 %v1947
      %v2033 = vpop.f32.mrf.mxu0
      %v2034 = vadd.f32 0.0, %v2033
      %v2035 = vpop.f32.mrf.mxu0
      %v2036 = vpop.f32.mrf.mxu0
      %v2037 = vadd.f32 0.0, %v2036
      %v2038 = vpop.f32.mrf.mxu0
      %2039 = vmatprep.mubr.bf16.mxu0 0
      %2040 = vmatmul.mubr.bf16.gmra.mxu0 %v1950
      %v2041 = vpop.f32.mrf.mxu0
      %v2042 = vadd.f32 0.0, %v2041
      %v2043 = vpop.f32.mrf.mxu0
      %v2044 = vpop.f32.mrf.mxu0
      %v2045 = vadd.f32 0.0, %v2044
      %v2046 = vpop.f32.mrf.mxu0
      %2047 = vmatprep.mubr.bf16.mxu0 0
      %2048 = vmatmul.mubr.bf16.gmra.mxu0 %v1953
      %v2049 = vpop.f32.mrf.mxu0
      %v2050 = vadd.f32 0.0, %v2049
      %v2051 = vpop.f32.mrf.mxu0
      %v2052 = vpop.f32.mrf.mxu0
      %v2053 = vadd.f32 0.0, %v2052
      %v2054 = vpop.f32.mrf.mxu0
      %2055 = vmatprep.mubr.bf16.mxu0 0
      %2056 = vmatmul.mubr.bf16.gmra.mxu0 %v1956
      %v2057 = vpop.f32.mrf.mxu0
      %v2058 = vadd.f32 0.0, %v2057
      %v2059 = vpop.f32.mrf.mxu0
      %v2060 = vpop.f32.mrf.mxu0
      %v2061 = vadd.f32 0.0, %v2060
      %v2062 = vpop.f32.mrf.mxu0
      %2063 = vmatprep.mubr.bf16.mxu0 0
      %2064 = vmatmul.mubr.bf16.gmra.mxu0 %v1959
      %v2065 = vpop.f32.mrf.mxu0
      %v2066 = vadd.f32 0.0, %v2065
      %v2067 = vpop.f32.mrf.mxu0
      %v2068 = vpop.f32.mrf.mxu0
      %v2069 = vadd.f32 0.0, %v2068
      %v2070 = vpop.f32.mrf.mxu0
      %2071 = vmatprep.mubr.bf16.mxu0 0
      %2072 = vmatmul.mubr.bf16.gmra.mxu0 %v1962
      %v2073 = vpop.f32.mrf.mxu0
      %v2074 = vadd.f32 0.0, %v2073
      %v2075 = vpop.f32.mrf.mxu0
      %v2076 = vpop.f32.mrf.mxu0
      %v2077 = vadd.f32 0.0, %v2076
      %v2078 = vpop.f32.mrf.mxu0
      %2079 = vmatprep.mubr.bf16.mxu0 0
      %2080 = vmatmul.mubr.bf16.gmra.mxu0 %v1965
      %v2081 = vpop.f32.mrf.mxu0
      %v2082 = vadd.f32 0.0, %v2081
      %v2083 = vpop.f32.mrf.mxu0
      %v2084 = vpop.f32.mrf.mxu0
      %v2085 = vadd.f32 0.0, %v2084
      %v2086 = vpop.f32.mrf.mxu0
      %2087 = vmatprep.mubr.bf16.mxu0 0
      %2088 = vmatmul.mubr.bf16.gmra.mxu0 %v1968
      %v2089 = vpop.f32.mrf.mxu0
      %v2090 = vadd.f32 0.0, %v2089
      %v2091 = vpop.f32.mrf.mxu0
      %v2092 = vpop.f32.mrf.mxu0
      %v2093 = vadd.f32 0.0, %v2092
      %v2094 = vpop.f32.mrf.mxu0
      %2095 = vmatprep.mubr.bf16.mxu0 0
      %2096 = vmatmul.mubr.bf16.gmra.mxu0 %v1971
      %v2097 = vpop.f32.mrf.mxu0
      %v2098 = vadd.f32 0.0, %v2097
      %v2099 = vpop.f32.mrf.mxu0
      %v2100 = vpop.f32.mrf.mxu0
      %v2101 = vadd.f32 0.0, %v2100
      %v2102 = vpop.f32.mrf.mxu0
      %2103 = vmatprep.mubr.bf16.mxu0 0
      %2104 = vmatmul.mubr.bf16.gmra.mxu0 %v1974
      %v2105 = vpop.f32.mrf.mxu0
      %v2106 = vadd.f32 0.0, %v2105
      %v2107 = vpop.f32.mrf.mxu0
      %v2108 = vpop.f32.mrf.mxu0
      %v2109 = vadd.f32 0.0, %v2108
      %v2110 = vpop.f32.mrf.mxu0
      %2111 = vmatprep.mubr.bf16.mxu0 0
      %2112 = vmatmul.mubr.bf16.gmra.mxu0 %v1977
      %v2113 = vpop.f32.mrf.mxu0
      %v2114 = vadd.f32 0.0, %v2113
      %v2115 = vpop.f32.mrf.mxu0
      %v2116 = vpop.f32.mrf.mxu0
      %v2117 = vadd.f32 0.0, %v2116
      %v2118 = vpop.f32.mrf.mxu0
      %2119 = vmatprep.mubr.bf16.mxu0 0
      %2120 = vmatmul.mubr.bf16.gmra.mxu0 %v1980
      %v2121 = vpop.f32.mrf.mxu0
      %v2122 = vadd.f32 0.0, %v2121
      %v2123 = vpop.f32.mrf.mxu0
      %v2124 = vpop.f32.mrf.mxu0
      %v2125 = vadd.f32 0.0, %v2124
      %v2126 = vpop.f32.mrf.mxu0
      %2127 = vmatprep.mubr.bf16.mxu0 0
      %2128 = vmatmul.mubr.bf16.gmra.mxu0 %v1983
      %v2129 = vpop.f32.mrf.mxu0
      %v2130 = vadd.f32 0.0, %v2129
      %v2131 = vpop.f32.mrf.mxu0
      %v2132 = vpop.f32.mrf.mxu0
      %v2133 = vadd.f32 0.0, %v2132
      %v2134 = vpop.f32.mrf.mxu0
      %2135 = vmatprep.mubr.bf16.mxu0 0
      %2136 = vmatmul.mubr.bf16.gmra.mxu0 %v1986
      %v2137 = vpop.f32.mrf.mxu0
      %v2138 = vadd.f32 0.0, %v2137
      %v2139 = vpop.f32.mrf.mxu0
      %v2140 = vpop.f32.mrf.mxu0
      %v2141 = vadd.f32 0.0, %v2140
      %v2142 = vpop.f32.mrf.mxu0
      %2143 = vmatprep.mubr.bf16.mxu0 0
      %2144 = vmatmul.mubr.bf16.gmra.mxu0 %v1989
      %v2145 = vpop.f32.mrf.mxu0
      %v2146 = vadd.f32 0.0, %v2145
      %v2147 = vpop.f32.mrf.mxu0
      %v2148 = vpop.f32.mrf.mxu0
      %v2149 = vadd.f32 0.0, %v2148
      %v2150 = vpop.f32.mrf.mxu0
      %2151 = vdwg.mxu0
      %v2152 = vmul.f32 %v2026, 0.5
      %v2153 = vmul.f32 %v2029, 0.5
      %v2154 = vmul.f32 %v2034, 0.5
      %v2155 = vmul.f32 %v2037, 0.5
      %v2156 = vmul.f32 %v2042, 0.5
      %v2157 = vmul.f32 %v2045, 0.5
      %v2158 = vmul.f32 %v2050, 0.5
      %v2159 = vmul.f32 %v2053, 0.5
      %v2160 = vmul.f32 %v2058, 0.5
      %v2161 = vmul.f32 %v2061, 0.5
      %v2162 = vmul.f32 %v2066, 0.5
      %v2163 = vmul.f32 %v2069, 0.5
      %v2164 = vmul.f32 %v2074, 0.5
      %v2165 = vmul.f32 %v2077, 0.5
      %v2166 = vmul.f32 %v2082, 0.5
      %v2167 = vmul.f32 %v2085, 0.5
      %v2168 = vmul.f32 %v2090, 0.5
      %v2169 = vmul.f32 %v2093, 0.5
      %v2170 = vmul.f32 %v2098, 0.5
      %v2171 = vmul.f32 %v2101, 0.5
      %v2172 = vmul.f32 %v2106, 0.5
      %v2173 = vmul.f32 %v2109, 0.5
      %v2174 = vmul.f32 %v2114, 0.5
      %v2175 = vmul.f32 %v2117, 0.5
      %v2176 = vmul.f32 %v2122, 0.5
      %v2177 = vmul.f32 %v2125, 0.5
      %v2178 = vmul.f32 %v2130, 0.5
      %v2179 = vmul.f32 %v2133, 0.5
      %v2180 = vmul.f32 %v2138, 0.5
      %v2181 = vmul.f32 %v2141, 0.5
      %v2182 = vmul.f32 %v2146, 0.5
      %v2183 = vmul.f32 %v2149, 0.5
      %v2184 = vtanh.pop %v2152
      %v2185 = vtanh.pop %v2153
      %v2186 = vtanh.pop %v2154
      %v2187 = vtanh.pop %v2155
      %v2188 = vtanh.pop %v2156
      %v2189 = vtanh.pop %v2157
      %v2190 = vtanh.pop %v2158
      %v2191 = vtanh.pop %v2159
      %v2192 = vtanh.pop %v2160
      %v2193 = vtanh.pop %v2161
      %v2194 = vtanh.pop %v2162
      %v2195 = vtanh.pop %v2163
      %v2196 = vtanh.pop %v2164
      %v2197 = vtanh.pop %v2165
      %v2198 = vtanh.pop %v2166
      %v2199 = vtanh.pop %v2167
      %v2200 = vtanh.pop %v2168
      %v2201 = vtanh.pop %v2169
      %v2202 = vtanh.pop %v2170
      %v2203 = vtanh.pop %v2171
      %v2204 = vtanh.pop %v2172
      %v2205 = vtanh.pop %v2173
      %v2206 = vtanh.pop %v2174
      %v2207 = vtanh.pop %v2175
      %v2208 = vtanh.pop %v2176
      %v2209 = vtanh.pop %v2177
      %v2210 = vtanh.pop %v2178
      %v2211 = vtanh.pop %v2179
      %v2212 = vtanh.pop %v2180
      %v2213 = vtanh.pop %v2181
      %v2214 = vtanh.pop %v2182
      %v2215 = vtanh.pop %v2183
      %v2216 = vadd.f32 %v2184, 1.0
      %v2217 = vadd.f32 %v2185, 1.0
      %v2218 = vadd.f32 %v2186, 1.0
      %v2219 = vadd.f32 %v2187, 1.0
      %v2220 = vadd.f32 %v2188, 1.0
      %v2221 = vadd.f32 %v2189, 1.0
      %v2222 = vadd.f32 %v2190, 1.0
      %v2223 = vadd.f32 %v2191, 1.0
      %v2224 = vadd.f32 %v2192, 1.0
      %v2225 = vadd.f32 %v2193, 1.0
      %v2226 = vadd.f32 %v2194, 1.0
      %v2227 = vadd.f32 %v2195, 1.0
      %v2228 = vadd.f32 %v2196, 1.0
      %v2229 = vadd.f32 %v2197, 1.0
      %v2230 = vadd.f32 %v2198, 1.0
      %v2231 = vadd.f32 %v2199, 1.0
      %v2232 = vadd.f32 %v2200, 1.0
      %v2233 = vadd.f32 %v2201, 1.0
      %v2234 = vadd.f32 %v2202, 1.0
      %v2235 = vadd.f32 %v2203, 1.0
      %v2236 = vadd.f32 %v2204, 1.0
      %v2237 = vadd.f32 %v2205, 1.0
      %v2238 = vadd.f32 %v2206, 1.0
      %v2239 = vadd.f32 %v2207, 1.0
      %v2240 = vadd.f32 %v2208, 1.0
      %v2241 = vadd.f32 %v2209, 1.0
      %v2242 = vadd.f32 %v2210, 1.0
      %v2243 = vadd.f32 %v2211, 1.0
      %v2244 = vadd.f32 %v2212, 1.0
      %v2245 = vadd.f32 %v2213, 1.0
      %v2246 = vadd.f32 %v2214, 1.0
      %v2247 = vadd.f32 %v2215, 1.0
      %v2248 = vmul.f32 %v2152, %v2216
      %v2249 = vmul.f32 %v2153, %v2217
      %v2250 = vmul.f32 %v2154, %v2218
      %v2251 = vmul.f32 %v2155, %v2219
      %v2252 = vmul.f32 %v2156, %v2220
      %v2253 = vmul.f32 %v2157, %v2221
      %v2254 = vmul.f32 %v2158, %v2222
      %v2255 = vmul.f32 %v2159, %v2223
      %v2256 = vmul.f32 %v2160, %v2224
      %v2257 = vmul.f32 %v2161, %v2225
      %v2258 = vmul.f32 %v2162, %v2226
      %v2259 = vmul.f32 %v2163, %v2227
      %v2260 = vmul.f32 %v2164, %v2228
      %v2261 = vmul.f32 %v2165, %v2229
      %v2262 = vmul.f32 %v2166, %v2230
      %v2263 = vmul.f32 %v2167, %v2231
      %v2264 = vmul.f32 %v2168, %v2232
      %v2265 = vmul.f32 %v2169, %v2233
      %v2266 = vmul.f32 %v2170, %v2234
      %v2267 = vmul.f32 %v2171, %v2235
      %v2268 = vmul.f32 %v2172, %v2236
      %v2269 = vmul.f32 %v2173, %v2237
      %v2270 = vmul.f32 %v2174, %v2238
      %v2271 = vmul.f32 %v2175, %v2239
      %v2272 = vmul.f32 %v2176, %v2240
      %v2273 = vmul.f32 %v2177, %v2241
      %v2274 = vmul.f32 %v2178, %v2242
      %v2275 = vmul.f32 %v2179, %v2243
      %v2276 = vmul.f32 %v2180, %v2244
      %v2277 = vmul.f32 %v2181, %v2245
      %v2278 = vmul.f32 %v2182, %v2246
      %v2279 = vmul.f32 %v2183, %v2247
      %s2280 = scalar_lea.vmem %s2, 6
      %v2281 = vld [vmem:[%s2280] sm:$0x3]
      %v2282 = vpack.c.bf16 %v2249, %v2248
      %v2283 = vpack.c.bf16 %v2251, %v2250
      %v2284 = vpack.c.bf16 %v2253, %v2252
      %v2285 = vpack.c.bf16 %v2255, %v2254
      %v2286 = vpack.c.bf16 %v2257, %v2256
      %v2287 = vpack.c.bf16 %v2259, %v2258
      %v2288 = vpack.c.bf16 %v2261, %v2260
      %v2289 = vpack.c.bf16 %v2263, %v2262
      %v2290 = vpack.c.bf16 %v2265, %v2264
      %v2291 = vpack.c.bf16 %v2267, %v2266
      %v2292 = vpack.c.bf16 %v2269, %v2268
      %v2293 = vpack.c.bf16 %v2271, %v2270
      %v2294 = vpack.c.bf16 %v2273, %v2272
      %v2295 = vpack.c.bf16 %v2275, %v2274
      %v2296 = vpack.c.bf16 %v2277, %v2276
      %v2297 = vpack.c.bf16 %v2279, %v2278
      %v2300 = vunpack.c.l.s4 1966171168
      %v2301 = vunpack.c.0.s8 %v2300
      %v2302 = vlaneseq
      %v2303 = vshrl.u32 %v2302, 7
      %v2304 = vsub.s32 %v2301, %v2303
      %v2305 = vrot.slane %v2281, %v2304
      %v2306 = vcombine.high %v2305, %v2305
      %v2308 = vunpack.c.l.s4 1966171168
      %v2309 = vunpack.c.0.s8 %v2308
      %v2310 = vlaneseq
      %v2311 = vshrl.u32 %v2310, 7
      %v2312 = vsub.s32 %v2309, %v2311
      %v2313 = vrot.slane %v2305, %v2312
      %v2315 = vunpack.c.l.s4 1966171168
      %v2316 = vunpack.c.0.s8 %v2315
      %v2317 = vlaneseq
      %v2318 = vshrl.u32 %v2317, 7
      %v2319 = vsub.s32 %v2316, %v2318
      %v2320 = vrot.slane %v2306, %v2319
      %2323 = vmatprep.subr.bf16.mxu0 0
      %2324 = vmatpush1.bf16.msra.mxu0 %v2289
      %2325 = vmatprep.subr.bf16.mxu0 0
      %2326 = vmatpush1.bf16.msra.mxu0 %v2288
      %2327 = vmatprep.subr.bf16.mxu0 0
      %2328 = vmatpush1.bf16.msra.mxu0 %v2287
      %2329 = vmatprep.subr.bf16.mxu0 0
      %2330 = vmatpush1.bf16.msra.mxu0 %v2286
      %2331 = vmatprep.subr.bf16.mxu0 0
      %2332 = vmatpush1.bf16.msra.mxu0 %v2285
      %2333 = vmatprep.subr.bf16.mxu0 0
      %2334 = vmatpush1.bf16.msra.mxu0 %v2284
      %2335 = vmatprep.subr.bf16.mxu0 0
      %2336 = vmatpush1.bf16.msra.mxu0 %v2283
      %2337 = vmatprep.subr.bf16.mxu0 0
      %2338 = vmatpush1.bf16.msra.mxu0 %v2282
      %2339 = vmatprep.subr.bf16.mxu0 0
      %2340 = vmatpush2.bf16.msra.mxu0 %v2297
      %2341 = vmatprep.subr.bf16.mxu0 0
      %2342 = vmatpush2.bf16.msra.mxu0 %v2296
      %2343 = vmatprep.subr.bf16.mxu0 0
      %2344 = vmatpush2.bf16.msra.mxu0 %v2295
      %2345 = vmatprep.subr.bf16.mxu0 0
      %2346 = vmatpush2.bf16.msra.mxu0 %v2294
      %2347 = vmatprep.subr.bf16.mxu0 0
      %2348 = vmatpush2.bf16.msra.mxu0 %v2293
      %2349 = vmatprep.subr.bf16.mxu0 0
      %2350 = vmatpush2.bf16.msra.mxu0 %v2292
      %2351 = vmatprep.subr.bf16.mxu0 0
      %2352 = vmatpush2.bf16.msra.mxu0 %v2291
      %2353 = vmatprep.subr.bf16.mxu0 0
      %2354 = vmatpush2.bf16.msra.mxu0 %v2290
      %2355 = vmatprep.mubr.bf16.mxu0 %v2320
      %2356 = vmatmul.mubr.bf16.gmra.mxu0 %v2313
      %v2357 = vpop.f32.mrf.mxu0
      %v2358 = vadd.f32 0.0, %v2357
      %v2359 = vpop.f32.mrf.mxu0
      %v2360 = vpop.f32.mrf.mxu0
      %v2361 = vpop.f32.mrf.mxu0
      %2362 = vdwg.mxu0
      %v2363 = vadd.f32 %v1829, %v2358
      %s2364 = scalar_lea.vmem %s1, 512
      %v2365 = vld [vmem:[%s2364] sm:$0xf]
      %v2366 = vld [vmem:[%s2364 + $0x4] sm:$0xf]
      %v2367 = vld [vmem:[%s2364 + $0x8] sm:$0xf]
      %v2368 = vld [vmem:[%s2364 + $0xc] sm:$0xf]
      %v2369 = vld [vmem:[%s2364 + $0x10] sm:$0xf]
      %v2370 = vld [vmem:[%s2364 + $0x14] sm:$0xf]
      %v2371 = vld [vmem:[%s2364 + $0x18] sm:$0xf]
      %v2372 = vld [vmem:[%s2364 + $0x1c] sm:$0xf]
      %v2373 = vld [vmem:[%s2364 + $0x20] sm:$0xf]
      %v2374 = vld [vmem:[%s2364 + $0x24] sm:$0xf]
      %v2375 = vld [vmem:[%s2364 + $0x28] sm:$0xf]
      %v2376 = vld [vmem:[%s2364 + $0x2c] sm:$0xf]
      %v2377 = vld [vmem:[%s2364 + $0x30] sm:$0xf]
      %v2378 = vld [vmem:[%s2364 + $0x34] sm:$0xf]
      %v2379 = vld [vmem:[%s2364 + $0x38] sm:$0xf]
      %v2380 = vld [vmem:[%s2364 + $0x3c] sm:$0xf]
      %v2381 = vld [vmem:[%s2364 + $0x40] sm:$0xf]
      %v2382 = vld [vmem:[%s2364 + $0x44] sm:$0xf]
      %v2383 = vld [vmem:[%s2364 + $0x48] sm:$0xf]
      %v2384 = vld [vmem:[%s2364 + $0x4c] sm:$0xf]
      %v2385 = vld [vmem:[%s2364 + $0x50] sm:$0xf]
      %v2386 = vld [vmem:[%s2364 + $0x54] sm:$0xf]
      %v2387 = vld [vmem:[%s2364 + $0x58] sm:$0xf]
      %v2388 = vld [vmem:[%s2364 + $0x5c] sm:$0xf]
      %v2389 = vld [vmem:[%s2364 + $0x60] sm:$0xf]
      %v2390 = vld [vmem:[%s2364 + $0x64] sm:$0xf]
      %v2391 = vld [vmem:[%s2364 + $0x68] sm:$0xf]
      %v2392 = vld [vmem:[%s2364 + $0x6c] sm:$0xf]
      %v2393 = vld [vmem:[%s2364 + $0x70] sm:$0xf]
      %v2394 = vld [vmem:[%s2364 + $0x74] sm:$0xf]
      %v2395 = vld [vmem:[%s2364 + $0x78] sm:$0xf]
      %v2396 = vld [vmem:[%s2364 + $0x7c] sm:$0xf]
      %v2429 = vunpack.c.l.b16 %v2365
      %v2430 = vunpack.c.l.b16 %v2366
      %v2431 = vunpack.c.l.b16 %v2367
      %v2432 = vunpack.c.l.b16 %v2368
      %v2433 = vunpack.c.l.b16 %v2369
      %v2434 = vunpack.c.l.b16 %v2370
      %v2435 = vunpack.c.l.b16 %v2371
      %v2436 = vunpack.c.l.b16 %v2372
      %v2437 = vunpack.c.l.b16 %v2373
      %v2438 = vunpack.c.l.b16 %v2374
      %v2439 = vunpack.c.l.b16 %v2375
      %v2440 = vunpack.c.l.b16 %v2376
      %v2441 = vunpack.c.l.b16 %v2377
      %v2442 = vunpack.c.l.b16 %v2378
      %v2443 = vunpack.c.l.b16 %v2379
      %v2444 = vunpack.c.l.b16 %v2380
      %v2445 = vunpack.c.l.b16 %v2381
      %v2446 = vunpack.c.l.b16 %v2382
      %v2447 = vunpack.c.l.b16 %v2383
      %v2448 = vunpack.c.l.b16 %v2384
      %v2449 = vunpack.c.l.b16 %v2385
      %v2450 = vunpack.c.l.b16 %v2386
      %v2451 = vunpack.c.l.b16 %v2387
      %v2452 = vunpack.c.l.b16 %v2388
      %v2453 = vunpack.c.l.b16 %v2389
      %v2454 = vunpack.c.l.b16 %v2390
      %v2455 = vunpack.c.l.b16 %v2391
      %v2456 = vunpack.c.l.b16 %v2392
      %v2457 = vunpack.c.l.b16 %v2393
      %v2458 = vunpack.c.l.b16 %v2394
      %v2459 = vunpack.c.l.b16 %v2395
      %v2460 = vunpack.c.l.b16 %v2396
      %v2461 = vpack.c.b16 %v2430, %v2429
      %v2462 = vpack.c.b16 %v2432, %v2431
      %v2463 = vpack.c.b16 %v2434, %v2433
      %v2464 = vpack.c.b16 %v2436, %v2435
      %v2465 = vpack.c.b16 %v2438, %v2437
      %v2466 = vpack.c.b16 %v2440, %v2439
      %v2467 = vpack.c.b16 %v2442, %v2441
      %v2468 = vpack.c.b16 %v2444, %v2443
      %v2469 = vpack.c.b16 %v2446, %v2445
      %v2470 = vpack.c.b16 %v2448, %v2447
      %v2471 = vpack.c.b16 %v2450, %v2449
      %v2472 = vpack.c.b16 %v2452, %v2451
      %v2473 = vpack.c.b16 %v2454, %v2453
      %v2474 = vpack.c.b16 %v2456, %v2455
      %v2475 = vpack.c.b16 %v2458, %v2457
      %v2476 = vpack.c.b16 %v2460, %v2459
      %v2478 = vsel %vm336, %v2461, 0
      %v2481 = vsel %vm336, %v2462, 0
      %v2484 = vsel %vm336, %v2463, 0
      %v2487 = vsel %vm336, %v2464, 0
      %v2490 = vsel %vm336, %v2465, 0
      %v2493 = vsel %vm336, %v2466, 0
      %v2496 = vsel %vm336, %v2467, 0
      %v2499 = vsel %vm336, %v2468, 0
      %v2502 = vsel %vm336, %v2469, 0
      %v2505 = vsel %vm336, %v2470, 0
      %v2508 = vsel %vm336, %v2471, 0
      %v2511 = vsel %vm336, %v2472, 0
      %v2514 = vsel %vm336, %v2473, 0
      %v2517 = vsel %vm336, %v2474, 0
      %v2520 = vsel %vm336, %v2475, 0
      %v2523 = vsel %vm336, %v2476, 0
      %2525 = vmatprep.subr.bf16.mxu0 0
      %2526 = vmatpush1.bf16.msra.mxu0 0
      %2527 = vmatprep.subr.bf16.mxu0 0
      %2528 = vmatpush1.bf16.msra.mxu0 0
      %2529 = vmatprep.subr.bf16.mxu0 0
      %2530 = vmatpush1.bf16.msra.mxu0 0
      %2531 = vmatprep.subr.bf16.mxu0 0
      %2532 = vmatpush1.bf16.msra.mxu0 0
      %2533 = vmatprep.subr.bf16.mxu0 0
      %2534 = vmatpush1.bf16.msra.mxu0 0
      %2535 = vmatprep.subr.bf16.mxu0 0
      %2536 = vmatpush1.bf16.msra.mxu0 0
      %2537 = vmatprep.subr.bf16.mxu0 0
      %2538 = vmatpush1.bf16.msra.mxu0 0
      %2539 = vmatprep.subr.bf16.mxu0 0
      %2540 = vmatpush1.bf16.msra.mxu0 %v390
      %2541 = vmatprep.subr.bf16.mxu0 0
      %2542 = vmatpush2.bf16.msra.mxu0 0
      %2543 = vmatprep.subr.bf16.mxu0 0
      %2544 = vmatpush2.bf16.msra.mxu0 0
      %2545 = vmatprep.subr.bf16.mxu0 0
      %2546 = vmatpush2.bf16.msra.mxu0 0
      %2547 = vmatprep.subr.bf16.mxu0 0
      %2548 = vmatpush2.bf16.msra.mxu0 0
      %2549 = vmatprep.subr.bf16.mxu0 0
      %2550 = vmatpush2.bf16.msra.mxu0 0
      %2551 = vmatprep.subr.bf16.mxu0 0
      %2552 = vmatpush2.bf16.msra.mxu0 0
      %2553 = vmatprep.subr.bf16.mxu0 0
      %2554 = vmatpush2.bf16.msra.mxu0 0
      %2555 = vmatprep.subr.bf16.mxu0 0
      %2556 = vmatpush2.bf16.msra.mxu0 0
      %2557 = vmatprep.mubr.bf16.mxu0 0
      %2558 = vmatmul.mubr.bf16.gmra.mxu0 %v2478
      %v2559 = vpop.f32.mrf.mxu0
      %v2560 = vadd.f32 0.0, %v2559
      %v2561 = vpop.f32.mrf.mxu0
      %v2562 = vpop.f32.mrf.mxu0
      %v2563 = vadd.f32 0.0, %v2562
      %v2564 = vpop.f32.mrf.mxu0
      %2565 = vmatprep.mubr.bf16.mxu0 0
      %2566 = vmatmul.mubr.bf16.gmra.mxu0 %v2481
      %v2567 = vpop.f32.mrf.mxu0
      %v2568 = vadd.f32 0.0, %v2567
      %v2569 = vpop.f32.mrf.mxu0
      %v2570 = vpop.f32.mrf.mxu0
      %v2571 = vadd.f32 0.0, %v2570
      %v2572 = vpop.f32.mrf.mxu0
      %2573 = vmatprep.mubr.bf16.mxu0 0
      %2574 = vmatmul.mubr.bf16.gmra.mxu0 %v2484
      %v2575 = vpop.f32.mrf.mxu0
      %v2576 = vadd.f32 0.0, %v2575
      %v2577 = vpop.f32.mrf.mxu0
      %v2578 = vpop.f32.mrf.mxu0
      %v2579 = vadd.f32 0.0, %v2578
      %v2580 = vpop.f32.mrf.mxu0
      %2581 = vmatprep.mubr.bf16.mxu0 0
      %2582 = vmatmul.mubr.bf16.gmra.mxu0 %v2487
      %v2583 = vpop.f32.mrf.mxu0
      %v2584 = vadd.f32 0.0, %v2583
      %v2585 = vpop.f32.mrf.mxu0
      %v2586 = vpop.f32.mrf.mxu0
      %v2587 = vadd.f32 0.0, %v2586
      %v2588 = vpop.f32.mrf.mxu0
      %2589 = vmatprep.mubr.bf16.mxu0 0
      %2590 = vmatmul.mubr.bf16.gmra.mxu0 %v2490
      %v2591 = vpop.f32.mrf.mxu0
      %v2592 = vadd.f32 0.0, %v2591
      %v2593 = vpop.f32.mrf.mxu0
      %v2594 = vpop.f32.mrf.mxu0
      %v2595 = vadd.f32 0.0, %v2594
      %v2596 = vpop.f32.mrf.mxu0
      %2597 = vmatprep.mubr.bf16.mxu0 0
      %2598 = vmatmul.mubr.bf16.gmra.mxu0 %v2493
      %v2599 = vpop.f32.mrf.mxu0
      %v2600 = vadd.f32 0.0, %v2599
      %v2601 = vpop.f32.mrf.mxu0
      %v2602 = vpop.f32.mrf.mxu0
      %v2603 = vadd.f32 0.0, %v2602
      %v2604 = vpop.f32.mrf.mxu0
      %2605 = vmatprep.mubr.bf16.mxu0 0
      %2606 = vmatmul.mubr.bf16.gmra.mxu0 %v2496
      %v2607 = vpop.f32.mrf.mxu0
      %v2608 = vadd.f32 0.0, %v2607
      %v2609 = vpop.f32.mrf.mxu0
      %v2610 = vpop.f32.mrf.mxu0
      %v2611 = vadd.f32 0.0, %v2610
      %v2612 = vpop.f32.mrf.mxu0
      %2613 = vmatprep.mubr.bf16.mxu0 0
      %2614 = vmatmul.mubr.bf16.gmra.mxu0 %v2499
      %v2615 = vpop.f32.mrf.mxu0
      %v2616 = vadd.f32 0.0, %v2615
      %v2617 = vpop.f32.mrf.mxu0
      %v2618 = vpop.f32.mrf.mxu0
      %v2619 = vadd.f32 0.0, %v2618
      %v2620 = vpop.f32.mrf.mxu0
      %2621 = vmatprep.mubr.bf16.mxu0 0
      %2622 = vmatmul.mubr.bf16.gmra.mxu0 %v2502
      %v2623 = vpop.f32.mrf.mxu0
      %v2624 = vadd.f32 0.0, %v2623
      %v2625 = vpop.f32.mrf.mxu0
      %v2626 = vpop.f32.mrf.mxu0
      %v2627 = vadd.f32 0.0, %v2626
      %v2628 = vpop.f32.mrf.mxu0
      %2629 = vmatprep.mubr.bf16.mxu0 0
      %2630 = vmatmul.mubr.bf16.gmra.mxu0 %v2505
      %v2631 = vpop.f32.mrf.mxu0
      %v2632 = vadd.f32 0.0, %v2631
      %v2633 = vpop.f32.mrf.mxu0
      %v2634 = vpop.f32.mrf.mxu0
      %v2635 = vadd.f32 0.0, %v2634
      %v2636 = vpop.f32.mrf.mxu0
      %2637 = vmatprep.mubr.bf16.mxu0 0
      %2638 = vmatmul.mubr.bf16.gmra.mxu0 %v2508
      %v2639 = vpop.f32.mrf.mxu0
      %v2640 = vadd.f32 0.0, %v2639
      %v2641 = vpop.f32.mrf.mxu0
      %v2642 = vpop.f32.mrf.mxu0
      %v2643 = vadd.f32 0.0, %v2642
      %v2644 = vpop.f32.mrf.mxu0
      %2645 = vmatprep.mubr.bf16.mxu0 0
      %2646 = vmatmul.mubr.bf16.gmra.mxu0 %v2511
      %v2647 = vpop.f32.mrf.mxu0
      %v2648 = vadd.f32 0.0, %v2647
      %v2649 = vpop.f32.mrf.mxu0
      %v2650 = vpop.f32.mrf.mxu0
      %v2651 = vadd.f32 0.0, %v2650
      %v2652 = vpop.f32.mrf.mxu0
      %2653 = vmatprep.mubr.bf16.mxu0 0
      %2654 = vmatmul.mubr.bf16.gmra.mxu0 %v2514
      %v2655 = vpop.f32.mrf.mxu0
      %v2656 = vadd.f32 0.0, %v2655
      %v2657 = vpop.f32.mrf.mxu0
      %v2658 = vpop.f32.mrf.mxu0
      %v2659 = vadd.f32 0.0, %v2658
      %v2660 = vpop.f32.mrf.mxu0
      %2661 = vmatprep.mubr.bf16.mxu0 0
      %2662 = vmatmul.mubr.bf16.gmra.mxu0 %v2517
      %v2663 = vpop.f32.mrf.mxu0
      %v2664 = vadd.f32 0.0, %v2663
      %v2665 = vpop.f32.mrf.mxu0
      %v2666 = vpop.f32.mrf.mxu0
      %v2667 = vadd.f32 0.0, %v2666
      %v2668 = vpop.f32.mrf.mxu0
      %2669 = vmatprep.mubr.bf16.mxu0 0
      %2670 = vmatmul.mubr.bf16.gmra.mxu0 %v2520
      %v2671 = vpop.f32.mrf.mxu0
      %v2672 = vadd.f32 0.0, %v2671
      %v2673 = vpop.f32.mrf.mxu0
      %v2674 = vpop.f32.mrf.mxu0
      %v2675 = vadd.f32 0.0, %v2674
      %v2676 = vpop.f32.mrf.mxu0
      %2677 = vmatprep.mubr.bf16.mxu0 0
      %2678 = vmatmul.mubr.bf16.gmra.mxu0 %v2523
      %v2679 = vpop.f32.mrf.mxu0
      %v2680 = vadd.f32 0.0, %v2679
      %v2681 = vpop.f32.mrf.mxu0
      %v2682 = vpop.f32.mrf.mxu0
      %v2683 = vadd.f32 0.0, %v2682
      %v2684 = vpop.f32.mrf.mxu0
      %2685 = vdwg.mxu0
      %v2686 = vmul.f32 %v2560, 0.5
      %v2687 = vmul.f32 %v2563, 0.5
      %v2688 = vmul.f32 %v2568, 0.5
      %v2689 = vmul.f32 %v2571, 0.5
      %v2690 = vmul.f32 %v2576, 0.5
      %v2691 = vmul.f32 %v2579, 0.5
      %v2692 = vmul.f32 %v2584, 0.5
      %v2693 = vmul.f32 %v2587, 0.5
      %v2694 = vmul.f32 %v2592, 0.5
      %v2695 = vmul.f32 %v2595, 0.5
      %v2696 = vmul.f32 %v2600, 0.5
      %v2697 = vmul.f32 %v2603, 0.5
      %v2698 = vmul.f32 %v2608, 0.5
      %v2699 = vmul.f32 %v2611, 0.5
      %v2700 = vmul.f32 %v2616, 0.5
      %v2701 = vmul.f32 %v2619, 0.5
      %v2702 = vmul.f32 %v2624, 0.5
      %v2703 = vmul.f32 %v2627, 0.5
      %v2704 = vmul.f32 %v2632, 0.5
      %v2705 = vmul.f32 %v2635, 0.5
      %v2706 = vmul.f32 %v2640, 0.5
      %v2707 = vmul.f32 %v2643, 0.5
      %v2708 = vmul.f32 %v2648, 0.5
      %v2709 = vmul.f32 %v2651, 0.5
      %v2710 = vmul.f32 %v2656, 0.5
      %v2711 = vmul.f32 %v2659, 0.5
      %v2712 = vmul.f32 %v2664, 0.5
      %v2713 = vmul.f32 %v2667, 0.5
      %v2714 = vmul.f32 %v2672, 0.5
      %v2715 = vmul.f32 %v2675, 0.5
      %v2716 = vmul.f32 %v2680, 0.5
      %v2717 = vmul.f32 %v2683, 0.5
      %v2718 = vtanh.pop %v2686
      %v2719 = vtanh.pop %v2687
      %v2720 = vtanh.pop %v2688
      %v2721 = vtanh.pop %v2689
      %v2722 = vtanh.pop %v2690
      %v2723 = vtanh.pop %v2691
      %v2724 = vtanh.pop %v2692
      %v2725 = vtanh.pop %v2693
      %v2726 = vtanh.pop %v2694
      %v2727 = vtanh.pop %v2695
      %v2728 = vtanh.pop %v2696
      %v2729 = vtanh.pop %v2697
      %v2730 = vtanh.pop %v2698
      %v2731 = vtanh.pop %v2699
      %v2732 = vtanh.pop %v2700
      %v2733 = vtanh.pop %v2701
      %v2734 = vtanh.pop %v2702
      %v2735 = vtanh.pop %v2703
      %v2736 = vtanh.pop %v2704
      %v2737 = vtanh.pop %v2705
      %v2738 = vtanh.pop %v2706
      %v2739 = vtanh.pop %v2707
      %v2740 = vtanh.pop %v2708
      %v2741 = vtanh.pop %v2709
      %v2742 = vtanh.pop %v2710
      %v2743 = vtanh.pop %v2711
      %v2744 = vtanh.pop %v2712
      %v2745 = vtanh.pop %v2713
      %v2746 = vtanh.pop %v2714
      %v2747 = vtanh.pop %v2715
      %v2748 = vtanh.pop %v2716
      %v2749 = vtanh.pop %v2717
      %v2750 = vadd.f32 %v2718, 1.0
      %v2751 = vadd.f32 %v2719, 1.0
      %v2752 = vadd.f32 %v2720, 1.0
      %v2753 = vadd.f32 %v2721, 1.0
      %v2754 = vadd.f32 %v2722, 1.0
      %v2755 = vadd.f32 %v2723, 1.0
      %v2756 = vadd.f32 %v2724, 1.0
      %v2757 = vadd.f32 %v2725, 1.0
      %v2758 = vadd.f32 %v2726, 1.0
      %v2759 = vadd.f32 %v2727, 1.0
      %v2760 = vadd.f32 %v2728, 1.0
      %v2761 = vadd.f32 %v2729, 1.0
      %v2762 = vadd.f32 %v2730, 1.0
      %v2763 = vadd.f32 %v2731, 1.0
      %v2764 = vadd.f32 %v2732, 1.0
      %v2765 = vadd.f32 %v2733, 1.0
      %v2766 = vadd.f32 %v2734, 1.0
      %v2767 = vadd.f32 %v2735, 1.0
      %v2768 = vadd.f32 %v2736, 1.0
      %v2769 = vadd.f32 %v2737, 1.0
      %v2770 = vadd.f32 %v2738, 1.0
      %v2771 = vadd.f32 %v2739, 1.0
      %v2772 = vadd.f32 %v2740, 1.0
      %v2773 = vadd.f32 %v2741, 1.0
      %v2774 = vadd.f32 %v2742, 1.0
      %v2775 = vadd.f32 %v2743, 1.0
      %v2776 = vadd.f32 %v2744, 1.0
      %v2777 = vadd.f32 %v2745, 1.0
      %v2778 = vadd.f32 %v2746, 1.0
      %v2779 = vadd.f32 %v2747, 1.0
      %v2780 = vadd.f32 %v2748, 1.0
      %v2781 = vadd.f32 %v2749, 1.0
      %v2782 = vmul.f32 %v2686, %v2750
      %v2783 = vmul.f32 %v2687, %v2751
      %v2784 = vmul.f32 %v2688, %v2752
      %v2785 = vmul.f32 %v2689, %v2753
      %v2786 = vmul.f32 %v2690, %v2754
      %v2787 = vmul.f32 %v2691, %v2755
      %v2788 = vmul.f32 %v2692, %v2756
      %v2789 = vmul.f32 %v2693, %v2757
      %v2790 = vmul.f32 %v2694, %v2758
      %v2791 = vmul.f32 %v2695, %v2759
      %v2792 = vmul.f32 %v2696, %v2760
      %v2793 = vmul.f32 %v2697, %v2761
      %v2794 = vmul.f32 %v2698, %v2762
      %v2795 = vmul.f32 %v2699, %v2763
      %v2796 = vmul.f32 %v2700, %v2764
      %v2797 = vmul.f32 %v2701, %v2765
      %v2798 = vmul.f32 %v2702, %v2766
      %v2799 = vmul.f32 %v2703, %v2767
      %v2800 = vmul.f32 %v2704, %v2768
      %v2801 = vmul.f32 %v2705, %v2769
      %v2802 = vmul.f32 %v2706, %v2770
      %v2803 = vmul.f32 %v2707, %v2771
      %v2804 = vmul.f32 %v2708, %v2772
      %v2805 = vmul.f32 %v2709, %v2773
      %v2806 = vmul.f32 %v2710, %v2774
      %v2807 = vmul.f32 %v2711, %v2775
      %v2808 = vmul.f32 %v2712, %v2776
      %v2809 = vmul.f32 %v2713, %v2777
      %v2810 = vmul.f32 %v2714, %v2778
      %v2811 = vmul.f32 %v2715, %v2779
      %v2812 = vmul.f32 %v2716, %v2780
      %v2813 = vmul.f32 %v2717, %v2781
      %s2814 = scalar_lea.vmem %s2, 8
      %v2815 = vld [vmem:[%s2814] sm:$0x3]
      %v2816 = vpack.c.bf16 %v2783, %v2782
      %v2817 = vpack.c.bf16 %v2785, %v2784
      %v2818 = vpack.c.bf16 %v2787, %v2786
      %v2819 = vpack.c.bf16 %v2789, %v2788
      %v2820 = vpack.c.bf16 %v2791, %v2790
      %v2821 = vpack.c.bf16 %v2793, %v2792
      %v2822 = vpack.c.bf16 %v2795, %v2794
      %v2823 = vpack.c.bf16 %v2797, %v2796
      %v2824 = vpack.c.bf16 %v2799, %v2798
      %v2825 = vpack.c.bf16 %v2801, %v2800
      %v2826 = vpack.c.bf16 %v2803, %v2802
      %v2827 = vpack.c.bf16 %v2805, %v2804
      %v2828 = vpack.c.bf16 %v2807, %v2806
      %v2829 = vpack.c.bf16 %v2809, %v2808
      %v2830 = vpack.c.bf16 %v2811, %v2810
      %v2831 = vpack.c.bf16 %v2813, %v2812
      %v2834 = vunpack.c.l.s4 1966171168
      %v2835 = vunpack.c.0.s8 %v2834
      %v2836 = vlaneseq
      %v2837 = vshrl.u32 %v2836, 7
      %v2838 = vsub.s32 %v2835, %v2837
      %v2839 = vrot.slane %v2815, %v2838
      %v2840 = vcombine.high %v2839, %v2839
      %v2842 = vunpack.c.l.s4 1966171168
      %v2843 = vunpack.c.0.s8 %v2842
      %v2844 = vlaneseq
      %v2845 = vshrl.u32 %v2844, 7
      %v2846 = vsub.s32 %v2843, %v2845
      %v2847 = vrot.slane %v2839, %v2846
      %v2849 = vunpack.c.l.s4 1966171168
      %v2850 = vunpack.c.0.s8 %v2849
      %v2851 = vlaneseq
      %v2852 = vshrl.u32 %v2851, 7
      %v2853 = vsub.s32 %v2850, %v2852
      %v2854 = vrot.slane %v2840, %v2853
      %2857 = vmatprep.subr.bf16.mxu0 0
      %2858 = vmatpush1.bf16.msra.mxu0 %v2823
      %2859 = vmatprep.subr.bf16.mxu0 0
      %2860 = vmatpush1.bf16.msra.mxu0 %v2822
      %2861 = vmatprep.subr.bf16.mxu0 0
      %2862 = vmatpush1.bf16.msra.mxu0 %v2821
      %2863 = vmatprep.subr.bf16.mxu0 0
      %2864 = vmatpush1.bf16.msra.mxu0 %v2820
      %2865 = vmatprep.subr.bf16.mxu0 0
      %2866 = vmatpush1.bf16.msra.mxu0 %v2819
      %2867 = vmatprep.subr.bf16.mxu0 0
      %2868 = vmatpush1.bf16.msra.mxu0 %v2818
      %2869 = vmatprep.subr.bf16.mxu0 0
      %2870 = vmatpush1.bf16.msra.mxu0 %v2817
      %2871 = vmatprep.subr.bf16.mxu0 0
      %2872 = vmatpush1.bf16.msra.mxu0 %v2816
      %2873 = vmatprep.subr.bf16.mxu0 0
      %2874 = vmatpush2.bf16.msra.mxu0 %v2831
      %2875 = vmatprep.subr.bf16.mxu0 0
      %2876 = vmatpush2.bf16.msra.mxu0 %v2830
      %2877 = vmatprep.subr.bf16.mxu0 0
      %2878 = vmatpush2.bf16.msra.mxu0 %v2829
      %2879 = vmatprep.subr.bf16.mxu0 0
      %2880 = vmatpush2.bf16.msra.mxu0 %v2828
      %2881 = vmatprep.subr.bf16.mxu0 0
      %2882 = vmatpush2.bf16.msra.mxu0 %v2827
      %2883 = vmatprep.subr.bf16.mxu0 0
      %2884 = vmatpush2.bf16.msra.mxu0 %v2826
      %2885 = vmatprep.subr.bf16.mxu0 0
      %2886 = vmatpush2.bf16.msra.mxu0 %v2825
      %2887 = vmatprep.subr.bf16.mxu0 0
      %2888 = vmatpush2.bf16.msra.mxu0 %v2824
      %2889 = vmatprep.mubr.bf16.mxu0 %v2854
      %2890 = vmatmul.mubr.bf16.gmra.mxu0 %v2847
      %v2891 = vpop.f32.mrf.mxu0
      %v2892 = vadd.f32 0.0, %v2891
      %v2893 = vpop.f32.mrf.mxu0
      %v2894 = vpop.f32.mrf.mxu0
      %v2895 = vpop.f32.mrf.mxu0
      %2896 = vdwg.mxu0
      %v2897 = vadd.f32 %v2363, %v2892
      %s2898 = scalar_lea.vmem %s1, 640
      %v2899 = vld [vmem:[%s2898] sm:$0xf]
      %v2900 = vld [vmem:[%s2898 + $0x4] sm:$0xf]
      %v2901 = vld [vmem:[%s2898 + $0x8] sm:$0xf]
      %v2902 = vld [vmem:[%s2898 + $0xc] sm:$0xf]
      %v2903 = vld [vmem:[%s2898 + $0x10] sm:$0xf]
      %v2904 = vld [vmem:[%s2898 + $0x14] sm:$0xf]
      %v2905 = vld [vmem:[%s2898 + $0x18] sm:$0xf]
      %v2906 = vld [vmem:[%s2898 + $0x1c] sm:$0xf]
      %v2907 = vld [vmem:[%s2898 + $0x20] sm:$0xf]
      %v2908 = vld [vmem:[%s2898 + $0x24] sm:$0xf]
      %v2909 = vld [vmem:[%s2898 + $0x28] sm:$0xf]
      %v2910 = vld [vmem:[%s2898 + $0x2c] sm:$0xf]
      %v2911 = vld [vmem:[%s2898 + $0x30] sm:$0xf]
      %v2912 = vld [vmem:[%s2898 + $0x34] sm:$0xf]
      %v2913 = vld [vmem:[%s2898 + $0x38] sm:$0xf]
      %v2914 = vld [vmem:[%s2898 + $0x3c] sm:$0xf]
      %v2915 = vld [vmem:[%s2898 + $0x40] sm:$0xf]
      %v2916 = vld [vmem:[%s2898 + $0x44] sm:$0xf]
      %v2917 = vld [vmem:[%s2898 + $0x48] sm:$0xf]
      %v2918 = vld [vmem:[%s2898 + $0x4c] sm:$0xf]
      %v2919 = vld [vmem:[%s2898 + $0x50] sm:$0xf]
      %v2920 = vld [vmem:[%s2898 + $0x54] sm:$0xf]
      %v2921 = vld [vmem:[%s2898 + $0x58] sm:$0xf]
      %v2922 = vld [vmem:[%s2898 + $0x5c] sm:$0xf]
      %v2923 = vld [vmem:[%s2898 + $0x60] sm:$0xf]
      %v2924 = vld [vmem:[%s2898 + $0x64] sm:$0xf]
      %v2925 = vld [vmem:[%s2898 + $0x68] sm:$0xf]
      %v2926 = vld [vmem:[%s2898 + $0x6c] sm:$0xf]
      %v2927 = vld [vmem:[%s2898 + $0x70] sm:$0xf]
      %v2928 = vld [vmem:[%s2898 + $0x74] sm:$0xf]
      %v2929 = vld [vmem:[%s2898 + $0x78] sm:$0xf]
      %v2930 = vld [vmem:[%s2898 + $0x7c] sm:$0xf]
      %v2963 = vunpack.c.l.b16 %v2899
      %v2964 = vunpack.c.l.b16 %v2900
      %v2965 = vunpack.c.l.b16 %v2901
      %v2966 = vunpack.c.l.b16 %v2902
      %v2967 = vunpack.c.l.b16 %v2903
      %v2968 = vunpack.c.l.b16 %v2904
      %v2969 = vunpack.c.l.b16 %v2905
      %v2970 = vunpack.c.l.b16 %v2906
      %v2971 = vunpack.c.l.b16 %v2907
      %v2972 = vunpack.c.l.b16 %v2908
      %v2973 = vunpack.c.l.b16 %v2909
      %v2974 = vunpack.c.l.b16 %v2910
      %v2975 = vunpack.c.l.b16 %v2911
      %v2976 = vunpack.c.l.b16 %v2912
      %v2977 = vunpack.c.l.b16 %v2913
      %v2978 = vunpack.c.l.b16 %v2914
      %v2979 = vunpack.c.l.b16 %v2915
      %v2980 = vunpack.c.l.b16 %v2916
      %v2981 = vunpack.c.l.b16 %v2917
      %v2982 = vunpack.c.l.b16 %v2918
      %v2983 = vunpack.c.l.b16 %v2919
      %v2984 = vunpack.c.l.b16 %v2920
      %v2985 = vunpack.c.l.b16 %v2921
      %v2986 = vunpack.c.l.b16 %v2922
      %v2987 = vunpack.c.l.b16 %v2923
      %v2988 = vunpack.c.l.b16 %v2924
      %v2989 = vunpack.c.l.b16 %v2925
      %v2990 = vunpack.c.l.b16 %v2926
      %v2991 = vunpack.c.l.b16 %v2927
      %v2992 = vunpack.c.l.b16 %v2928
      %v2993 = vunpack.c.l.b16 %v2929
      %v2994 = vunpack.c.l.b16 %v2930
      %v2995 = vpack.c.b16 %v2964, %v2963
      %v2996 = vpack.c.b16 %v2966, %v2965
      %v2997 = vpack.c.b16 %v2968, %v2967
      %v2998 = vpack.c.b16 %v2970, %v2969
      %v2999 = vpack.c.b16 %v2972, %v2971
      %v3000 = vpack.c.b16 %v2974, %v2973
      %v3001 = vpack.c.b16 %v2976, %v2975
      %v3002 = vpack.c.b16 %v2978, %v2977
      %v3003 = vpack.c.b16 %v2980, %v2979
      %v3004 = vpack.c.b16 %v2982, %v2981
      %v3005 = vpack.c.b16 %v2984, %v2983
      %v3006 = vpack.c.b16 %v2986, %v2985
      %v3007 = vpack.c.b16 %v2988, %v2987
      %v3008 = vpack.c.b16 %v2990, %v2989
      %v3009 = vpack.c.b16 %v2992, %v2991
      %v3010 = vpack.c.b16 %v2994, %v2993
      %v3012 = vsel %vm336, %v2995, 0
      %v3015 = vsel %vm336, %v2996, 0
      %v3018 = vsel %vm336, %v2997, 0
      %v3021 = vsel %vm336, %v2998, 0
      %v3024 = vsel %vm336, %v2999, 0
      %v3027 = vsel %vm336, %v3000, 0
      %v3030 = vsel %vm336, %v3001, 0
      %v3033 = vsel %vm336, %v3002, 0
      %v3036 = vsel %vm336, %v3003, 0
      %v3039 = vsel %vm336, %v3004, 0
      %v3042 = vsel %vm336, %v3005, 0
      %v3045 = vsel %vm336, %v3006, 0
      %v3048 = vsel %vm336, %v3007, 0
      %v3051 = vsel %vm336, %v3008, 0
      %v3054 = vsel %vm336, %v3009, 0
      %v3057 = vsel %vm336, %v3010, 0
      %3059 = vmatprep.subr.bf16.mxu0 0
      %3060 = vmatpush1.bf16.msra.mxu0 0
      %3061 = vmatprep.subr.bf16.mxu0 0
      %3062 = vmatpush1.bf16.msra.mxu0 0
      %3063 = vmatprep.subr.bf16.mxu0 0
      %3064 = vmatpush1.bf16.msra.mxu0 0
      %3065 = vmatprep.subr.bf16.mxu0 0
      %3066 = vmatpush1.bf16.msra.mxu0 0
      %3067 = vmatprep.subr.bf16.mxu0 0
      %3068 = vmatpush1.bf16.msra.mxu0 0
      %3069 = vmatprep.subr.bf16.mxu0 0
      %3070 = vmatpush1.bf16.msra.mxu0 0
      %3071 = vmatprep.subr.bf16.mxu0 0
      %3072 = vmatpush1.bf16.msra.mxu0 0
      %3073 = vmatprep.subr.bf16.mxu0 0
      %3074 = vmatpush1.bf16.msra.mxu0 %v390
      %3075 = vmatprep.subr.bf16.mxu0 0
      %3076 = vmatpush2.bf16.msra.mxu0 0
      %3077 = vmatprep.subr.bf16.mxu0 0
      %3078 = vmatpush2.bf16.msra.mxu0 0
      %3079 = vmatprep.subr.bf16.mxu0 0
      %3080 = vmatpush2.bf16.msra.mxu0 0
      %3081 = vmatprep.subr.bf16.mxu0 0
      %3082 = vmatpush2.bf16.msra.mxu0 0
      %3083 = vmatprep.subr.bf16.mxu0 0
      %3084 = vmatpush2.bf16.msra.mxu0 0
      %3085 = vmatprep.subr.bf16.mxu0 0
      %3086 = vmatpush2.bf16.msra.mxu0 0
      %3087 = vmatprep.subr.bf16.mxu0 0
      %3088 = vmatpush2.bf16.msra.mxu0 0
      %3089 = vmatprep.subr.bf16.mxu0 0
      %3090 = vmatpush2.bf16.msra.mxu0 0
      %3091 = vmatprep.mubr.bf16.mxu0 0
      %3092 = vmatmul.mubr.bf16.gmra.mxu0 %v3012
      %v3093 = vpop.f32.mrf.mxu0
      %v3094 = vadd.f32 0.0, %v3093
      %v3095 = vpop.f32.mrf.mxu0
      %v3096 = vpop.f32.mrf.mxu0
      %v3097 = vadd.f32 0.0, %v3096
      %v3098 = vpop.f32.mrf.mxu0
      %3099 = vmatprep.mubr.bf16.mxu0 0
      %3100 = vmatmul.mubr.bf16.gmra.mxu0 %v3015
      %v3101 = vpop.f32.mrf.mxu0
      %v3102 = vadd.f32 0.0, %v3101
      %v3103 = vpop.f32.mrf.mxu0
      %v3104 = vpop.f32.mrf.mxu0
      %v3105 = vadd.f32 0.0, %v3104
      %v3106 = vpop.f32.mrf.mxu0
      %3107 = vmatprep.mubr.bf16.mxu0 0
      %3108 = vmatmul.mubr.bf16.gmra.mxu0 %v3018
      %v3109 = vpop.f32.mrf.mxu0
      %v3110 = vadd.f32 0.0, %v3109
      %v3111 = vpop.f32.mrf.mxu0
      %v3112 = vpop.f32.mrf.mxu0
      %v3113 = vadd.f32 0.0, %v3112
      %v3114 = vpop.f32.mrf.mxu0
      %3115 = vmatprep.mubr.bf16.mxu0 0
      %3116 = vmatmul.mubr.bf16.gmra.mxu0 %v3021
      %v3117 = vpop.f32.mrf.mxu0
      %v3118 = vadd.f32 0.0, %v3117
      %v3119 = vpop.f32.mrf.mxu0
      %v3120 = vpop.f32.mrf.mxu0
      %v3121 = vadd.f32 0.0, %v3120
      %v3122 = vpop.f32.mrf.mxu0
      %3123 = vmatprep.mubr.bf16.mxu0 0
      %3124 = vmatmul.mubr.bf16.gmra.mxu0 %v3024
      %v3125 = vpop.f32.mrf.mxu0
      %v3126 = vadd.f32 0.0, %v3125
      %v3127 = vpop.f32.mrf.mxu0
      %v3128 = vpop.f32.mrf.mxu0
      %v3129 = vadd.f32 0.0, %v3128
      %v3130 = vpop.f32.mrf.mxu0
      %3131 = vmatprep.mubr.bf16.mxu0 0
      %3132 = vmatmul.mubr.bf16.gmra.mxu0 %v3027
      %v3133 = vpop.f32.mrf.mxu0
      %v3134 = vadd.f32 0.0, %v3133
      %v3135 = vpop.f32.mrf.mxu0
      %v3136 = vpop.f32.mrf.mxu0
      %v3137 = vadd.f32 0.0, %v3136
      %v3138 = vpop.f32.mrf.mxu0
      %3139 = vmatprep.mubr.bf16.mxu0 0
      %3140 = vmatmul.mubr.bf16.gmra.mxu0 %v3030
      %v3141 = vpop.f32.mrf.mxu0
      %v3142 = vadd.f32 0.0, %v3141
      %v3143 = vpop.f32.mrf.mxu0
      %v3144 = vpop.f32.mrf.mxu0
      %v3145 = vadd.f32 0.0, %v3144
      %v3146 = vpop.f32.mrf.mxu0
      %3147 = vmatprep.mubr.bf16.mxu0 0
      %3148 = vmatmul.mubr.bf16.gmra.mxu0 %v3033
      %v3149 = vpop.f32.mrf.mxu0
      %v3150 = vadd.f32 0.0, %v3149
      %v3151 = vpop.f32.mrf.mxu0
      %v3152 = vpop.f32.mrf.mxu0
      %v3153 = vadd.f32 0.0, %v3152
      %v3154 = vpop.f32.mrf.mxu0
      %3155 = vmatprep.mubr.bf16.mxu0 0
      %3156 = vmatmul.mubr.bf16.gmra.mxu0 %v3036
      %v3157 = vpop.f32.mrf.mxu0
      %v3158 = vadd.f32 0.0, %v3157
      %v3159 = vpop.f32.mrf.mxu0
      %v3160 = vpop.f32.mrf.mxu0
      %v3161 = vadd.f32 0.0, %v3160
      %v3162 = vpop.f32.mrf.mxu0
      %3163 = vmatprep.mubr.bf16.mxu0 0
      %3164 = vmatmul.mubr.bf16.gmra.mxu0 %v3039
      %v3165 = vpop.f32.mrf.mxu0
      %v3166 = vadd.f32 0.0, %v3165
      %v3167 = vpop.f32.mrf.mxu0
      %v3168 = vpop.f32.mrf.mxu0
      %v3169 = vadd.f32 0.0, %v3168
      %v3170 = vpop.f32.mrf.mxu0
      %3171 = vmatprep.mubr.bf16.mxu0 0
      %3172 = vmatmul.mubr.bf16.gmra.mxu0 %v3042
      %v3173 = vpop.f32.mrf.mxu0
      %v3174 = vadd.f32 0.0, %v3173
      %v3175 = vpop.f32.mrf.mxu0
      %v3176 = vpop.f32.mrf.mxu0
      %v3177 = vadd.f32 0.0, %v3176
      %v3178 = vpop.f32.mrf.mxu0
      %3179 = vmatprep.mubr.bf16.mxu0 0
      %3180 = vmatmul.mubr.bf16.gmra.mxu0 %v3045
      %v3181 = vpop.f32.mrf.mxu0
      %v3182 = vadd.f32 0.0, %v3181
      %v3183 = vpop.f32.mrf.mxu0
      %v3184 = vpop.f32.mrf.mxu0
      %v3185 = vadd.f32 0.0, %v3184
      %v3186 = vpop.f32.mrf.mxu0
      %3187 = vmatprep.mubr.bf16.mxu0 0
      %3188 = vmatmul.mubr.bf16.gmra.mxu0 %v3048
      %v3189 = vpop.f32.mrf.mxu0
      %v3190 = vadd.f32 0.0, %v3189
      %v3191 = vpop.f32.mrf.mxu0
      %v3192 = vpop.f32.mrf.mxu0
      %v3193 = vadd.f32 0.0, %v3192
      %v3194 = vpop.f32.mrf.mxu0
      %3195 = vmatprep.mubr.bf16.mxu0 0
      %3196 = vmatmul.mubr.bf16.gmra.mxu0 %v3051
      %v3197 = vpop.f32.mrf.mxu0
      %v3198 = vadd.f32 0.0, %v3197
      %v3199 = vpop.f32.mrf.mxu0
      %v3200 = vpop.f32.mrf.mxu0
      %v3201 = vadd.f32 0.0, %v3200
      %v3202 = vpop.f32.mrf.mxu0
      %3203 = vmatprep.mubr.bf16.mxu0 0
      %3204 = vmatmul.mubr.bf16.gmra.mxu0 %v3054
      %v3205 = vpop.f32.mrf.mxu0
      %v3206 = vadd.f32 0.0, %v3205
      %v3207 = vpop.f32.mrf.mxu0
      %v3208 = vpop.f32.mrf.mxu0
      %v3209 = vadd.f32 0.0, %v3208
      %v3210 = vpop.f32.mrf.mxu0
      %3211 = vmatprep.mubr.bf16.mxu0 0
      %3212 = vmatmul.mubr.bf16.gmra.mxu0 %v3057
      %v3213 = vpop.f32.mrf.mxu0
      %v3214 = vadd.f32 0.0, %v3213
      %v3215 = vpop.f32.mrf.mxu0
      %v3216 = vpop.f32.mrf.mxu0
      %v3217 = vadd.f32 0.0, %v3216
      %v3218 = vpop.f32.mrf.mxu0
      %3219 = vdwg.mxu0
      %v3220 = vmul.f32 %v3094, 0.5
      %v3221 = vmul.f32 %v3097, 0.5
      %v3222 = vmul.f32 %v3102, 0.5
      %v3223 = vmul.f32 %v3105, 0.5
      %v3224 = vmul.f32 %v3110, 0.5
      %v3225 = vmul.f32 %v3113, 0.5
      %v3226 = vmul.f32 %v3118, 0.5
      %v3227 = vmul.f32 %v3121, 0.5
      %v3228 = vmul.f32 %v3126, 0.5
      %v3229 = vmul.f32 %v3129, 0.5
      %v3230 = vmul.f32 %v3134, 0.5
      %v3231 = vmul.f32 %v3137, 0.5
      %v3232 = vmul.f32 %v3142, 0.5
      %v3233 = vmul.f32 %v3145, 0.5
      %v3234 = vmul.f32 %v3150, 0.5
      %v3235 = vmul.f32 %v3153, 0.5
      %v3236 = vmul.f32 %v3158, 0.5
      %v3237 = vmul.f32 %v3161, 0.5
      %v3238 = vmul.f32 %v3166, 0.5
      %v3239 = vmul.f32 %v3169, 0.5
      %v3240 = vmul.f32 %v3174, 0.5
      %v3241 = vmul.f32 %v3177, 0.5
      %v3242 = vmul.f32 %v3182, 0.5
      %v3243 = vmul.f32 %v3185, 0.5
      %v3244 = vmul.f32 %v3190, 0.5
      %v3245 = vmul.f32 %v3193, 0.5
      %v3246 = vmul.f32 %v3198, 0.5
      %v3247 = vmul.f32 %v3201, 0.5
      %v3248 = vmul.f32 %v3206, 0.5
      %v3249 = vmul.f32 %v3209, 0.5
      %v3250 = vmul.f32 %v3214, 0.5
      %v3251 = vmul.f32 %v3217, 0.5
      %v3252 = vtanh.pop %v3220
      %v3253 = vtanh.pop %v3221
      %v3254 = vtanh.pop %v3222
      %v3255 = vtanh.pop %v3223
      %v3256 = vtanh.pop %v3224
      %v3257 = vtanh.pop %v3225
      %v3258 = vtanh.pop %v3226
      %v3259 = vtanh.pop %v3227
      %v3260 = vtanh.pop %v3228
      %v3261 = vtanh.pop %v3229
      %v3262 = vtanh.pop %v3230
      %v3263 = vtanh.pop %v3231
      %v3264 = vtanh.pop %v3232
      %v3265 = vtanh.pop %v3233
      %v3266 = vtanh.pop %v3234
      %v3267 = vtanh.pop %v3235
      %v3268 = vtanh.pop %v3236
      %v3269 = vtanh.pop %v3237
      %v3270 = vtanh.pop %v3238
      %v3271 = vtanh.pop %v3239
      %v3272 = vtanh.pop %v3240
      %v3273 = vtanh.pop %v3241
      %v3274 = vtanh.pop %v3242
      %v3275 = vtanh.pop %v3243
      %v3276 = vtanh.pop %v3244
      %v3277 = vtanh.pop %v3245
      %v3278 = vtanh.pop %v3246
      %v3279 = vtanh.pop %v3247
      %v3280 = vtanh.pop %v3248
      %v3281 = vtanh.pop %v3249
      %v3282 = vtanh.pop %v3250
      %v3283 = vtanh.pop %v3251
      %v3284 = vadd.f32 %v3252, 1.0
      %v3285 = vadd.f32 %v3253, 1.0
      %v3286 = vadd.f32 %v3254, 1.0
      %v3287 = vadd.f32 %v3255, 1.0
      %v3288 = vadd.f32 %v3256, 1.0
      %v3289 = vadd.f32 %v3257, 1.0
      %v3290 = vadd.f32 %v3258, 1.0
      %v3291 = vadd.f32 %v3259, 1.0
      %v3292 = vadd.f32 %v3260, 1.0
      %v3293 = vadd.f32 %v3261, 1.0
      %v3294 = vadd.f32 %v3262, 1.0
      %v3295 = vadd.f32 %v3263, 1.0
      %v3296 = vadd.f32 %v3264, 1.0
      %v3297 = vadd.f32 %v3265, 1.0
      %v3298 = vadd.f32 %v3266, 1.0
      %v3299 = vadd.f32 %v3267, 1.0
      %v3300 = vadd.f32 %v3268, 1.0
      %v3301 = vadd.f32 %v3269, 1.0
      %v3302 = vadd.f32 %v3270, 1.0
      %v3303 = vadd.f32 %v3271, 1.0
      %v3304 = vadd.f32 %v3272, 1.0
      %v3305 = vadd.f32 %v3273, 1.0
      %v3306 = vadd.f32 %v3274, 1.0
      %v3307 = vadd.f32 %v3275, 1.0
      %v3308 = vadd.f32 %v3276, 1.0
      %v3309 = vadd.f32 %v3277, 1.0
      %v3310 = vadd.f32 %v3278, 1.0
      %v3311 = vadd.f32 %v3279, 1.0
      %v3312 = vadd.f32 %v3280, 1.0
      %v3313 = vadd.f32 %v3281, 1.0
      %v3314 = vadd.f32 %v3282, 1.0
      %v3315 = vadd.f32 %v3283, 1.0
      %v3316 = vmul.f32 %v3220, %v3284
      %v3317 = vmul.f32 %v3221, %v3285
      %v3318 = vmul.f32 %v3222, %v3286
      %v3319 = vmul.f32 %v3223, %v3287
      %v3320 = vmul.f32 %v3224, %v3288
      %v3321 = vmul.f32 %v3225, %v3289
      %v3322 = vmul.f32 %v3226, %v3290
      %v3323 = vmul.f32 %v3227, %v3291
      %v3324 = vmul.f32 %v3228, %v3292
      %v3325 = vmul.f32 %v3229, %v3293
      %v3326 = vmul.f32 %v3230, %v3294
      %v3327 = vmul.f32 %v3231, %v3295
      %v3328 = vmul.f32 %v3232, %v3296
      %v3329 = vmul.f32 %v3233, %v3297
      %v3330 = vmul.f32 %v3234, %v3298
      %v3331 = vmul.f32 %v3235, %v3299
      %v3332 = vmul.f32 %v3236, %v3300
      %v3333 = vmul.f32 %v3237, %v3301
      %v3334 = vmul.f32 %v3238, %v3302
      %v3335 = vmul.f32 %v3239, %v3303
      %v3336 = vmul.f32 %v3240, %v3304
      %v3337 = vmul.f32 %v3241, %v3305
      %v3338 = vmul.f32 %v3242, %v3306
      %v3339 = vmul.f32 %v3243, %v3307
      %v3340 = vmul.f32 %v3244, %v3308
      %v3341 = vmul.f32 %v3245, %v3309
      %v3342 = vmul.f32 %v3246, %v3310
      %v3343 = vmul.f32 %v3247, %v3311
      %v3344 = vmul.f32 %v3248, %v3312
      %v3345 = vmul.f32 %v3249, %v3313
      %v3346 = vmul.f32 %v3250, %v3314
      %v3347 = vmul.f32 %v3251, %v3315
      %s3348 = scalar_lea.vmem %s2, 10
      %v3349 = vld [vmem:[%s3348] sm:$0x3]
      %v3350 = vpack.c.bf16 %v3317, %v3316
      %v3351 = vpack.c.bf16 %v3319, %v3318
      %v3352 = vpack.c.bf16 %v3321, %v3320
      %v3353 = vpack.c.bf16 %v3323, %v3322
      %v3354 = vpack.c.bf16 %v3325, %v3324
      %v3355 = vpack.c.bf16 %v3327, %v3326
      %v3356 = vpack.c.bf16 %v3329, %v3328
      %v3357 = vpack.c.bf16 %v3331, %v3330
      %v3358 = vpack.c.bf16 %v3333, %v3332
      %v3359 = vpack.c.bf16 %v3335, %v3334
      %v3360 = vpack.c.bf16 %v3337, %v3336
      %v3361 = vpack.c.bf16 %v3339, %v3338
      %v3362 = vpack.c.bf16 %v3341, %v3340
      %v3363 = vpack.c.bf16 %v3343, %v3342
      %v3364 = vpack.c.bf16 %v3345, %v3344
      %v3365 = vpack.c.bf16 %v3347, %v3346
      %v3368 = vunpack.c.l.s4 1966171168
      %v3369 = vunpack.c.0.s8 %v3368
      %v3370 = vlaneseq
      %v3371 = vshrl.u32 %v3370, 7
      %v3372 = vsub.s32 %v3369, %v3371
      %v3373 = vrot.slane %v3349, %v3372
      %v3374 = vcombine.high %v3373, %v3373
      %v3376 = vunpack.c.l.s4 1966171168
      %v3377 = vunpack.c.0.s8 %v3376
      %v3378 = vlaneseq
      %v3379 = vshrl.u32 %v3378, 7
      %v3380 = vsub.s32 %v3377, %v3379
      %v3381 = vrot.slane %v3373, %v3380
      %v3383 = vunpack.c.l.s4 1966171168
      %v3384 = vunpack.c.0.s8 %v3383
      %v3385 = vlaneseq
      %v3386 = vshrl.u32 %v3385, 7
      %v3387 = vsub.s32 %v3384, %v3386
      %v3388 = vrot.slane %v3374, %v3387
      %3391 = vmatprep.subr.bf16.mxu0 0
      %3392 = vmatpush1.bf16.msra.mxu0 %v3357
      %3393 = vmatprep.subr.bf16.mxu0 0
      %3394 = vmatpush1.bf16.msra.mxu0 %v3356
      %3395 = vmatprep.subr.bf16.mxu0 0
      %3396 = vmatpush1.bf16.msra.mxu0 %v3355
      %3397 = vmatprep.subr.bf16.mxu0 0
      %3398 = vmatpush1.bf16.msra.mxu0 %v3354
      %3399 = vmatprep.subr.bf16.mxu0 0
      %3400 = vmatpush1.bf16.msra.mxu0 %v3353
      %3401 = vmatprep.subr.bf16.mxu0 0
      %3402 = vmatpush1.bf16.msra.mxu0 %v3352
      %3403 = vmatprep.subr.bf16.mxu0 0
      %3404 = vmatpush1.bf16.msra.mxu0 %v3351
      %3405 = vmatprep.subr.bf16.mxu0 0
      %3406 = vmatpush1.bf16.msra.mxu0 %v3350
      %3407 = vmatprep.subr.bf16.mxu0 0
      %3408 = vmatpush2.bf16.msra.mxu0 %v3365
      %3409 = vmatprep.subr.bf16.mxu0 0
      %3410 = vmatpush2.bf16.msra.mxu0 %v3364
      %3411 = vmatprep.subr.bf16.mxu0 0
      %3412 = vmatpush2.bf16.msra.mxu0 %v3363
      %3413 = vmatprep.subr.bf16.mxu0 0
      %3414 = vmatpush2.bf16.msra.mxu0 %v3362
      %3415 = vmatprep.subr.bf16.mxu0 0
      %3416 = vmatpush2.bf16.msra.mxu0 %v3361
      %3417 = vmatprep.subr.bf16.mxu0 0
      %3418 = vmatpush2.bf16.msra.mxu0 %v3360
      %3419 = vmatprep.subr.bf16.mxu0 0
      %3420 = vmatpush2.bf16.msra.mxu0 %v3359
      %3421 = vmatprep.subr.bf16.mxu0 0
      %3422 = vmatpush2.bf16.msra.mxu0 %v3358
      %3423 = vmatprep.mubr.bf16.mxu0 %v3388
      %3424 = vmatmul.mubr.bf16.gmra.mxu0 %v3381
      %v3425 = vpop.f32.mrf.mxu0
      %v3426 = vadd.f32 0.0, %v3425
      %v3427 = vpop.f32.mrf.mxu0
      %v3428 = vpop.f32.mrf.mxu0
      %v3429 = vpop.f32.mrf.mxu0
      %3430 = vdwg.mxu0
      %v3431 = vadd.f32 %v2897, %v3426
      %s3432 = scalar_lea.vmem %s1, 768
      %v3433 = vld [vmem:[%s3432] sm:$0xf]
      %v3434 = vld [vmem:[%s3432 + $0x4] sm:$0xf]
      %v3435 = vld [vmem:[%s3432 + $0x8] sm:$0xf]
      %v3436 = vld [vmem:[%s3432 + $0xc] sm:$0xf]
      %v3437 = vld [vmem:[%s3432 + $0x10] sm:$0xf]
      %v3438 = vld [vmem:[%s3432 + $0x14] sm:$0xf]
      %v3439 = vld [vmem:[%s3432 + $0x18] sm:$0xf]
      %v3440 = vld [vmem:[%s3432 + $0x1c] sm:$0xf]
      %v3441 = vld [vmem:[%s3432 + $0x20] sm:$0xf]
      %v3442 = vld [vmem:[%s3432 + $0x24] sm:$0xf]
      %v3443 = vld [vmem:[%s3432 + $0x28] sm:$0xf]
      %v3444 = vld [vmem:[%s3432 + $0x2c] sm:$0xf]
      %v3445 = vld [vmem:[%s3432 + $0x30] sm:$0xf]
      %v3446 = vld [vmem:[%s3432 + $0x34] sm:$0xf]
      %v3447 = vld [vmem:[%s3432 + $0x38] sm:$0xf]
      %v3448 = vld [vmem:[%s3432 + $0x3c] sm:$0xf]
      %v3449 = vld [vmem:[%s3432 + $0x40] sm:$0xf]
      %v3450 = vld [vmem:[%s3432 + $0x44] sm:$0xf]
      %v3451 = vld [vmem:[%s3432 + $0x48] sm:$0xf]
      %v3452 = vld [vmem:[%s3432 + $0x4c] sm:$0xf]
      %v3453 = vld [vmem:[%s3432 + $0x50] sm:$0xf]
      %v3454 = vld [vmem:[%s3432 + $0x54] sm:$0xf]
      %v3455 = vld [vmem:[%s3432 + $0x58] sm:$0xf]
      %v3456 = vld [vmem:[%s3432 + $0x5c] sm:$0xf]
      %v3457 = vld [vmem:[%s3432 + $0x60] sm:$0xf]
      %v3458 = vld [vmem:[%s3432 + $0x64] sm:$0xf]
      %v3459 = vld [vmem:[%s3432 + $0x68] sm:$0xf]
      %v3460 = vld [vmem:[%s3432 + $0x6c] sm:$0xf]
      %v3461 = vld [vmem:[%s3432 + $0x70] sm:$0xf]
      %v3462 = vld [vmem:[%s3432 + $0x74] sm:$0xf]
      %v3463 = vld [vmem:[%s3432 + $0x78] sm:$0xf]
      %v3464 = vld [vmem:[%s3432 + $0x7c] sm:$0xf]
      %v3497 = vunpack.c.l.b16 %v3433
      %v3498 = vunpack.c.l.b16 %v3434
      %v3499 = vunpack.c.l.b16 %v3435
      %v3500 = vunpack.c.l.b16 %v3436
      %v3501 = vunpack.c.l.b16 %v3437
      %v3502 = vunpack.c.l.b16 %v3438
      %v3503 = vunpack.c.l.b16 %v3439
      %v3504 = vunpack.c.l.b16 %v3440
      %v3505 = vunpack.c.l.b16 %v3441
      %v3506 = vunpack.c.l.b16 %v3442
      %v3507 = vunpack.c.l.b16 %v3443
      %v3508 = vunpack.c.l.b16 %v3444
      %v3509 = vunpack.c.l.b16 %v3445
      %v3510 = vunpack.c.l.b16 %v3446
      %v3511 = vunpack.c.l.b16 %v3447
      %v3512 = vunpack.c.l.b16 %v3448
      %v3513 = vunpack.c.l.b16 %v3449
      %v3514 = vunpack.c.l.b16 %v3450
      %v3515 = vunpack.c.l.b16 %v3451
      %v3516 = vunpack.c.l.b16 %v3452
      %v3517 = vunpack.c.l.b16 %v3453
      %v3518 = vunpack.c.l.b16 %v3454
      %v3519 = vunpack.c.l.b16 %v3455
      %v3520 = vunpack.c.l.b16 %v3456
      %v3521 = vunpack.c.l.b16 %v3457
      %v3522 = vunpack.c.l.b16 %v3458
      %v3523 = vunpack.c.l.b16 %v3459
      %v3524 = vunpack.c.l.b16 %v3460
      %v3525 = vunpack.c.l.b16 %v3461
      %v3526 = vunpack.c.l.b16 %v3462
      %v3527 = vunpack.c.l.b16 %v3463
      %v3528 = vunpack.c.l.b16 %v3464
      %v3529 = vpack.c.b16 %v3498, %v3497
      %v3530 = vpack.c.b16 %v3500, %v3499
      %v3531 = vpack.c.b16 %v3502, %v3501
      %v3532 = vpack.c.b16 %v3504, %v3503
      %v3533 = vpack.c.b16 %v3506, %v3505
      %v3534 = vpack.c.b16 %v3508, %v3507
      %v3535 = vpack.c.b16 %v3510, %v3509
      %v3536 = vpack.c.b16 %v3512, %v3511
      %v3537 = vpack.c.b16 %v3514, %v3513
      %v3538 = vpack.c.b16 %v3516, %v3515
      %v3539 = vpack.c.b16 %v3518, %v3517
      %v3540 = vpack.c.b16 %v3520, %v3519
      %v3541 = vpack.c.b16 %v3522, %v3521
      %v3542 = vpack.c.b16 %v3524, %v3523
      %v3543 = vpack.c.b16 %v3526, %v3525
      %v3544 = vpack.c.b16 %v3528, %v3527
      %v3546 = vsel %vm336, %v3529, 0
      %v3549 = vsel %vm336, %v3530, 0
      %v3552 = vsel %vm336, %v3531, 0
      %v3555 = vsel %vm336, %v3532, 0
      %v3558 = vsel %vm336, %v3533, 0
      %v3561 = vsel %vm336, %v3534, 0
      %v3564 = vsel %vm336, %v3535, 0
      %v3567 = vsel %vm336, %v3536, 0
      %v3570 = vsel %vm336, %v3537, 0
      %v3573 = vsel %vm336, %v3538, 0
      %v3576 = vsel %vm336, %v3539, 0
      %v3579 = vsel %vm336, %v3540, 0
      %v3582 = vsel %vm336, %v3541, 0
      %v3585 = vsel %vm336, %v3542, 0
      %v3588 = vsel %vm336, %v3543, 0
      %v3591 = vsel %vm336, %v3544, 0
      %3593 = vmatprep.subr.bf16.mxu0 0
      %3594 = vmatpush1.bf16.msra.mxu0 0
      %3595 = vmatprep.subr.bf16.mxu0 0
      %3596 = vmatpush1.bf16.msra.mxu0 0
      %3597 = vmatprep.subr.bf16.mxu0 0
      %3598 = vmatpush1.bf16.msra.mxu0 0
      %3599 = vmatprep.subr.bf16.mxu0 0
      %3600 = vmatpush1.bf16.msra.mxu0 0
      %3601 = vmatprep.subr.bf16.mxu0 0
      %3602 = vmatpush1.bf16.msra.mxu0 0
      %3603 = vmatprep.subr.bf16.mxu0 0
      %3604 = vmatpush1.bf16.msra.mxu0 0
      %3605 = vmatprep.subr.bf16.mxu0 0
      %3606 = vmatpush1.bf16.msra.mxu0 0
      %3607 = vmatprep.subr.bf16.mxu0 0
      %3608 = vmatpush1.bf16.msra.mxu0 %v390
      %3609 = vmatprep.subr.bf16.mxu0 0
      %3610 = vmatpush2.bf16.msra.mxu0 0
      %3611 = vmatprep.subr.bf16.mxu0 0
      %3612 = vmatpush2.bf16.msra.mxu0 0
      %3613 = vmatprep.subr.bf16.mxu0 0
      %3614 = vmatpush2.bf16.msra.mxu0 0
      %3615 = vmatprep.subr.bf16.mxu0 0
      %3616 = vmatpush2.bf16.msra.mxu0 0
      %3617 = vmatprep.subr.bf16.mxu0 0
      %3618 = vmatpush2.bf16.msra.mxu0 0
      %3619 = vmatprep.subr.bf16.mxu0 0
      %3620 = vmatpush2.bf16.msra.mxu0 0
      %3621 = vmatprep.subr.bf16.mxu0 0
      %3622 = vmatpush2.bf16.msra.mxu0 0
      %3623 = vmatprep.subr.bf16.mxu0 0
      %3624 = vmatpush2.bf16.msra.mxu0 0
      %3625 = vmatprep.mubr.bf16.mxu0 0
      %3626 = vmatmul.mubr.bf16.gmra.mxu0 %v3546
      %v3627 = vpop.f32.mrf.mxu0
      %v3628 = vadd.f32 0.0, %v3627
      %v3629 = vpop.f32.mrf.mxu0
      %v3630 = vpop.f32.mrf.mxu0
      %v3631 = vadd.f32 0.0, %v3630
      %v3632 = vpop.f32.mrf.mxu0
      %3633 = vmatprep.mubr.bf16.mxu0 0
      %3634 = vmatmul.mubr.bf16.gmra.mxu0 %v3549
      %v3635 = vpop.f32.mrf.mxu0
      %v3636 = vadd.f32 0.0, %v3635
      %v3637 = vpop.f32.mrf.mxu0
      %v3638 = vpop.f32.mrf.mxu0
      %v3639 = vadd.f32 0.0, %v3638
      %v3640 = vpop.f32.mrf.mxu0
      %3641 = vmatprep.mubr.bf16.mxu0 0
      %3642 = vmatmul.mubr.bf16.gmra.mxu0 %v3552
      %v3643 = vpop.f32.mrf.mxu0
      %v3644 = vadd.f32 0.0, %v3643
      %v3645 = vpop.f32.mrf.mxu0
      %v3646 = vpop.f32.mrf.mxu0
      %v3647 = vadd.f32 0.0, %v3646
      %v3648 = vpop.f32.mrf.mxu0
      %3649 = vmatprep.mubr.bf16.mxu0 0
      %3650 = vmatmul.mubr.bf16.gmra.mxu0 %v3555
      %v3651 = vpop.f32.mrf.mxu0
      %v3652 = vadd.f32 0.0, %v3651
      %v3653 = vpop.f32.mrf.mxu0
      %v3654 = vpop.f32.mrf.mxu0
      %v3655 = vadd.f32 0.0, %v3654
      %v3656 = vpop.f32.mrf.mxu0
      %3657 = vmatprep.mubr.bf16.mxu0 0
      %3658 = vmatmul.mubr.bf16.gmra.mxu0 %v3558
      %v3659 = vpop.f32.mrf.mxu0
      %v3660 = vadd.f32 0.0, %v3659
      %v3661 = vpop.f32.mrf.mxu0
      %v3662 = vpop.f32.mrf.mxu0
      %v3663 = vadd.f32 0.0, %v3662
      %v3664 = vpop.f32.mrf.mxu0
      %3665 = vmatprep.mubr.bf16.mxu0 0
      %3666 = vmatmul.mubr.bf16.gmra.mxu0 %v3561
      %v3667 = vpop.f32.mrf.mxu0
      %v3668 = vadd.f32 0.0, %v3667
      %v3669 = vpop.f32.mrf.mxu0
      %v3670 = vpop.f32.mrf.mxu0
      %v3671 = vadd.f32 0.0, %v3670
      %v3672 = vpop.f32.mrf.mxu0
      %3673 = vmatprep.mubr.bf16.mxu0 0
      %3674 = vmatmul.mubr.bf16.gmra.mxu0 %v3564
      %v3675 = vpop.f32.mrf.mxu0
      %v3676 = vadd.f32 0.0, %v3675
      %v3677 = vpop.f32.mrf.mxu0
      %v3678 = vpop.f32.mrf.mxu0
      %v3679 = vadd.f32 0.0, %v3678
      %v3680 = vpop.f32.mrf.mxu0
      %3681 = vmatprep.mubr.bf16.mxu0 0
      %3682 = vmatmul.mubr.bf16.gmra.mxu0 %v3567
      %v3683 = vpop.f32.mrf.mxu0
      %v3684 = vadd.f32 0.0, %v3683
      %v3685 = vpop.f32.mrf.mxu0
      %v3686 = vpop.f32.mrf.mxu0
      %v3687 = vadd.f32 0.0, %v3686
      %v3688 = vpop.f32.mrf.mxu0
      %3689 = vmatprep.mubr.bf16.mxu0 0
      %3690 = vmatmul.mubr.bf16.gmra.mxu0 %v3570
      %v3691 = vpop.f32.mrf.mxu0
      %v3692 = vadd.f32 0.0, %v3691
      %v3693 = vpop.f32.mrf.mxu0
      %v3694 = vpop.f32.mrf.mxu0
      %v3695 = vadd.f32 0.0, %v3694
      %v3696 = vpop.f32.mrf.mxu0
      %3697 = vmatprep.mubr.bf16.mxu0 0
      %3698 = vmatmul.mubr.bf16.gmra.mxu0 %v3573
      %v3699 = vpop.f32.mrf.mxu0
      %v3700 = vadd.f32 0.0, %v3699
      %v3701 = vpop.f32.mrf.mxu0
      %v3702 = vpop.f32.mrf.mxu0
      %v3703 = vadd.f32 0.0, %v3702
      %v3704 = vpop.f32.mrf.mxu0
      %3705 = vmatprep.mubr.bf16.mxu0 0
      %3706 = vmatmul.mubr.bf16.gmra.mxu0 %v3576
      %v3707 = vpop.f32.mrf.mxu0
      %v3708 = vadd.f32 0.0, %v3707
      %v3709 = vpop.f32.mrf.mxu0
      %v3710 = vpop.f32.mrf.mxu0
      %v3711 = vadd.f32 0.0, %v3710
      %v3712 = vpop.f32.mrf.mxu0
      %3713 = vmatprep.mubr.bf16.mxu0 0
      %3714 = vmatmul.mubr.bf16.gmra.mxu0 %v3579
      %v3715 = vpop.f32.mrf.mxu0
      %v3716 = vadd.f32 0.0, %v3715
      %v3717 = vpop.f32.mrf.mxu0
      %v3718 = vpop.f32.mrf.mxu0
      %v3719 = vadd.f32 0.0, %v3718
      %v3720 = vpop.f32.mrf.mxu0
      %3721 = vmatprep.mubr.bf16.mxu0 0
      %3722 = vmatmul.mubr.bf16.gmra.mxu0 %v3582
      %v3723 = vpop.f32.mrf.mxu0
      %v3724 = vadd.f32 0.0, %v3723
      %v3725 = vpop.f32.mrf.mxu0
      %v3726 = vpop.f32.mrf.mxu0
      %v3727 = vadd.f32 0.0, %v3726
      %v3728 = vpop.f32.mrf.mxu0
      %3729 = vmatprep.mubr.bf16.mxu0 0
      %3730 = vmatmul.mubr.bf16.gmra.mxu0 %v3585
      %v3731 = vpop.f32.mrf.mxu0
      %v3732 = vadd.f32 0.0, %v3731
      %v3733 = vpop.f32.mrf.mxu0
      %v3734 = vpop.f32.mrf.mxu0
      %v3735 = vadd.f32 0.0, %v3734
      %v3736 = vpop.f32.mrf.mxu0
      %3737 = vmatprep.mubr.bf16.mxu0 0
      %3738 = vmatmul.mubr.bf16.gmra.mxu0 %v3588
      %v3739 = vpop.f32.mrf.mxu0
      %v3740 = vadd.f32 0.0, %v3739
      %v3741 = vpop.f32.mrf.mxu0
      %v3742 = vpop.f32.mrf.mxu0
      %v3743 = vadd.f32 0.0, %v3742
      %v3744 = vpop.f32.mrf.mxu0
      %3745 = vmatprep.mubr.bf16.mxu0 0
      %3746 = vmatmul.mubr.bf16.gmra.mxu0 %v3591
      %v3747 = vpop.f32.mrf.mxu0
      %v3748 = vadd.f32 0.0, %v3747
      %v3749 = vpop.f32.mrf.mxu0
      %v3750 = vpop.f32.mrf.mxu0
      %v3751 = vadd.f32 0.0, %v3750
      %v3752 = vpop.f32.mrf.mxu0
      %3753 = vdwg.mxu0
      %v3754 = vmul.f32 %v3628, 0.5
      %v3755 = vmul.f32 %v3631, 0.5
      %v3756 = vmul.f32 %v3636, 0.5
      %v3757 = vmul.f32 %v3639, 0.5
      %v3758 = vmul.f32 %v3644, 0.5
      %v3759 = vmul.f32 %v3647, 0.5
      %v3760 = vmul.f32 %v3652, 0.5
      %v3761 = vmul.f32 %v3655, 0.5
      %v3762 = vmul.f32 %v3660, 0.5
      %v3763 = vmul.f32 %v3663, 0.5
      %v3764 = vmul.f32 %v3668, 0.5
      %v3765 = vmul.f32 %v3671, 0.5
      %v3766 = vmul.f32 %v3676, 0.5
      %v3767 = vmul.f32 %v3679, 0.5
      %v3768 = vmul.f32 %v3684, 0.5
      %v3769 = vmul.f32 %v3687, 0.5
      %v3770 = vmul.f32 %v3692, 0.5
      %v3771 = vmul.f32 %v3695, 0.5
      %v3772 = vmul.f32 %v3700, 0.5
      %v3773 = vmul.f32 %v3703, 0.5
      %v3774 = vmul.f32 %v3708, 0.5
      %v3775 = vmul.f32 %v3711, 0.5
      %v3776 = vmul.f32 %v3716, 0.5
      %v3777 = vmul.f32 %v3719, 0.5
      %v3778 = vmul.f32 %v3724, 0.5
      %v3779 = vmul.f32 %v3727, 0.5
      %v3780 = vmul.f32 %v3732, 0.5
      %v3781 = vmul.f32 %v3735, 0.5
      %v3782 = vmul.f32 %v3740, 0.5
      %v3783 = vmul.f32 %v3743, 0.5
      %v3784 = vmul.f32 %v3748, 0.5
      %v3785 = vmul.f32 %v3751, 0.5
      %v3786 = vtanh.pop %v3754
      %v3787 = vtanh.pop %v3755
      %v3788 = vtanh.pop %v3756
      %v3789 = vtanh.pop %v3757
      %v3790 = vtanh.pop %v3758
      %v3791 = vtanh.pop %v3759
      %v3792 = vtanh.pop %v3760
      %v3793 = vtanh.pop %v3761
      %v3794 = vtanh.pop %v3762
      %v3795 = vtanh.pop %v3763
      %v3796 = vtanh.pop %v3764
      %v3797 = vtanh.pop %v3765
      %v3798 = vtanh.pop %v3766
      %v3799 = vtanh.pop %v3767
      %v3800 = vtanh.pop %v3768
      %v3801 = vtanh.pop %v3769
      %v3802 = vtanh.pop %v3770
      %v3803 = vtanh.pop %v3771
      %v3804 = vtanh.pop %v3772
      %v3805 = vtanh.pop %v3773
      %v3806 = vtanh.pop %v3774
      %v3807 = vtanh.pop %v3775
      %v3808 = vtanh.pop %v3776
      %v3809 = vtanh.pop %v3777
      %v3810 = vtanh.pop %v3778
      %v3811 = vtanh.pop %v3779
      %v3812 = vtanh.pop %v3780
      %v3813 = vtanh.pop %v3781
      %v3814 = vtanh.pop %v3782
      %v3815 = vtanh.pop %v3783
      %v3816 = vtanh.pop %v3784
      %v3817 = vtanh.pop %v3785
      %v3818 = vadd.f32 %v3786, 1.0
      %v3819 = vadd.f32 %v3787, 1.0
      %v3820 = vadd.f32 %v3788, 1.0
      %v3821 = vadd.f32 %v3789, 1.0
      %v3822 = vadd.f32 %v3790, 1.0
      %v3823 = vadd.f32 %v3791, 1.0
      %v3824 = vadd.f32 %v3792, 1.0
      %v3825 = vadd.f32 %v3793, 1.0
      %v3826 = vadd.f32 %v3794, 1.0
      %v3827 = vadd.f32 %v3795, 1.0
      %v3828 = vadd.f32 %v3796, 1.0
      %v3829 = vadd.f32 %v3797, 1.0
      %v3830 = vadd.f32 %v3798, 1.0
      %v3831 = vadd.f32 %v3799, 1.0
      %v3832 = vadd.f32 %v3800, 1.0
      %v3833 = vadd.f32 %v3801, 1.0
      %v3834 = vadd.f32 %v3802, 1.0
      %v3835 = vadd.f32 %v3803, 1.0
      %v3836 = vadd.f32 %v3804, 1.0
      %v3837 = vadd.f32 %v3805, 1.0
      %v3838 = vadd.f32 %v3806, 1.0
      %v3839 = vadd.f32 %v3807, 1.0
      %v3840 = vadd.f32 %v3808, 1.0
      %v3841 = vadd.f32 %v3809, 1.0
      %v3842 = vadd.f32 %v3810, 1.0
      %v3843 = vadd.f32 %v3811, 1.0
      %v3844 = vadd.f32 %v3812, 1.0
      %v3845 = vadd.f32 %v3813, 1.0
      %v3846 = vadd.f32 %v3814, 1.0
      %v3847 = vadd.f32 %v3815, 1.0
      %v3848 = vadd.f32 %v3816, 1.0
      %v3849 = vadd.f32 %v3817, 1.0
      %v3850 = vmul.f32 %v3754, %v3818
      %v3851 = vmul.f32 %v3755, %v3819
      %v3852 = vmul.f32 %v3756, %v3820
      %v3853 = vmul.f32 %v3757, %v3821
      %v3854 = vmul.f32 %v3758, %v3822
      %v3855 = vmul.f32 %v3759, %v3823
      %v3856 = vmul.f32 %v3760, %v3824
      %v3857 = vmul.f32 %v3761, %v3825
      %v3858 = vmul.f32 %v3762, %v3826
      %v3859 = vmul.f32 %v3763, %v3827
      %v3860 = vmul.f32 %v3764, %v3828
      %v3861 = vmul.f32 %v3765, %v3829
      %v3862 = vmul.f32 %v3766, %v3830
      %v3863 = vmul.f32 %v3767, %v3831
      %v3864 = vmul.f32 %v3768, %v3832
      %v3865 = vmul.f32 %v3769, %v3833
      %v3866 = vmul.f32 %v3770, %v3834
      %v3867 = vmul.f32 %v3771, %v3835
      %v3868 = vmul.f32 %v3772, %v3836
      %v3869 = vmul.f32 %v3773, %v3837
      %v3870 = vmul.f32 %v3774, %v3838
      %v3871 = vmul.f32 %v3775, %v3839
      %v3872 = vmul.f32 %v3776, %v3840
      %v3873 = vmul.f32 %v3777, %v3841
      %v3874 = vmul.f32 %v3778, %v3842
      %v3875 = vmul.f32 %v3779, %v3843
      %v3876 = vmul.f32 %v3780, %v3844
      %v3877 = vmul.f32 %v3781, %v3845
      %v3878 = vmul.f32 %v3782, %v3846
      %v3879 = vmul.f32 %v3783, %v3847
      %v3880 = vmul.f32 %v3784, %v3848
      %v3881 = vmul.f32 %v3785, %v3849
      %s3882 = scalar_lea.vmem %s2, 12
      %v3883 = vld [vmem:[%s3882] sm:$0x3]
      %v3884 = vpack.c.bf16 %v3851, %v3850
      %v3885 = vpack.c.bf16 %v3853, %v3852
      %v3886 = vpack.c.bf16 %v3855, %v3854
      %v3887 = vpack.c.bf16 %v3857, %v3856
      %v3888 = vpack.c.bf16 %v3859, %v3858
      %v3889 = vpack.c.bf16 %v3861, %v3860
      %v3890 = vpack.c.bf16 %v3863, %v3862
      %v3891 = vpack.c.bf16 %v3865, %v3864
      %v3892 = vpack.c.bf16 %v3867, %v3866
      %v3893 = vpack.c.bf16 %v3869, %v3868
      %v3894 = vpack.c.bf16 %v3871, %v3870
      %v3895 = vpack.c.bf16 %v3873, %v3872
      %v3896 = vpack.c.bf16 %v3875, %v3874
      %v3897 = vpack.c.bf16 %v3877, %v3876
      %v3898 = vpack.c.bf16 %v3879, %v3878
      %v3899 = vpack.c.bf16 %v3881, %v3880
      %v3902 = vunpack.c.l.s4 1966171168
      %v3903 = vunpack.c.0.s8 %v3902
      %v3904 = vlaneseq
      %v3905 = vshrl.u32 %v3904, 7
      %v3906 = vsub.s32 %v3903, %v3905
      %v3907 = vrot.slane %v3883, %v3906
      %v3908 = vcombine.high %v3907, %v3907
      %v3910 = vunpack.c.l.s4 1966171168
      %v3911 = vunpack.c.0.s8 %v3910
      %v3912 = vlaneseq
      %v3913 = vshrl.u32 %v3912, 7
      %v3914 = vsub.s32 %v3911, %v3913
      %v3915 = vrot.slane %v3907, %v3914
      %v3917 = vunpack.c.l.s4 1966171168
      %v3918 = vunpack.c.0.s8 %v3917
      %v3919 = vlaneseq
      %v3920 = vshrl.u32 %v3919, 7
      %v3921 = vsub.s32 %v3918, %v3920
      %v3922 = vrot.slane %v3908, %v3921
      %3925 = vmatprep.subr.bf16.mxu0 0
      %3926 = vmatpush1.bf16.msra.mxu0 %v3891
      %3927 = vmatprep.subr.bf16.mxu0 0
      %3928 = vmatpush1.bf16.msra.mxu0 %v3890
      %3929 = vmatprep.subr.bf16.mxu0 0
      %3930 = vmatpush1.bf16.msra.mxu0 %v3889
      %3931 = vmatprep.subr.bf16.mxu0 0
      %3932 = vmatpush1.bf16.msra.mxu0 %v3888
      %3933 = vmatprep.subr.bf16.mxu0 0
      %3934 = vmatpush1.bf16.msra.mxu0 %v3887
      %3935 = vmatprep.subr.bf16.mxu0 0
      %3936 = vmatpush1.bf16.msra.mxu0 %v3886
      %3937 = vmatprep.subr.bf16.mxu0 0
      %3938 = vmatpush1.bf16.msra.mxu0 %v3885
      %3939 = vmatprep.subr.bf16.mxu0 0
      %3940 = vmatpush1.bf16.msra.mxu0 %v3884
      %3941 = vmatprep.subr.bf16.mxu0 0
      %3942 = vmatpush2.bf16.msra.mxu0 %v3899
      %3943 = vmatprep.subr.bf16.mxu0 0
      %3944 = vmatpush2.bf16.msra.mxu0 %v3898
      %3945 = vmatprep.subr.bf16.mxu0 0
      %3946 = vmatpush2.bf16.msra.mxu0 %v3897
      %3947 = vmatprep.subr.bf16.mxu0 0
      %3948 = vmatpush2.bf16.msra.mxu0 %v3896
      %3949 = vmatprep.subr.bf16.mxu0 0
      %3950 = vmatpush2.bf16.msra.mxu0 %v3895
      %3951 = vmatprep.subr.bf16.mxu0 0
      %3952 = vmatpush2.bf16.msra.mxu0 %v3894
      %3953 = vmatprep.subr.bf16.mxu0 0
      %3954 = vmatpush2.bf16.msra.mxu0 %v3893
      %3955 = vmatprep.subr.bf16.mxu0 0
      %3956 = vmatpush2.bf16.msra.mxu0 %v3892
      %3957 = vmatprep.mubr.bf16.mxu0 %v3922
      %3958 = vmatmul.mubr.bf16.gmra.mxu0 %v3915
      %v3959 = vpop.f32.mrf.mxu0
      %v3960 = vadd.f32 0.0, %v3959
      %v3961 = vpop.f32.mrf.mxu0
      %v3962 = vpop.f32.mrf.mxu0
      %v3963 = vpop.f32.mrf.mxu0
      %3964 = vdwg.mxu0
      %v3965 = vadd.f32 %v3431, %v3960
      %v3966 = vadd.f32 %v223, %v3965
      %3967 = vst [vmem:[#allocation2] sm:$0x1] %v3966
      %p3968 = scmp.eq.s32.totalorder %s21, 1
      // Predicated region
      $region37: #{tpu_custom_call.1} parent=31 // pred_check
        %p3969 = pneg %p3968
      $region38: #{tpu_custom_call.1} parent=31 // pred_check_branch
        %3971 = sbr.rel (%p3969) target = $region40
      $region39: #{tpu_custom_call.1} parent=31 // pred_region
        %v3972 = vld [vmem:[#allocation2] sm:$0x1]
        %vm3973 = vcmask 1040384
        %v3974 = vsel %vm3973, %v3972, 0.0
        %3975 = vadd.xlane.f32.xlu0 %v3974
        %v3976 = vpop.xlane.xlu0 %3975
        %v3977 = vrot.slane %v3976, 4
        %v3978 = vadd.f32 %v3976, %v3977
        %v3979 = vrot.slane %v3978, 2
        %v3980 = vadd.f32 %v3978, %v3979
        %v3981 = vrot.slane %v3980, 1
        %v3982 = vadd.f32 %v3980, %v3981
        %s3983 = vtos %v3982
        %v3984 = vstv %s3983
        %vm3985 = vcmask 0
        %3986 = vst.msk [vmem:[%s214] sm:$0x1] %vm3985, %v3984
      $region40: #{tpu_custom_call.1} parent=31 // pred_fallthru
        _
      %s3987 = sadd.s32 %s19, %s20
      %p3988 = scmp.lt.s32.totalorder %s3987, 1
      %s3989 = scalar_select %p3988, %s3987, 1
      %s3990 = scalar_lea.vmem %s3, %s3989
      // Predicated region
      $region41: #{tpu_custom_call.1} parent=31 // pred_check
        %p3991 = pneg %p127
      $region42: #{tpu_custom_call.1} parent=31 // pred_check_branch
        %3993 = sbr.rel (%p3991) target = $region44
      $region43: #{tpu_custom_call.1} parent=31 // pred_region
        %s3994 = sadd.s32 %s19, %s20
      $region44: #{tpu_custom_call.1} parent=31 // pred_fallthru
        _
    $region32: #{tpu_custom_call.1} parent=5 // pred_fallthru
      _
    %p3995 = scmp.le.s32.totalorder 2, %s9
    // Predicated region
    $region45: #{tpu_custom_call.1} parent=5 // pred_check
      %p3996 = pneg %p3995
    $region46: #{tpu_custom_call.1} parent=5 // pred_check_branch
      %3998 = sbr.rel (%p3996) target = $region48
    $region47: #{tpu_custom_call.1} parent=5 // pred_region
      %s3999 = ssub.s32 %s9, 2
      // Predicated region
      $region49: #{tpu_custom_call.1} parent=47 // pred_check
        %p4000 = pneg %p133
      $region50: #{tpu_custom_call.1} parent=47 // pred_check_branch
        %4002 = sbr.rel (%p4000) target = $region52
      $region51: #{tpu_custom_call.1} parent=47 // pred_region
        %s4003 = sadd.s32 %s22, %s23
        %p4004 = scmp.lt.s32.totalorder %s4003, 1
        %s4005 = scalar_select %p4004, %s4003, 1
        %s4006 = scalar_lea.vmem %s3, %s4005
      $region52: #{tpu_custom_call.1} parent=47 // pred_fallthru
        _
    $region48: #{tpu_custom_call.1} parent=5 // pred_fallthru
      _
  $region6: #{tpu_custom_call.1} parent=0 // loop_footer
    %s13 = sadd.s32 1, %s9
  $region7: #{tpu_custom_call.1} parent=0 // loop_footer_branch
    %8 = sbr.rel target = $region3
  $region8: #{tpu_custom_call.1} parent=0 // loop_exit
    _

</llo_original>
